<compile_context>
chip_gen: v7x
topology: tpu7x:2x2x1
jax: 0.10.0
libtpu: 0.0.40
codegen_flags: <defaults>
</compile_context>

<pallas_src>
import functools

import jax
import jax.numpy as jnp
from jax.experimental import pallas as pl
from jax.experimental.pallas import tpu as pltpu


def _round_up(x, m):
    return ((x + m - 1) // m) * m


@functools.lru_cache(maxsize=1)
def _vmem_limit_bytes():
    """Generation-aware VMEM budget (v7x only has 64 MiB per TensorCore)."""
    try:
        cap = pltpu.get_tpu_info().vmem_capacity_bytes
    except Exception:
        cap = 64 * 1024 * 1024
    return min(48 * 1024 * 1024, cap // 2)


@functools.lru_cache(maxsize=1)
def _default_weight_dtype():
    """int8 weight-only quant on v5e/v6e (weight-bandwidth bound at small
    batch); bf16 on v7x / unknown chips.  The int8 path dequantizes to bf16
    in-kernel, so it is numerically safe on any chip — this is only a
    bandwidth/perf preference."""
    try:
        kind = jax.devices()[0].device_kind.lower()
    except Exception:
        return jnp.bfloat16
    if ("v7" not in kind) and ("v5" in kind or "v6" in kind):
        return jnp.int8
    return jnp.bfloat16


def _decoder_kernel(x_ref,
                    w1_ref, s1_ref, b1_ref,
                    w2_ref, s2_ref, b2_ref,
                    w3_ref, s3_ref, b3_ref,
                    w4_ref, s4_ref, b4_ref,
                    o_ref):
    """Fused 4-layer MLP: (Linear+ReLU) x3 -> Linear.

    Weights (bf16 or int8) are VMEM-resident (constant index_map, single
    buffer).  Dots run on the MXU in bf16 with f32 accumulation; the
    per-output-channel dequant scale is folded into the f32 epilogue together
    with the bias (scale == 1.0 exactly for the bf16 weight path)."""

    def layer(h, w_ref, s_ref, b_ref, relu):
        acc = jnp.dot(h.astype(jnp.bfloat16),
                      w_ref[...].astype(jnp.bfloat16),
                      preferred_element_type=jnp.float32)
        acc = acc * s_ref[...] + b_ref[...]          # f32 epilogue
        if relu:
            acc = jnp.maximum(acc, 0.0)
        return acc

    h = layer(x_ref[...], w1_ref, s1_ref, b1_ref, relu=True)
    h = layer(h, w2_ref, s2_ref, b2_ref, relu=True)
    h = layer(h, w3_ref, s3_ref, b3_ref, relu=True)
    h = layer(h, w4_ref, s4_ref, b4_ref, relu=False)
    o_ref[...] = h.astype(o_ref.dtype)


def init_decoder_params(key, input_dim, feature_dim, weight_dtype=None):
    """PyTorch-default init U(-1/sqrt(fan_in), 1/sqrt(fan_in)) on the original
    (unpadded) dims, then zero-pad to lane-friendly sizes.

    Per layer the returned params are (W, scale, bias):
      * bf16 path : W bf16 (in_pad, out_pad), scale = ones(1, out_pad) f32
      * int8 path : W int8, scale = per-output-channel dequant scale f32
    Biases are always f32 of shape (1, out_pad)."""
    if weight_dtype is None:
        weight_dtype = _default_weight_dtype()

    h1p, h2p, h3p = 2048, 512, 512
    outp = _round_up(input_dim, 128)
    #        fan_in, fan_out, padded_in, padded_out
    dims = [(feature_dim, 2000, feature_dim, h1p),
            (2000, 500, h1p, h2p),
            (500, 500, h2p, h3p),
            (500, input_dim, h3p, outp)]

    params = []
    for fan_in, fan_out, in_pad, out_pad in dims:
        key, kw, kb = jax.random.split(key, 3)
        bound = 1.0 / float(fan_in) ** 0.5
        w = jax.random.uniform(kw, (fan_in, fan_out), jnp.float32, -bound, bound)
        b = jax.random.uniform(kb, (1, fan_out), jnp.float32, -bound, bound)
        wp = jnp.zeros((in_pad, out_pad), jnp.float32).at[:fan_in, :fan_out].set(w)
        bp = jnp.zeros((1, out_pad), jnp.float32).at[:, :fan_out].set(b)

        if weight_dtype == jnp.int8:
            amax = jnp.max(jnp.abs(wp), axis=0, keepdims=True)
            scale = jnp.where(amax > 0.0, amax / 127.0, 1.0).astype(jnp.float32)
            wq = jnp.clip(jnp.round(wp / scale), -127, 127).astype(jnp.int8)
            params += [wq, scale, bp]
        else:
            params += [wp.astype(weight_dtype),
                       jnp.ones((1, out_pad), jnp.float32), bp]
    return tuple(params)


@functools.partial(jax.jit, static_argnames=("out_dim", "block_b"))
def decoder_forward(x, params, out_dim, block_b=512):
    """Pallas-backed forward pass of Decoder."""
    B, F = x.shape
    (w1, s1, b1, w2, s2, b2, w3, s3, b3, w4, s4, b4) = params
    out_pad = w4.shape[1]

    # Adaptive batch tile: clamp block_b to a multiple of 8 (sublane rule),
    # then pick the smallest multiple-of-8 tile that keeps the same number of
    # grid steps -> padding waste capped at <8 rows per tile.
    block_b = max(8, (block_b // 8) * 8)
    n_steps = pl.cdiv(B, block_b)
    tb = _round_up(pl.cdiv(B, n_steps), 8)
    Bp = tb * n_steps
    xp = x if Bp == B else jnp.zeros((Bp, F), x.dtype).at[:B].set(x)

    # Constant index_map -> VMEM-resident across grid steps; Buffered(1)
    # disables pointless double-buffering of the static weights/scales/biases.
    def resident(a):
        return pl.BlockSpec(a.shape, lambda i: (0, 0),
                            pipeline_mode=pl.Buffered(1))

    out = pl.pallas_call(
        _decoder_kernel,
        out_shape=jax.ShapeDtypeStruct((Bp, out_pad), x.dtype),
        grid_spec=pltpu.PrefetchScalarGridSpec(
            num_scalar_prefetch=0,
            grid=(n_steps,),
            in_specs=[
                pl.BlockSpec((tb, F), lambda i: (i, 0)),   # streamed x tile
                resident(w1), resident(s1), resident(b1),
                resident(w2), resident(s2), resident(b2),
                resident(w3), resident(s3), resident(b3),
                resident(w4), resident(s4), resident(b4),
            ],
            out_specs=pl.BlockSpec((tb, out_pad), lambda i: (i, 0)),
        ),
        compiler_params=pltpu.CompilerParams(
            dimension_semantics=("parallel",),
            vmem_limit_bytes=_vmem_limit_bytes(),
        ),
    )(xp, w1, s1, b1, w2, s2, b2, w3, s3, b3, w4, s4, b4)
    # NOTE: callers that tolerate the (Bp, out_pad) padded buffer can skip
    # this slice and save one small HBM copy.
    return out[:B, :out_dim]


def decoder_reference(x, params, out_dim):
    """Pure-JAX reference at the same precision as the kernel
    (bf16 operands, f32 accumulation, scale/bias epilogue in f32)."""
    (w1, s1, b1, w2, s2, b2, w3, s3, b3, w4, s4, b4) = params

    def lin(h, w, s, b):
        acc = jnp.dot(h.astype(jnp.bfloat16), w.astype(jnp.bfloat16),
                      preferred_element_type=jnp.float32)
        return acc * s + b

    h = jnp.maximum(lin(x, w1, s1, b1), 0.0)
    h = jnp.maximum(lin(h, w2, s2, b2), 0.0)
    h = jnp.maximum(lin(h, w3, s3, b3), 0.0)
    return lin(h, w4, s4, b4)[:, :out_dim]


if __name__ == "__main__":
    input_dim = 64      # reconstructed dimensionality
    feature_dim = 32    # latent feature dimensionality
    batch = 2

    key = jax.random.PRNGKey(0)
    key, kx = jax.random.split(key)
    x = jax.random.normal(kx, (batch, feature_dim), jnp.float32)

    params = init_decoder_params(key, input_dim, feature_dim)

    out = decoder_forward(x, params, out_dim=input_dim)
    out = jax.block_until_ready(out)

    ref = decoder_reference(x, params, input_dim)
    assert out.shape == (batch, input_dim), out.shape
    max_err = float(jnp.max(jnp.abs(out - ref)))
    assert jnp.allclose(out, ref, atol=2e-3, rtol=2e-3), max_err

    print("KERNEL_OK")
</pallas_src>

<mosaic_0001>
module attributes {stable_mosaic.version = 11 : i64} {
  func.func @_decoder_kernel(%arg0: i32, %arg1: memref<8x32xf32, #tpu.memory_space<vmem>>, %arg2: memref<32x2048xbf16, #tpu.memory_space<vmem>>, %arg3: memref<1x2048xf32, #tpu.memory_space<vmem>>, %arg4: memref<1x2048xf32, #tpu.memory_space<vmem>>, %arg5: memref<2048x512xbf16, #tpu.memory_space<vmem>>, %arg6: memref<1x512xf32, #tpu.memory_space<vmem>>, %arg7: memref<1x512xf32, #tpu.memory_space<vmem>>, %arg8: memref<512x512xbf16, #tpu.memory_space<vmem>>, %arg9: memref<1x512xf32, #tpu.memory_space<vmem>>, %arg10: memref<1x512xf32, #tpu.memory_space<vmem>>, %arg11: memref<512x128xbf16, #tpu.memory_space<vmem>>, %arg12: memref<1x128xf32, #tpu.memory_space<vmem>>, %arg13: memref<1x128xf32, #tpu.memory_space<vmem>>, %arg14: memref<8x128xf32, #tpu.memory_space<vmem>>) attributes {dimension_semantics = [#tpu.dimension_semantics<parallel>], iteration_bounds = array<i64: 1>, scalar_prefetch = 0 : i64, scratch_operands = 0 : i64, tpu.core_type = #tpu.core_type<tc>, window_params = [{transform_indices = @transform_0, window_bounds = array<i64: 8, 32>}, {pipeline_mode = #tpu.pipeline_mode<synchronous>, transform_indices = @transform_1, window_bounds = array<i64: 32, 2048>}, {pipeline_mode = #tpu.pipeline_mode<synchronous>, transform_indices = @transform_2, window_bounds = array<i64: 1, 2048>}, {pipeline_mode = #tpu.pipeline_mode<synchronous>, transform_indices = @transform_3, window_bounds = array<i64: 1, 2048>}, {pipeline_mode = #tpu.pipeline_mode<synchronous>, transform_indices = @transform_4, window_bounds = array<i64: 2048, 512>}, {pipeline_mode = #tpu.pipeline_mode<synchronous>, transform_indices = @transform_5, window_bounds = array<i64: 1, 512>}, {pipeline_mode = #tpu.pipeline_mode<synchronous>, transform_indices = @transform_6, window_bounds = array<i64: 1, 512>}, {pipeline_mode = #tpu.pipeline_mode<synchronous>, transform_indices = @transform_7, window_bounds = array<i64: 512, 512>}, {pipeline_mode = #tpu.pipeline_mode<synchronous>, transform_indices = @transform_8, window_bounds = array<i64: 1, 512>}, {pipeline_mode = #tpu.pipeline_mode<synchronous>, transform_indices = @transform_9, window_bounds = array<i64: 1, 512>}, {pipeline_mode = #tpu.pipeline_mode<synchronous>, transform_indices = @transform_10, window_bounds = array<i64: 512, 128>}, {pipeline_mode = #tpu.pipeline_mode<synchronous>, transform_indices = @transform_11, window_bounds = array<i64: 1, 128>}, {pipeline_mode = #tpu.pipeline_mode<synchronous>, transform_indices = @transform_12, window_bounds = array<i64: 1, 128>}, {transform_indices = @transform_13, window_bounds = array<i64: 8, 128>}]} {
    %c0 = arith.constant 0 : index
    %c0_0 = arith.constant 0 : index
    %0 = vector.load %arg1[%c0, %c0_0] : memref<8x32xf32, #tpu.memory_space<vmem>>, vector<8x32xf32>
    %1 = arith.truncf %0 : vector<8x32xf32> to vector<8x32xbf16>
    %c0_1 = arith.constant 0 : index
    %c0_2 = arith.constant 0 : index
    %2 = vector.load %arg2[%c0_1, %c0_2] : memref<32x2048xbf16, #tpu.memory_space<vmem>>, vector<32x2048xbf16>
    %cst = arith.constant dense<0.000000e+00> : vector<8x2048xf32>
    %3 = tpu.matmul %1, %2, %cst {dimension_numbers = #tpu.dot_dimension_numbers<[1], [0], [0], [1], [0, 0, 1, 1], [], []>} : vector<8x32xbf16>, vector<32x2048xbf16>, vector<8x2048xf32> -> vector<8x2048xf32>
    %c0_3 = arith.constant 0 : index
    %c0_4 = arith.constant 0 : index
    %4 = vector.load %arg3[%c0_3, %c0_4] : memref<1x2048xf32, #tpu.memory_space<vmem>>, vector<1x2048xf32>
    %5 = vector.broadcast %4 : vector<1x2048xf32> to vector<8x2048xf32>
    %6 = arith.mulf %3, %5 : vector<8x2048xf32>
    %c0_5 = arith.constant 0 : index
    %c0_6 = arith.constant 0 : index
    %7 = vector.load %arg4[%c0_5, %c0_6] : memref<1x2048xf32, #tpu.memory_space<vmem>>, vector<1x2048xf32>
    %8 = vector.broadcast %7 : vector<1x2048xf32> to vector<8x2048xf32>
    %9 = arith.addf %6, %8 : vector<8x2048xf32>
    %cst_7 = arith.constant 0.000000e+00 : f32
    %10 = vector.broadcast %cst_7 : f32 to vector<8x2048xf32>
    %11 = arith.maximumf %9, %10 : vector<8x2048xf32>
    %12 = arith.truncf %11 : vector<8x2048xf32> to vector<8x2048xbf16>
    %c0_8 = arith.constant 0 : index
    %c0_9 = arith.constant 0 : index
    %13 = vector.load %arg5[%c0_8, %c0_9] : memref<2048x512xbf16, #tpu.memory_space<vmem>>, vector<2048x512xbf16>
    %cst_10 = arith.constant dense<0.000000e+00> : vector<8x512xf32>
    %14 = tpu.matmul %12, %13, %cst_10 {dimension_numbers = #tpu.dot_dimension_numbers<[1], [0], [0], [1], [0, 0, 1, 1], [], []>} : vector<8x2048xbf16>, vector<2048x512xbf16>, vector<8x512xf32> -> vector<8x512xf32>
    %c0_11 = arith.constant 0 : index
    %c0_12 = arith.constant 0 : index
    %15 = vector.load %arg6[%c0_11, %c0_12] : memref<1x512xf32, #tpu.memory_space<vmem>>, vector<1x512xf32>
    %16 = vector.broadcast %15 : vector<1x512xf32> to vector<8x512xf32>
    %17 = arith.mulf %14, %16 : vector<8x512xf32>
    %c0_13 = arith.constant 0 : index
    %c0_14 = arith.constant 0 : index
    %18 = vector.load %arg7[%c0_13, %c0_14] : memref<1x512xf32, #tpu.memory_space<vmem>>, vector<1x512xf32>
    %19 = vector.broadcast %18 : vector<1x512xf32> to vector<8x512xf32>
    %20 = arith.addf %17, %19 : vector<8x512xf32>
    %cst_15 = arith.constant 0.000000e+00 : f32
    %21 = vector.broadcast %cst_15 : f32 to vector<8x512xf32>
    %22 = arith.maximumf %20, %21 : vector<8x512xf32>
    %23 = arith.truncf %22 : vector<8x512xf32> to vector<8x512xbf16>
    %c0_16 = arith.constant 0 : index
    %c0_17 = arith.constant 0 : index
    %24 = vector.load %arg8[%c0_16, %c0_17] : memref<512x512xbf16, #tpu.memory_space<vmem>>, vector<512x512xbf16>
    %cst_18 = arith.constant dense<0.000000e+00> : vector<8x512xf32>
    %25 = tpu.matmul %23, %24, %cst_18 {dimension_numbers = #tpu.dot_dimension_numbers<[1], [0], [0], [1], [0, 0, 1, 1], [], []>} : vector<8x512xbf16>, vector<512x512xbf16>, vector<8x512xf32> -> vector<8x512xf32>
    %c0_19 = arith.constant 0 : index
    %c0_20 = arith.constant 0 : index
    %26 = vector.load %arg9[%c0_19, %c0_20] : memref<1x512xf32, #tpu.memory_space<vmem>>, vector<1x512xf32>
    %27 = vector.broadcast %26 : vector<1x512xf32> to vector<8x512xf32>
    %28 = arith.mulf %25, %27 : vector<8x512xf32>
    %c0_21 = arith.constant 0 : index
    %c0_22 = arith.constant 0 : index
    %29 = vector.load %arg10[%c0_21, %c0_22] : memref<1x512xf32, #tpu.memory_space<vmem>>, vector<1x512xf32>
    %30 = vector.broadcast %29 : vector<1x512xf32> to vector<8x512xf32>
    %31 = arith.addf %28, %30 : vector<8x512xf32>
    %cst_23 = arith.constant 0.000000e+00 : f32
    %32 = vector.broadcast %cst_23 : f32 to vector<8x512xf32>
    %33 = arith.maximumf %31, %32 : vector<8x512xf32>
    %34 = arith.truncf %33 : vector<8x512xf32> to vector<8x512xbf16>
    %c0_24 = arith.constant 0 : index
    %c0_25 = arith.constant 0 : index
    %35 = vector.load %arg11[%c0_24, %c0_25] : memref<512x128xbf16, #tpu.memory_space<vmem>>, vector<512x128xbf16>
    %cst_26 = arith.constant dense<0.000000e+00> : vector<8x128xf32>
    %36 = tpu.matmul %34, %35, %cst_26 {dimension_numbers = #tpu.dot_dimension_numbers<[1], [0], [0], [1], [0, 0, 1, 1], [], []>} : vector<8x512xbf16>, vector<512x128xbf16>, vector<8x128xf32> -> vector<8x128xf32>
    %c0_27 = arith.constant 0 : index
    %c0_28 = arith.constant 0 : index
    %37 = vector.load %arg12[%c0_27, %c0_28] : memref<1x128xf32, #tpu.memory_space<vmem>>, vector<1x128xf32>
    %38 = vector.broadcast %37 : vector<1x128xf32> to vector<8x128xf32>
    %39 = arith.mulf %36, %38 : vector<8x128xf32>
    %c0_29 = arith.constant 0 : index
    %c0_30 = arith.constant 0 : index
    %40 = vector.load %arg13[%c0_29, %c0_30] : memref<1x128xf32, #tpu.memory_space<vmem>>, vector<1x128xf32>
    %41 = vector.broadcast %40 : vector<1x128xf32> to vector<8x128xf32>
    %42 = arith.addf %39, %41 : vector<8x128xf32>
    %c0_31 = arith.constant 0 : index
    %c0_32 = arith.constant 0 : index
    %43 = vector.load %arg14[%c0_31, %c0_32] : memref<8x128xf32, #tpu.memory_space<vmem>>, vector<8x128xf32>
    tpu.vector_store %arg14[%c0_31, %c0_32], %42 {strides = array<i32>} : memref<8x128xf32, #tpu.memory_space<vmem>>, vector<8x128xf32>,
    return
  }
  func.func @transform_0(%arg0: i32) -> (i32, i32) {
    %c0_i32 = arith.constant 0 : i32
    %c0_i32_0 = arith.constant 0 : i32
    return %arg0, %c0_i32 : i32, i32
  }
  func.func @transform_1(%arg0: i32) -> (i32, i32) {
    %c0_i32 = arith.constant 0 : i32
    %c0_i32_0 = arith.constant 0 : i32
    %c0_i32_1 = arith.constant 0 : i32
    return %c0_i32, %c0_i32_0 : i32, i32
  }
  func.func @transform_2(%arg0: i32) -> (i32, i32) {
    %c0_i32 = arith.constant 0 : i32
    %c0_i32_0 = arith.constant 0 : i32
    %c0_i32_1 = arith.constant 0 : i32
    return %c0_i32, %c0_i32_0 : i32, i32
  }
  func.func @transform_3(%arg0: i32) -> (i32, i32) {
    %c0_i32 = arith.constant 0 : i32
    %c0_i32_0 = arith.constant 0 : i32
    %c0_i32_1 = arith.constant 0 : i32
    return %c0_i32, %c0_i32_0 : i32, i32
  }
  func.func @transform_4(%arg0: i32) -> (i32, i32) {
    %c0_i32 = arith.constant 0 : i32
    %c0_i32_0 = arith.constant 0 : i32
    %c0_i32_1 = arith.constant 0 : i32
    return %c0_i32, %c0_i32_0 : i32, i32
  }
  func.func @transform_5(%arg0: i32) -> (i32, i32) {
    %c0_i32 = arith.constant 0 : i32
    %c0_i32_0 = arith.constant 0 : i32
    %c0_i32_1 = arith.constant 0 : i32
    return %c0_i32, %c0_i32_0 : i32, i32
  }
  func.func @transform_6(%arg0: i32) -> (i32, i32) {
    %c0_i32 = arith.constant 0 : i32
    %c0_i32_0 = arith.constant 0 : i32
    %c0_i32_1 = arith.constant 0 : i32
    return %c0_i32, %c0_i32_0 : i32, i32
  }
  func.func @transform_7(%arg0: i32) -> (i32, i32) {
    %c0_i32 = arith.constant 0 : i32
    %c0_i32_0 = arith.constant 0 : i32
    %c0_i32_1 = arith.constant 0 : i32
    return %c0_i32, %c0_i32_0 : i32, i32
  }
  func.func @transform_8(%arg0: i32) -> (i32, i32) {
    %c0_i32 = arith.constant 0 : i32
    %c0_i32_0 = arith.constant 0 : i32
    %c0_i32_1 = arith.constant 0 : i32
    return %c0_i32, %c0_i32_0 : i32, i32
  }
  func.func @transform_9(%arg0: i32) -> (i32, i32) {
    %c0_i32 = arith.constant 0 : i32
    %c0_i32_0 = arith.constant 0 : i32
    %c0_i32_1 = arith.constant 0 : i32
    return %c0_i32, %c0_i32_0 : i32, i32
  }
  func.func @transform_10(%arg0: i32) -> (i32, i32) {
    %c0_i32 = arith.constant 0 : i32
    %c0_i32_0 = arith.constant 0 : i32
    %c0_i32_1 = arith.constant 0 : i32
    return %c0_i32, %c0_i32_0 : i32, i32
  }
  func.func @transform_11(%arg0: i32) -> (i32, i32) {
    %c0_i32 = arith.constant 0 : i32
    %c0_i32_0 = arith.constant 0 : i32
    %c0_i32_1 = arith.constant 0 : i32
    return %c0_i32, %c0_i32_0 : i32, i32
  }
  func.func @transform_12(%arg0: i32) -> (i32, i32) {
    %c0_i32 = arith.constant 0 : i32
    %c0_i32_0 = arith.constant 0 : i32
    %c0_i32_1 = arith.constant 0 : i32
    return %c0_i32, %c0_i32_0 : i32, i32
  }
  func.func @transform_13(%arg0: i32) -> (i32, i32) {
    %c0_i32 = arith.constant 0 : i32
    %c0_i32_0 = arith.constant 0 : i32
    return %arg0, %c0_i32 : i32, i32
  }
}

</mosaic_0001>

<llo_original>
// kernel: decoder_forward.1
$region0: #{decoder_forward.1}
  #allocation0 [shape = 'u32[]', space=smem, size = 0x4, offset = 0x4, fixed_abs, tag = 'smem constant byte address 0x4 - core index']
  #allocation1 [shape = 'u32[144,128]{1,0:T(1,128)}', space=vmem, size = 0x12000, scoped, tag = 'internal scratch']
  %s0 = inlined_call_operand.vmem [shape: f32[8,32], index: 0, kind: input, shape index: {}]
  %s1 = inlined_call_operand.hbm [shape: bf16[32,2048], index: 1, kind: input, shape index: {}]
  %s2 = inlined_call_operand.hbm [shape: f32[1,2048], index: 2, kind: input, shape index: {}]
  %s3 = inlined_call_operand.hbm [shape: f32[1,2048], index: 3, kind: input, shape index: {}]
  %s4 = inlined_call_operand.hbm [shape: bf16[2048,512], index: 4, kind: input, shape index: {}]
  %s5 = inlined_call_operand.hbm [shape: f32[1,512], index: 5, kind: input, shape index: {}]
  %s6 = inlined_call_operand.hbm [shape: f32[1,512], index: 6, kind: input, shape index: {}]
  %s7 = inlined_call_operand.hbm [shape: bf16[512,512], index: 7, kind: input, shape index: {}]
  %s8 = inlined_call_operand.hbm [shape: f32[1,512], index: 8, kind: input, shape index: {}]
  %s9 = inlined_call_operand.hbm [shape: f32[1,512], index: 9, kind: input, shape index: {}]
  %s10 = inlined_call_operand.hbm [shape: bf16[512,128], index: 10, kind: input, shape index: {}]
  %s11 = inlined_call_operand.hbm [shape: f32[1,128], index: 11, kind: input, shape index: {}]
  %s12 = inlined_call_operand.hbm [shape: f32[1,128], index: 12, kind: input, shape index: {}]
  %s13 = inlined_call_operand.vmem [shape: f32[8,128], index: 13, kind: output, shape index: {}]
  %s14 = sld [smem:[#allocation0]]
  $region110: #{decoder_forward.1} parent=0
    _
  %s16 = ssub.s32 1, %s14
  %s17 = scalar_select 0, %s16, %s14
  $region1: #{decoder_forward.1} parent=0
    #allocation2 [shape = 'u8[131072]{0}', space=vmem, size = 0x20000, scoped, tag = 'input window, operand 1, single buffered']
    #allocation3 [shape = 's32[1]{0}', space=sflag, size = 0x4, scoped, tag = 'scoped memory for decoder_forward.1']
    #allocation4 [shape = 'u8[8192]{0}', space=vmem, size = 0x2000, scoped, tag = 'input window, operand 2, single buffered']
    #allocation5 [shape = 's32[1]{0}', space=sflag, size = 0x4, scoped, tag = 'scoped memory for decoder_forward.1']
    #allocation6 [shape = 'u8[8192]{0}', space=vmem, size = 0x2000, scoped, tag = 'input window, operand 3, single buffered']
    #allocation7 [shape = 'u8[2097152]{0}', space=vmem, size = 0x200000, scoped, tag = 'input window, operand 4, single buffered']
    #allocation8 [shape = 's32[1]{0}', space=sflag, size = 0x4, scoped, tag = 'scoped memory for decoder_forward.1']
    #allocation9 [shape = 'u8[2048]{0}', space=vmem, size = 0x800, scoped, tag = 'input window, operand 5, single buffered']
    #allocation10 [shape = 'u8[2048]{0}', space=vmem, size = 0x800, scoped, tag = 'input window, operand 6, single buffered']
    #allocation11 [shape = 's32[1]{0}', space=sflag, size = 0x4, scoped, tag = 'scoped memory for decoder_forward.1']
    #allocation12 [shape = 'u8[524288]{0}', space=vmem, size = 0x80000, scoped, tag = 'input window, operand 7, single buffered']
    #allocation13 [shape = 'u8[2048]{0}', space=vmem, size = 0x800, scoped, tag = 'input window, operand 8, single buffered']
    #allocation14 [shape = 's32[1]{0}', space=sflag, size = 0x4, scoped, tag = 'scoped memory for decoder_forward.1']
    #allocation15 [shape = 'u8[2048]{0}', space=vmem, size = 0x800, scoped, tag = 'input window, operand 9, single buffered']
    #allocation16 [shape = 'u8[131072]{0}', space=vmem, size = 0x20000, scoped, tag = 'input window, operand 10, single buffered']
    #allocation17 [shape = 's32[1]{0}', space=sflag, size = 0x4, scoped, tag = 'scoped memory for decoder_forward.1']
    #allocation18 [shape = 'u8[512]{0}', space=vmem, size = 0x400, scoped, tag = 'input window, operand 11, single buffered']
    #allocation19 [shape = 'u8[512]{0}', space=vmem, size = 0x400, scoped, tag = 'input window, operand 12, single buffered']
    #allocation20 [shape = 's32[1]{0}', space=sflag, size = 0x4, scoped, tag = 'scoped memory for decoder_forward.1']
    %18 = vsyncpa [#allocation3], 0
    %19 = vsyncpa [#allocation5], 0
    %20 = vsyncpa [#allocation8], 0
    %21 = vsyncpa [#allocation11], 0
    %22 = vsyncpa [#allocation14], 0
    %23 = vsyncpa [#allocation17], 0
    %24 = vsyncpa [#allocation20], 0
    // Predicated region
    $region2: #{decoder_forward.1} parent=1 // pred_check
      _
    $region3: #{decoder_forward.1} parent=1 // pred_check_branch
      %26 = sbr.rel (0) target = $region5
    $region4: #{decoder_forward.1} parent=1 // pred_region
      _
    $region5: #{decoder_forward.1} parent=1 // pred_fallthru
      _
    // Predicated region
    $region6: #{decoder_forward.1} parent=1 // pred_check
      _
    $region7: #{decoder_forward.1} parent=1 // pred_check_branch
      %28 = sbr.rel (0) target = $region9
    $region8: #{decoder_forward.1} parent=1 // pred_region
      %s30 = ssub.s32 4096, 4096
      %31 = vsyncadd [#allocation3], %s30
      %s32 = sshll.u32 [#allocation2], 4
      %s33 = int_to_ptr.vmem [resolvable:$true] %s32
      %38 = dma.hbm_to_vmem [thread:$0]  %s1, 4096, %s33, [#allocation3], 1024, 1024, 64
    $region9: #{decoder_forward.1} parent=1 // pred_fallthru
      _
    // Predicated region
    $region10: #{decoder_forward.1} parent=1 // pred_check
      _
    $region11: #{decoder_forward.1} parent=1 // pred_check_branch
      %40 = sbr.rel (0) target = $region13
    $region12: #{decoder_forward.1} parent=1 // pred_region
      %s42 = ssub.s32 256, 256
      %43 = vsyncadd [#allocation5], %s42
      %s45 = sshll.u32 [#allocation4], 4
      %s46 = int_to_ptr.vmem [resolvable:$true] %s45
      %48 = dma.hbm_to_vmem [thread:$0]  %s2, 256, %s46, [#allocation5]
    $region13: #{decoder_forward.1} parent=1 // pred_fallthru
      _
    // Predicated region
    $region14: #{decoder_forward.1} parent=1 // pred_check
      _
    $region15: #{decoder_forward.1} parent=1 // pred_check_branch
      %50 = sbr.rel (0) target = $region17
    $region16: #{decoder_forward.1} parent=1 // pred_region
      %s52 = ssub.s32 256, 256
      %53 = vsyncadd [#allocation5], %s52
      %s55 = sshll.u32 [#allocation6], 4
      %s56 = int_to_ptr.vmem [resolvable:$true] %s55
      %58 = dma.hbm_to_vmem [thread:$0]  %s3, 256, %s56, [#allocation5]
    $region17: #{decoder_forward.1} parent=1 // pred_fallthru
      _
    // Predicated region
    $region18: #{decoder_forward.1} parent=1 // pred_check
      _
    $region19: #{decoder_forward.1} parent=1 // pred_check_branch
      %60 = sbr.rel (0) target = $region21
    $region20: #{decoder_forward.1} parent=1 // pred_region
      %s62 = ssub.s32 65536, 65536
      %63 = vsyncadd [#allocation8], %s62
      %s64 = sshll.u32 [#allocation7], 4
      %s65 = int_to_ptr.vmem [resolvable:$true] %s64
      %70 = dma.hbm_to_vmem [thread:$0]  %s4, 65536, %s65, [#allocation8], 256, 256, 16
    $region21: #{decoder_forward.1} parent=1 // pred_fallthru
      _
    // Predicated region
    $region22: #{decoder_forward.1} parent=1 // pred_check
      _
    $region23: #{decoder_forward.1} parent=1 // pred_check_branch
      %72 = sbr.rel (0) target = $region25
    $region24: #{decoder_forward.1} parent=1 // pred_region
      %s74 = ssub.s32 64, 64
      %75 = vsyncadd [#allocation8], %s74
      %s77 = sshll.u32 [#allocation9], 4
      %s78 = int_to_ptr.vmem [resolvable:$true] %s77
      %80 = dma.hbm_to_vmem [thread:$0]  %s5, 64, %s78, [#allocation8]
    $region25: #{decoder_forward.1} parent=1 // pred_fallthru
      _
    // Predicated region
    $region26: #{decoder_forward.1} parent=1 // pred_check
      _
    $region27: #{decoder_forward.1} parent=1 // pred_check_branch
      %82 = sbr.rel (0) target = $region29
    $region28: #{decoder_forward.1} parent=1 // pred_region
      %s84 = ssub.s32 64, 64
      %85 = vsyncadd [#allocation11], %s84
      %s87 = sshll.u32 [#allocation10], 4
      %s88 = int_to_ptr.vmem [resolvable:$true] %s87
      %90 = dma.hbm_to_vmem [thread:$0]  %s6, 64, %s88, [#allocation11]
    $region29: #{decoder_forward.1} parent=1 // pred_fallthru
      _
    // Predicated region
    $region30: #{decoder_forward.1} parent=1 // pred_check
      _
    $region31: #{decoder_forward.1} parent=1 // pred_check_branch
      %92 = sbr.rel (0) target = $region33
    $region32: #{decoder_forward.1} parent=1 // pred_region
      %s94 = ssub.s32 16384, 16384
      %95 = vsyncadd [#allocation11], %s94
      %s96 = sshll.u32 [#allocation12], 4
      %s97 = int_to_ptr.vmem [resolvable:$true] %s96
      %102 = dma.hbm_to_vmem [thread:$0]  %s7, 16384, %s97, [#allocation11], 256, 256, 16
    $region33: #{decoder_forward.1} parent=1 // pred_fallthru
      _
    // Predicated region
    $region34: #{decoder_forward.1} parent=1 // pred_check
      _
    $region35: #{decoder_forward.1} parent=1 // pred_check_branch
      %104 = sbr.rel (0) target = $region37
    $region36: #{decoder_forward.1} parent=1 // pred_region
      %s106 = ssub.s32 64, 64
      %107 = vsyncadd [#allocation14], %s106
      %s109 = sshll.u32 [#allocation13], 4
      %s110 = int_to_ptr.vmem [resolvable:$true] %s109
      %112 = dma.hbm_to_vmem [thread:$0]  %s8, 64, %s110, [#allocation14]
    $region37: #{decoder_forward.1} parent=1 // pred_fallthru
      _
    // Predicated region
    $region38: #{decoder_forward.1} parent=1 // pred_check
      _
    $region39: #{decoder_forward.1} parent=1 // pred_check_branch
      %114 = sbr.rel (0) target = $region41
    $region40: #{decoder_forward.1} parent=1 // pred_region
      %s116 = ssub.s32 64, 64
      %117 = vsyncadd [#allocation14], %s116
      %s119 = sshll.u32 [#allocation15], 4
      %s120 = int_to_ptr.vmem [resolvable:$true] %s119
      %122 = dma.hbm_to_vmem [thread:$0]  %s9, 64, %s120, [#allocation14]
    $region41: #{decoder_forward.1} parent=1 // pred_fallthru
      _
    // Predicated region
    $region42: #{decoder_forward.1} parent=1 // pred_check
      _
    $region43: #{decoder_forward.1} parent=1 // pred_check_branch
      %124 = sbr.rel (0) target = $region45
    $region44: #{decoder_forward.1} parent=1 // pred_region
      %s126 = ssub.s32 4096, 4096
      %127 = vsyncadd [#allocation17], %s126
      %s128 = sshll.u32 [#allocation16], 4
      %s129 = int_to_ptr.vmem [resolvable:$true] %s128
      %134 = dma.hbm_to_vmem [thread:$0]  %s10, 4096, %s129, [#allocation17], 64, 64, 4
    $region45: #{decoder_forward.1} parent=1 // pred_fallthru
      _
    // Predicated region
    $region46: #{decoder_forward.1} parent=1 // pred_check
      _
    $region47: #{decoder_forward.1} parent=1 // pred_check_branch
      %136 = sbr.rel (0) target = $region49
    $region48: #{decoder_forward.1} parent=1 // pred_region
      %s138 = ssub.s32 16, 16
      %139 = vsyncadd [#allocation17], %s138
      %s141 = sshll.u32 [#allocation18], 4
      %s142 = int_to_ptr.vmem [resolvable:$true] %s141
      %144 = dma.hbm_to_vmem [thread:$0]  %s11, 16, %s142, [#allocation17]
    $region49: #{decoder_forward.1} parent=1 // pred_fallthru
      _
    // Predicated region
    $region50: #{decoder_forward.1} parent=1 // pred_check
      _
    $region51: #{decoder_forward.1} parent=1 // pred_check_branch
      %146 = sbr.rel (0) target = $region53
    $region52: #{decoder_forward.1} parent=1 // pred_region
      %s148 = ssub.s32 16, 16
      %149 = vsyncadd [#allocation20], %s148
      %s151 = sshll.u32 [#allocation19], 4
      %s152 = int_to_ptr.vmem [resolvable:$true] %s151
      %154 = dma.hbm_to_vmem [thread:$0]  %s12, 16, %s152, [#allocation20]
    $region53: #{decoder_forward.1} parent=1 // pred_fallthru
      _
    // Predicated region
    $region54: #{decoder_forward.1} parent=1 // pred_check
      _
    $region55: #{decoder_forward.1} parent=1 // pred_check_branch
      %156 = sbr.rel (0) target = $region57
    $region56: #{decoder_forward.1} parent=1 // pred_region
      %157 = dma.done [#allocation3], 4096
    $region57: #{decoder_forward.1} parent=1 // pred_fallthru
      _
    // Predicated region
    $region58: #{decoder_forward.1} parent=1 // pred_check
      _
    $region59: #{decoder_forward.1} parent=1 // pred_check_branch
      %159 = sbr.rel (0) target = $region61
    $region60: #{decoder_forward.1} parent=1 // pred_region
      %160 = dma.done [#allocation5], 256
    $region61: #{decoder_forward.1} parent=1 // pred_fallthru
      _
    // Predicated region
    $region62: #{decoder_forward.1} parent=1 // pred_check
      _
    $region63: #{decoder_forward.1} parent=1 // pred_check_branch
      %162 = sbr.rel (0) target = $region65
    $region64: #{decoder_forward.1} parent=1 // pred_region
      %163 = dma.done [#allocation5], 256
    $region65: #{decoder_forward.1} parent=1 // pred_fallthru
      _
    // Predicated region
    $region66: #{decoder_forward.1} parent=1 // pred_check
      _
    $region67: #{decoder_forward.1} parent=1 // pred_check_branch
      %165 = sbr.rel (0) target = $region69
    $region68: #{decoder_forward.1} parent=1 // pred_region
      %166 = dma.done [#allocation8], 65536
    $region69: #{decoder_forward.1} parent=1 // pred_fallthru
      _
    // Predicated region
    $region70: #{decoder_forward.1} parent=1 // pred_check
      _
    $region71: #{decoder_forward.1} parent=1 // pred_check_branch
      %168 = sbr.rel (0) target = $region73
    $region72: #{decoder_forward.1} parent=1 // pred_region
      %169 = dma.done [#allocation8], 64
    $region73: #{decoder_forward.1} parent=1 // pred_fallthru
      _
    // Predicated region
    $region74: #{decoder_forward.1} parent=1 // pred_check
      _
    $region75: #{decoder_forward.1} parent=1 // pred_check_branch
      %171 = sbr.rel (0) target = $region77
    $region76: #{decoder_forward.1} parent=1 // pred_region
      %172 = dma.done [#allocation11], 64
    $region77: #{decoder_forward.1} parent=1 // pred_fallthru
      _
    // Predicated region
    $region78: #{decoder_forward.1} parent=1 // pred_check
      _
    $region79: #{decoder_forward.1} parent=1 // pred_check_branch
      %174 = sbr.rel (0) target = $region81
    $region80: #{decoder_forward.1} parent=1 // pred_region
      %175 = dma.done [#allocation11], 16384
    $region81: #{decoder_forward.1} parent=1 // pred_fallthru
      _
    // Predicated region
    $region82: #{decoder_forward.1} parent=1 // pred_check
      _
    $region83: #{decoder_forward.1} parent=1 // pred_check_branch
      %177 = sbr.rel (0) target = $region85
    $region84: #{decoder_forward.1} parent=1 // pred_region
      %178 = dma.done [#allocation14], 64
    $region85: #{decoder_forward.1} parent=1 // pred_fallthru
      _
    // Predicated region
    $region86: #{decoder_forward.1} parent=1 // pred_check
      _
    $region87: #{decoder_forward.1} parent=1 // pred_check_branch
      %180 = sbr.rel (0) target = $region89
    $region88: #{decoder_forward.1} parent=1 // pred_region
      %181 = dma.done [#allocation14], 64
    $region89: #{decoder_forward.1} parent=1 // pred_fallthru
      _
    // Predicated region
    $region90: #{decoder_forward.1} parent=1 // pred_check
      _
    $region91: #{decoder_forward.1} parent=1 // pred_check_branch
      %183 = sbr.rel (0) target = $region93
    $region92: #{decoder_forward.1} parent=1 // pred_region
      %184 = dma.done [#allocation17], 4096
    $region93: #{decoder_forward.1} parent=1 // pred_fallthru
      _
    // Predicated region
    $region94: #{decoder_forward.1} parent=1 // pred_check
      _
    $region95: #{decoder_forward.1} parent=1 // pred_check_branch
      %186 = sbr.rel (0) target = $region97
    $region96: #{decoder_forward.1} parent=1 // pred_region
      %187 = dma.done [#allocation17], 16
    $region97: #{decoder_forward.1} parent=1 // pred_fallthru
      _
    // Predicated region
    $region98: #{decoder_forward.1} parent=1 // pred_check
      _
    $region99: #{decoder_forward.1} parent=1 // pred_check_branch
      %189 = sbr.rel (0) target = $region101
    $region100: #{decoder_forward.1} parent=1 // pred_region
      %190 = dma.done [#allocation20], 16
    $region101: #{decoder_forward.1} parent=1 // pred_fallthru
      _
    %v192 = vld [vmem:[%s0] sm:$0xff]
    %v193 = vpack.c.bf16 %v192, %v192
    %v194 = vld [vmem:[#allocation2] sm:$0xff]
    %v195 = vld [vmem:[#allocation2 + $0x8] sm:$0xff]
    %v196 = vld [vmem:[#allocation2 + $0x10] sm:$0xff]
    %v197 = vld [vmem:[#allocation2 + $0x18] sm:$0xff]
    %v198 = vld [vmem:[#allocation2 + $0x20] sm:$0xff]
    %v199 = vld [vmem:[#allocation2 + $0x28] sm:$0xff]
    %v200 = vld [vmem:[#allocation2 + $0x30] sm:$0xff]
    %v201 = vld [vmem:[#allocation2 + $0x38] sm:$0xff]
    %v202 = vld [vmem:[#allocation2 + $0x40] sm:$0xff]
    %v203 = vld [vmem:[#allocation2 + $0x48] sm:$0xff]
    %v204 = vld [vmem:[#allocation2 + $0x50] sm:$0xff]
    %v205 = vld [vmem:[#allocation2 + $0x58] sm:$0xff]
    %v206 = vld [vmem:[#allocation2 + $0x60] sm:$0xff]
    %v207 = vld [vmem:[#allocation2 + $0x68] sm:$0xff]
    %v208 = vld [vmem:[#allocation2 + $0x70] sm:$0xff]
    %v209 = vld [vmem:[#allocation2 + $0x78] sm:$0xff]
    %v210 = vld [vmem:[#allocation2 + $0x80] sm:$0xff]
    %v211 = vld [vmem:[#allocation2 + $0x88] sm:$0xff]
    %v212 = vld [vmem:[#allocation2 + $0x90] sm:$0xff]
    %v213 = vld [vmem:[#allocation2 + $0x98] sm:$0xff]
    %v214 = vld [vmem:[#allocation2 + $0xa0] sm:$0xff]
    %v215 = vld [vmem:[#allocation2 + $0xa8] sm:$0xff]
    %v216 = vld [vmem:[#allocation2 + $0xb0] sm:$0xff]
    %v217 = vld [vmem:[#allocation2 + $0xb8] sm:$0xff]
    %v218 = vld [vmem:[#allocation2 + $0xc0] sm:$0xff]
    %v219 = vld [vmem:[#allocation2 + $0xc8] sm:$0xff]
    %v220 = vld [vmem:[#allocation2 + $0xd0] sm:$0xff]
    %v221 = vld [vmem:[#allocation2 + $0xd8] sm:$0xff]
    %v222 = vld [vmem:[#allocation2 + $0xe0] sm:$0xff]
    %v223 = vld [vmem:[#allocation2 + $0xe8] sm:$0xff]
    %v224 = vld [vmem:[#allocation2 + $0xf0] sm:$0xff]
    %v225 = vld [vmem:[#allocation2 + $0xf8] sm:$0xff]
    %v258 = vunpack.c.l.b16 %v194
    %v259 = vunpack.c.h.b16 %v194
    %v260 = vunpack.c.l.b16 %v195
    %v261 = vunpack.c.h.b16 %v195
    %v262 = vunpack.c.l.b16 %v196
    %v263 = vunpack.c.h.b16 %v196
    %v264 = vunpack.c.l.b16 %v197
    %v265 = vunpack.c.h.b16 %v197
    %v266 = vunpack.c.l.b16 %v198
    %v267 = vunpack.c.h.b16 %v198
    %v268 = vunpack.c.l.b16 %v199
    %v269 = vunpack.c.h.b16 %v199
    %v270 = vunpack.c.l.b16 %v200
    %v271 = vunpack.c.h.b16 %v200
    %v272 = vunpack.c.l.b16 %v201
    %v273 = vunpack.c.h.b16 %v201
    %v274 = vunpack.c.l.b16 %v202
    %v275 = vunpack.c.h.b16 %v202
    %v276 = vunpack.c.l.b16 %v203
    %v277 = vunpack.c.h.b16 %v203
    %v278 = vunpack.c.l.b16 %v204
    %v279 = vunpack.c.h.b16 %v204
    %v280 = vunpack.c.l.b16 %v205
    %v281 = vunpack.c.h.b16 %v205
    %v282 = vunpack.c.l.b16 %v206
    %v283 = vunpack.c.h.b16 %v206
    %v284 = vunpack.c.l.b16 %v207
    %v285 = vunpack.c.h.b16 %v207
    %v286 = vunpack.c.l.b16 %v208
    %v287 = vunpack.c.h.b16 %v208
    %v288 = vunpack.c.l.b16 %v209
    %v289 = vunpack.c.h.b16 %v209
    %v290 = vunpack.c.l.b16 %v210
    %v291 = vunpack.c.h.b16 %v210
    %v292 = vunpack.c.l.b16 %v211
    %v293 = vunpack.c.h.b16 %v211
    %v294 = vunpack.c.l.b16 %v212
    %v295 = vunpack.c.h.b16 %v212
    %v296 = vunpack.c.l.b16 %v213
    %v297 = vunpack.c.h.b16 %v213
    %v298 = vunpack.c.l.b16 %v214
    %v299 = vunpack.c.h.b16 %v214
    %v300 = vunpack.c.l.b16 %v215
    %v301 = vunpack.c.h.b16 %v215
    %v302 = vunpack.c.l.b16 %v216
    %v303 = vunpack.c.h.b16 %v216
    %v304 = vunpack.c.l.b16 %v217
    %v305 = vunpack.c.h.b16 %v217
    %v306 = vunpack.c.l.b16 %v218
    %v307 = vunpack.c.h.b16 %v218
    %v308 = vunpack.c.l.b16 %v219
    %v309 = vunpack.c.h.b16 %v219
    %v310 = vunpack.c.l.b16 %v220
    %v311 = vunpack.c.h.b16 %v220
    %v312 = vunpack.c.l.b16 %v221
    %v313 = vunpack.c.h.b16 %v221
    %v314 = vunpack.c.l.b16 %v222
    %v315 = vunpack.c.h.b16 %v222
    %v316 = vunpack.c.l.b16 %v223
    %v317 = vunpack.c.h.b16 %v223
    %v318 = vunpack.c.l.b16 %v224
    %v319 = vunpack.c.h.b16 %v224
    %v320 = vunpack.c.l.b16 %v225
    %v321 = vunpack.c.h.b16 %v225
    %v322 = vpack.c.b16 %v274, %v258
    %v323 = vpack.c.b16 %v275, %v259
    %v324 = vpack.c.b16 %v276, %v260
    %v325 = vpack.c.b16 %v277, %v261
    %v326 = vpack.c.b16 %v278, %v262
    %v327 = vpack.c.b16 %v279, %v263
    %v328 = vpack.c.b16 %v280, %v264
    %v329 = vpack.c.b16 %v281, %v265
    %v330 = vpack.c.b16 %v282, %v266
    %v331 = vpack.c.b16 %v283, %v267
    %v332 = vpack.c.b16 %v284, %v268
    %v333 = vpack.c.b16 %v285, %v269
    %v334 = vpack.c.b16 %v286, %v270
    %v335 = vpack.c.b16 %v287, %v271
    %v336 = vpack.c.b16 %v288, %v272
    %v337 = vpack.c.b16 %v289, %v273
    %v338 = vpack.c.b16 %v306, %v290
    %v339 = vpack.c.b16 %v307, %v291
    %v340 = vpack.c.b16 %v308, %v292
    %v341 = vpack.c.b16 %v309, %v293
    %v342 = vpack.c.b16 %v310, %v294
    %v343 = vpack.c.b16 %v311, %v295
    %v344 = vpack.c.b16 %v312, %v296
    %v345 = vpack.c.b16 %v313, %v297
    %v346 = vpack.c.b16 %v314, %v298
    %v347 = vpack.c.b16 %v315, %v299
    %v348 = vpack.c.b16 %v316, %v300
    %v349 = vpack.c.b16 %v317, %v301
    %v350 = vpack.c.b16 %v318, %v302
    %v351 = vpack.c.b16 %v319, %v303
    %v352 = vpack.c.b16 %v320, %v304
    %v353 = vpack.c.b16 %v321, %v305
    %vm386 = vcmask 261120
    %v388 = vsel %vm386, %v193, 0
    %390 = vmatprep.subr.bf16.mxu0 %v323
    %391 = vmatpush1.bf16.msra.mxu0 %v322
    %392 = vmatprep.subr.bf16.mxu0 %v339
    %393 = vmatpush1.bf16.msra.mxu0 %v338
    %394 = vmatprep.subr.bf16.mxu0 0
    %395 = vmatpush1.bf16.msra.mxu0 0
    %396 = vmatprep.subr.bf16.mxu0 0
    %397 = vmatpush1.bf16.msra.mxu0 0
    %398 = vmatprep.subr.bf16.mxu0 0
    %399 = vmatpush1.bf16.msra.mxu0 0
    %400 = vmatprep.subr.bf16.mxu0 0
    %401 = vmatpush1.bf16.msra.mxu0 0
    %402 = vmatprep.subr.bf16.mxu0 0
    %403 = vmatpush1.bf16.msra.mxu0 0
    %404 = vmatprep.subr.bf16.mxu0 0
    %405 = vmatpush1.bf16.msra.mxu0 0
    %406 = vmatprep.subr.bf16.mxu0 0
    %407 = vmatpush1.bf16.msra.mxu0 0
    %408 = vmatprep.subr.bf16.mxu0 0
    %409 = vmatpush1.bf16.msra.mxu0 0
    %410 = vmatprep.subr.bf16.mxu0 0
    %411 = vmatpush1.bf16.msra.mxu0 0
    %412 = vmatprep.subr.bf16.mxu0 0
    %413 = vmatpush1.bf16.msra.mxu0 0
    %414 = vmatprep.subr.bf16.mxu0 0
    %415 = vmatpush1.bf16.msra.mxu0 0
    %416 = vmatprep.subr.bf16.mxu0 0
    %417 = vmatpush1.bf16.msra.mxu0 0
    %418 = vmatprep.subr.bf16.mxu0 0
    %419 = vmatpush1.bf16.msra.mxu0 0
    %420 = vmatprep.subr.bf16.mxu0 0
    %421 = vmatpush1.bf16.msra.mxu0 0
    %422 = vmatprep.mubr.bf16.mxu0 0
    %423 = vmatmul.mubr.bf16.gmra.mrb[0].mxu0 %v388
    %v424 = vpop.f32.mrb[0].mxu0
    %v425 = vadd.f32 0.0, %v424
    %v426 = vpop.f32.mrb[0].mxu0
    %v427 = vadd.f32 0.0, %v426
    %v428 = vpop.f32.mrb[0].mxu0
    %v429 = vpop.f32.mrb[0].mxu0
    %430 = vdwg.mxu0
    %431 = vmatprep.subr.bf16.mxu0 %v325
    %432 = vmatpush1.bf16.msra.mxu0 %v324
    %433 = vmatprep.subr.bf16.mxu0 %v341
    %434 = vmatpush1.bf16.msra.mxu0 %v340
    %435 = vmatprep.subr.bf16.mxu0 0
    %436 = vmatpush1.bf16.msra.mxu0 0
    %437 = vmatprep.subr.bf16.mxu0 0
    %438 = vmatpush1.bf16.msra.mxu0 0
    %439 = vmatprep.subr.bf16.mxu0 0
    %440 = vmatpush1.bf16.msra.mxu0 0
    %441 = vmatprep.subr.bf16.mxu0 0
    %442 = vmatpush1.bf16.msra.mxu0 0
    %443 = vmatprep.subr.bf16.mxu0 0
    %444 = vmatpush1.bf16.msra.mxu0 0
    %445 = vmatprep.subr.bf16.mxu0 0
    %446 = vmatpush1.bf16.msra.mxu0 0
    %447 = vmatprep.subr.bf16.mxu0 0
    %448 = vmatpush1.bf16.msra.mxu0 0
    %449 = vmatprep.subr.bf16.mxu0 0
    %450 = vmatpush1.bf16.msra.mxu0 0
    %451 = vmatprep.subr.bf16.mxu0 0
    %452 = vmatpush1.bf16.msra.mxu0 0
    %453 = vmatprep.subr.bf16.mxu0 0
    %454 = vmatpush1.bf16.msra.mxu0 0
    %455 = vmatprep.subr.bf16.mxu0 0
    %456 = vmatpush1.bf16.msra.mxu0 0
    %457 = vmatprep.subr.bf16.mxu0 0
    %458 = vmatpush1.bf16.msra.mxu0 0
    %459 = vmatprep.subr.bf16.mxu0 0
    %460 = vmatpush1.bf16.msra.mxu0 0
    %461 = vmatprep.subr.bf16.mxu0 0
    %462 = vmatpush1.bf16.msra.mxu0 0
    %463 = vmatprep.mubr.bf16.mxu0 0
    %464 = vmatmul.mubr.bf16.gmra.mrb[0].mxu0 %v388
    %v465 = vpop.f32.mrb[0].mxu0
    %v466 = vadd.f32 0.0, %v465
    %v467 = vpop.f32.mrb[0].mxu0
    %v468 = vadd.f32 0.0, %v467
    %v469 = vpop.f32.mrb[0].mxu0
    %v470 = vpop.f32.mrb[0].mxu0
    %471 = vdwg.mxu0
    %472 = vmatprep.subr.bf16.mxu0 %v327
    %473 = vmatpush1.bf16.msra.mxu0 %v326
    %474 = vmatprep.subr.bf16.mxu0 %v343
    %475 = vmatpush1.bf16.msra.mxu0 %v342
    %476 = vmatprep.subr.bf16.mxu0 0
    %477 = vmatpush1.bf16.msra.mxu0 0
    %478 = vmatprep.subr.bf16.mxu0 0
    %479 = vmatpush1.bf16.msra.mxu0 0
    %480 = vmatprep.subr.bf16.mxu0 0
    %481 = vmatpush1.bf16.msra.mxu0 0
    %482 = vmatprep.subr.bf16.mxu0 0
    %483 = vmatpush1.bf16.msra.mxu0 0
    %484 = vmatprep.subr.bf16.mxu0 0
    %485 = vmatpush1.bf16.msra.mxu0 0
    %486 = vmatprep.subr.bf16.mxu0 0
    %487 = vmatpush1.bf16.msra.mxu0 0
    %488 = vmatprep.subr.bf16.mxu0 0
    %489 = vmatpush1.bf16.msra.mxu0 0
    %490 = vmatprep.subr.bf16.mxu0 0
    %491 = vmatpush1.bf16.msra.mxu0 0
    %492 = vmatprep.subr.bf16.mxu0 0
    %493 = vmatpush1.bf16.msra.mxu0 0
    %494 = vmatprep.subr.bf16.mxu0 0
    %495 = vmatpush1.bf16.msra.mxu0 0
    %496 = vmatprep.subr.bf16.mxu0 0
    %497 = vmatpush1.bf16.msra.mxu0 0
    %498 = vmatprep.subr.bf16.mxu0 0
    %499 = vmatpush1.bf16.msra.mxu0 0
    %500 = vmatprep.subr.bf16.mxu0 0
    %501 = vmatpush1.bf16.msra.mxu0 0
    %502 = vmatprep.subr.bf16.mxu0 0
    %503 = vmatpush1.bf16.msra.mxu0 0
    %504 = vmatprep.mubr.bf16.mxu0 0
    %505 = vmatmul.mubr.bf16.gmra.mrb[0].mxu0 %v388
    %v506 = vpop.f32.mrb[0].mxu0
    %v507 = vadd.f32 0.0, %v506
    %v508 = vpop.f32.mrb[0].mxu0
    %v509 = vadd.f32 0.0, %v508
    %v510 = vpop.f32.mrb[0].mxu0
    %v511 = vpop.f32.mrb[0].mxu0
    %512 = vdwg.mxu0
    %513 = vmatprep.subr.bf16.mxu0 %v329
    %514 = vmatpush1.bf16.msra.mxu0 %v328
    %515 = vmatprep.subr.bf16.mxu0 %v345
    %516 = vmatpush1.bf16.msra.mxu0 %v344
    %517 = vmatprep.subr.bf16.mxu0 0
    %518 = vmatpush1.bf16.msra.mxu0 0
    %519 = vmatprep.subr.bf16.mxu0 0
    %520 = vmatpush1.bf16.msra.mxu0 0
    %521 = vmatprep.subr.bf16.mxu0 0
    %522 = vmatpush1.bf16.msra.mxu0 0
    %523 = vmatprep.subr.bf16.mxu0 0
    %524 = vmatpush1.bf16.msra.mxu0 0
    %525 = vmatprep.subr.bf16.mxu0 0
    %526 = vmatpush1.bf16.msra.mxu0 0
    %527 = vmatprep.subr.bf16.mxu0 0
    %528 = vmatpush1.bf16.msra.mxu0 0
    %529 = vmatprep.subr.bf16.mxu0 0
    %530 = vmatpush1.bf16.msra.mxu0 0
    %531 = vmatprep.subr.bf16.mxu0 0
    %532 = vmatpush1.bf16.msra.mxu0 0
    %533 = vmatprep.subr.bf16.mxu0 0
    %534 = vmatpush1.bf16.msra.mxu0 0
    %535 = vmatprep.subr.bf16.mxu0 0
    %536 = vmatpush1.bf16.msra.mxu0 0
    %537 = vmatprep.subr.bf16.mxu0 0
    %538 = vmatpush1.bf16.msra.mxu0 0
    %539 = vmatprep.subr.bf16.mxu0 0
    %540 = vmatpush1.bf16.msra.mxu0 0
    %541 = vmatprep.subr.bf16.mxu0 0
    %542 = vmatpush1.bf16.msra.mxu0 0
    %543 = vmatprep.subr.bf16.mxu0 0
    %544 = vmatpush1.bf16.msra.mxu0 0
    %545 = vmatprep.mubr.bf16.mxu0 0
    %546 = vmatmul.mubr.bf16.gmra.mrb[0].mxu0 %v388
    %v547 = vpop.f32.mrb[0].mxu0
    %v548 = vadd.f32 0.0, %v547
    %v549 = vpop.f32.mrb[0].mxu0
    %v550 = vadd.f32 0.0, %v549
    %v551 = vpop.f32.mrb[0].mxu0
    %v552 = vpop.f32.mrb[0].mxu0
    %553 = vdwg.mxu0
    %554 = vmatprep.subr.bf16.mxu0 %v331
    %555 = vmatpush1.bf16.msra.mxu0 %v330
    %556 = vmatprep.subr.bf16.mxu0 %v347
    %557 = vmatpush1.bf16.msra.mxu0 %v346
    %558 = vmatprep.subr.bf16.mxu0 0
    %559 = vmatpush1.bf16.msra.mxu0 0
    %560 = vmatprep.subr.bf16.mxu0 0
    %561 = vmatpush1.bf16.msra.mxu0 0
    %562 = vmatprep.subr.bf16.mxu0 0
    %563 = vmatpush1.bf16.msra.mxu0 0
    %564 = vmatprep.subr.bf16.mxu0 0
    %565 = vmatpush1.bf16.msra.mxu0 0
    %566 = vmatprep.subr.bf16.mxu0 0
    %567 = vmatpush1.bf16.msra.mxu0 0
    %568 = vmatprep.subr.bf16.mxu0 0
    %569 = vmatpush1.bf16.msra.mxu0 0
    %570 = vmatprep.subr.bf16.mxu0 0
    %571 = vmatpush1.bf16.msra.mxu0 0
    %572 = vmatprep.subr.bf16.mxu0 0
    %573 = vmatpush1.bf16.msra.mxu0 0
    %574 = vmatprep.subr.bf16.mxu0 0
    %575 = vmatpush1.bf16.msra.mxu0 0
    %576 = vmatprep.subr.bf16.mxu0 0
    %577 = vmatpush1.bf16.msra.mxu0 0
    %578 = vmatprep.subr.bf16.mxu0 0
    %579 = vmatpush1.bf16.msra.mxu0 0
    %580 = vmatprep.subr.bf16.mxu0 0
    %581 = vmatpush1.bf16.msra.mxu0 0
    %582 = vmatprep.subr.bf16.mxu0 0
    %583 = vmatpush1.bf16.msra.mxu0 0
    %584 = vmatprep.subr.bf16.mxu0 0
    %585 = vmatpush1.bf16.msra.mxu0 0
    %586 = vmatprep.mubr.bf16.mxu0 0
    %587 = vmatmul.mubr.bf16.gmra.mrb[0].mxu0 %v388
    %v588 = vpop.f32.mrb[0].mxu0
    %v589 = vadd.f32 0.0, %v588
    %v590 = vpop.f32.mrb[0].mxu0
    %v591 = vadd.f32 0.0, %v590
    %v592 = vpop.f32.mrb[0].mxu0
    %v593 = vpop.f32.mrb[0].mxu0
    %594 = vdwg.mxu0
    %595 = vmatprep.subr.bf16.mxu0 %v333
    %596 = vmatpush1.bf16.msra.mxu0 %v332
    %597 = vmatprep.subr.bf16.mxu0 %v349
    %598 = vmatpush1.bf16.msra.mxu0 %v348
    %599 = vmatprep.subr.bf16.mxu0 0
    %600 = vmatpush1.bf16.msra.mxu0 0
    %601 = vmatprep.subr.bf16.mxu0 0
    %602 = vmatpush1.bf16.msra.mxu0 0
    %603 = vmatprep.subr.bf16.mxu0 0
    %604 = vmatpush1.bf16.msra.mxu0 0
    %605 = vmatprep.subr.bf16.mxu0 0
    %606 = vmatpush1.bf16.msra.mxu0 0
    %607 = vmatprep.subr.bf16.mxu0 0
    %608 = vmatpush1.bf16.msra.mxu0 0
    %609 = vmatprep.subr.bf16.mxu0 0
    %610 = vmatpush1.bf16.msra.mxu0 0
    %611 = vmatprep.subr.bf16.mxu0 0
    %612 = vmatpush1.bf16.msra.mxu0 0
    %613 = vmatprep.subr.bf16.mxu0 0
    %614 = vmatpush1.bf16.msra.mxu0 0
    %615 = vmatprep.subr.bf16.mxu0 0
    %616 = vmatpush1.bf16.msra.mxu0 0
    %617 = vmatprep.subr.bf16.mxu0 0
    %618 = vmatpush1.bf16.msra.mxu0 0
    %619 = vmatprep.subr.bf16.mxu0 0
    %620 = vmatpush1.bf16.msra.mxu0 0
    %621 = vmatprep.subr.bf16.mxu0 0
    %622 = vmatpush1.bf16.msra.mxu0 0
    %623 = vmatprep.subr.bf16.mxu0 0
    %624 = vmatpush1.bf16.msra.mxu0 0
    %625 = vmatprep.subr.bf16.mxu0 0
    %626 = vmatpush1.bf16.msra.mxu0 0
    %627 = vmatprep.mubr.bf16.mxu0 0
    %628 = vmatmul.mubr.bf16.gmra.mrb[0].mxu0 %v388
    %v629 = vpop.f32.mrb[0].mxu0
    %v630 = vadd.f32 0.0, %v629
    %v631 = vpop.f32.mrb[0].mxu0
    %v632 = vadd.f32 0.0, %v631
    %v633 = vpop.f32.mrb[0].mxu0
    %v634 = vpop.f32.mrb[0].mxu0
    %635 = vdwg.mxu0
    %636 = vmatprep.subr.bf16.mxu0 %v335
    %637 = vmatpush1.bf16.msra.mxu0 %v334
    %638 = vmatprep.subr.bf16.mxu0 %v351
    %639 = vmatpush1.bf16.msra.mxu0 %v350
    %640 = vmatprep.subr.bf16.mxu0 0
    %641 = vmatpush1.bf16.msra.mxu0 0
    %642 = vmatprep.subr.bf16.mxu0 0
    %643 = vmatpush1.bf16.msra.mxu0 0
    %644 = vmatprep.subr.bf16.mxu0 0
    %645 = vmatpush1.bf16.msra.mxu0 0
    %646 = vmatprep.subr.bf16.mxu0 0
    %647 = vmatpush1.bf16.msra.mxu0 0
    %648 = vmatprep.subr.bf16.mxu0 0
    %649 = vmatpush1.bf16.msra.mxu0 0
    %650 = vmatprep.subr.bf16.mxu0 0
    %651 = vmatpush1.bf16.msra.mxu0 0
    %652 = vmatprep.subr.bf16.mxu0 0
    %653 = vmatpush1.bf16.msra.mxu0 0
    %654 = vmatprep.subr.bf16.mxu0 0
    %655 = vmatpush1.bf16.msra.mxu0 0
    %656 = vmatprep.subr.bf16.mxu0 0
    %657 = vmatpush1.bf16.msra.mxu0 0
    %658 = vmatprep.subr.bf16.mxu0 0
    %659 = vmatpush1.bf16.msra.mxu0 0
    %660 = vmatprep.subr.bf16.mxu0 0
    %661 = vmatpush1.bf16.msra.mxu0 0
    %662 = vmatprep.subr.bf16.mxu0 0
    %663 = vmatpush1.bf16.msra.mxu0 0
    %664 = vmatprep.subr.bf16.mxu0 0
    %665 = vmatpush1.bf16.msra.mxu0 0
    %666 = vmatprep.subr.bf16.mxu0 0
    %667 = vmatpush1.bf16.msra.mxu0 0
    %668 = vmatprep.mubr.bf16.mxu0 0
    %669 = vmatmul.mubr.bf16.gmra.mrb[0].mxu0 %v388
    %v670 = vpop.f32.mrb[0].mxu0
    %v671 = vadd.f32 0.0, %v670
    %v672 = vpop.f32.mrb[0].mxu0
    %v673 = vadd.f32 0.0, %v672
    %v674 = vpop.f32.mrb[0].mxu0
    %v675 = vpop.f32.mrb[0].mxu0
    %676 = vdwg.mxu0
    %677 = vmatprep.subr.bf16.mxu0 %v337
    %678 = vmatpush1.bf16.msra.mxu0 %v336
    %679 = vmatprep.subr.bf16.mxu0 %v353
    %680 = vmatpush1.bf16.msra.mxu0 %v352
    %681 = vmatprep.subr.bf16.mxu0 0
    %682 = vmatpush1.bf16.msra.mxu0 0
    %683 = vmatprep.subr.bf16.mxu0 0
    %684 = vmatpush1.bf16.msra.mxu0 0
    %685 = vmatprep.subr.bf16.mxu0 0
    %686 = vmatpush1.bf16.msra.mxu0 0
    %687 = vmatprep.subr.bf16.mxu0 0
    %688 = vmatpush1.bf16.msra.mxu0 0
    %689 = vmatprep.subr.bf16.mxu0 0
    %690 = vmatpush1.bf16.msra.mxu0 0
    %691 = vmatprep.subr.bf16.mxu0 0
    %692 = vmatpush1.bf16.msra.mxu0 0
    %693 = vmatprep.subr.bf16.mxu0 0
    %694 = vmatpush1.bf16.msra.mxu0 0
    %695 = vmatprep.subr.bf16.mxu0 0
    %696 = vmatpush1.bf16.msra.mxu0 0
    %697 = vmatprep.subr.bf16.mxu0 0
    %698 = vmatpush1.bf16.msra.mxu0 0
    %699 = vmatprep.subr.bf16.mxu0 0
    %700 = vmatpush1.bf16.msra.mxu0 0
    %701 = vmatprep.subr.bf16.mxu0 0
    %702 = vmatpush1.bf16.msra.mxu0 0
    %703 = vmatprep.subr.bf16.mxu0 0
    %704 = vmatpush1.bf16.msra.mxu0 0
    %705 = vmatprep.subr.bf16.mxu0 0
    %706 = vmatpush1.bf16.msra.mxu0 0
    %707 = vmatprep.subr.bf16.mxu0 0
    %708 = vmatpush1.bf16.msra.mxu0 0
    %709 = vmatprep.mubr.bf16.mxu0 0
    %710 = vmatmul.mubr.bf16.gmra.mrb[0].mxu0 %v388
    %v711 = vpop.f32.mrb[0].mxu0
    %v712 = vadd.f32 0.0, %v711
    %v713 = vpop.f32.mrb[0].mxu0
    %v714 = vadd.f32 0.0, %v713
    %v715 = vpop.f32.mrb[0].mxu0
    %v716 = vpop.f32.mrb[0].mxu0
    %717 = vdwg.mxu0
    %v718 = vld [vmem:[#allocation4] sm:$0xff]
    %v719 = vld [vmem:[#allocation4 + $0x8] sm:$0xff]
    %v722 = vlaneseq
    %v723 = vshrl.u32 %v722, 7
    %v724 = vsub.s32 0, %v723
    %v725 = vrot.slane %v718, %v724
    %v726 = vlaneseq
    %v727 = vshrl.u32 %v726, 7
    %v728 = vsub.s32 1, %v727
    %v729 = vrot.slane %v718, %v728
    %v730 = vlaneseq
    %v731 = vshrl.u32 %v730, 7
    %v732 = vsub.s32 2, %v731
    %v733 = vrot.slane %v718, %v732
    %v734 = vlaneseq
    %v735 = vshrl.u32 %v734, 7
    %v736 = vsub.s32 3, %v735
    %v737 = vrot.slane %v718, %v736
    %v738 = vlaneseq
    %v739 = vshrl.u32 %v738, 7
    %v740 = vsub.s32 4, %v739
    %v741 = vrot.slane %v718, %v740
    %v742 = vlaneseq
    %v743 = vshrl.u32 %v742, 7
    %v744 = vsub.s32 5, %v743
    %v745 = vrot.slane %v718, %v744
    %v746 = vlaneseq
    %v747 = vshrl.u32 %v746, 7
    %v748 = vsub.s32 6, %v747
    %v749 = vrot.slane %v718, %v748
    %v750 = vlaneseq
    %v751 = vshrl.u32 %v750, 7
    %v752 = vsub.s32 7, %v751
    %v753 = vrot.slane %v718, %v752
    %v754 = vlaneseq
    %v755 = vshrl.u32 %v754, 7
    %v756 = vsub.s32 0, %v755
    %v757 = vrot.slane %v719, %v756
    %v758 = vlaneseq
    %v759 = vshrl.u32 %v758, 7
    %v760 = vsub.s32 1, %v759
    %v761 = vrot.slane %v719, %v760
    %v762 = vlaneseq
    %v763 = vshrl.u32 %v762, 7
    %v764 = vsub.s32 2, %v763
    %v765 = vrot.slane %v719, %v764
    %v766 = vlaneseq
    %v767 = vshrl.u32 %v766, 7
    %v768 = vsub.s32 3, %v767
    %v769 = vrot.slane %v719, %v768
    %v770 = vlaneseq
    %v771 = vshrl.u32 %v770, 7
    %v772 = vsub.s32 4, %v771
    %v773 = vrot.slane %v719, %v772
    %v774 = vlaneseq
    %v775 = vshrl.u32 %v774, 7
    %v776 = vsub.s32 5, %v775
    %v777 = vrot.slane %v719, %v776
    %v778 = vlaneseq
    %v779 = vshrl.u32 %v778, 7
    %v780 = vsub.s32 6, %v779
    %v781 = vrot.slane %v719, %v780
    %v782 = vlaneseq
    %v783 = vshrl.u32 %v782, 7
    %v784 = vsub.s32 7, %v783
    %v785 = vrot.slane %v719, %v784
    %v802 = vmul.f32 %v425, %v725
    %v803 = vmul.f32 %v427, %v729
    %v804 = vmul.f32 %v466, %v733
    %v805 = vmul.f32 %v468, %v737
    %v806 = vmul.f32 %v507, %v741
    %v807 = vmul.f32 %v509, %v745
    %v808 = vmul.f32 %v548, %v749
    %v809 = vmul.f32 %v550, %v753
    %v810 = vmul.f32 %v589, %v757
    %v811 = vmul.f32 %v591, %v761
    %v812 = vmul.f32 %v630, %v765
    %v813 = vmul.f32 %v632, %v769
    %v814 = vmul.f32 %v671, %v773
    %v815 = vmul.f32 %v673, %v777
    %v816 = vmul.f32 %v712, %v781
    %v817 = vmul.f32 %v714, %v785
    %v818 = vld [vmem:[#allocation6] sm:$0xff]
    %v819 = vld [vmem:[#allocation6 + $0x8] sm:$0xff]
    %v822 = vlaneseq
    %v823 = vshrl.u32 %v822, 7
    %v824 = vsub.s32 0, %v823
    %v825 = vrot.slane %v818, %v824
    %v826 = vlaneseq
    %v827 = vshrl.u32 %v826, 7
    %v828 = vsub.s32 1, %v827
    %v829 = vrot.slane %v818, %v828
    %v830 = vlaneseq
    %v831 = vshrl.u32 %v830, 7
    %v832 = vsub.s32 2, %v831
    %v833 = vrot.slane %v818, %v832
    %v834 = vlaneseq
    %v835 = vshrl.u32 %v834, 7
    %v836 = vsub.s32 3, %v835
    %v837 = vrot.slane %v818, %v836
    %v838 = vlaneseq
    %v839 = vshrl.u32 %v838, 7
    %v840 = vsub.s32 4, %v839
    %v841 = vrot.slane %v818, %v840
    %v842 = vlaneseq
    %v843 = vshrl.u32 %v842, 7
    %v844 = vsub.s32 5, %v843
    %v845 = vrot.slane %v818, %v844
    %v846 = vlaneseq
    %v847 = vshrl.u32 %v846, 7
    %v848 = vsub.s32 6, %v847
    %v849 = vrot.slane %v818, %v848
    %v850 = vlaneseq
    %v851 = vshrl.u32 %v850, 7
    %v852 = vsub.s32 7, %v851
    %v853 = vrot.slane %v818, %v852
    %v854 = vlaneseq
    %v855 = vshrl.u32 %v854, 7
    %v856 = vsub.s32 0, %v855
    %v857 = vrot.slane %v819, %v856
    %v858 = vlaneseq
    %v859 = vshrl.u32 %v858, 7
    %v860 = vsub.s32 1, %v859
    %v861 = vrot.slane %v819, %v860
    %v862 = vlaneseq
    %v863 = vshrl.u32 %v862, 7
    %v864 = vsub.s32 2, %v863
    %v865 = vrot.slane %v819, %v864
    %v866 = vlaneseq
    %v867 = vshrl.u32 %v866, 7
    %v868 = vsub.s32 3, %v867
    %v869 = vrot.slane %v819, %v868
    %v870 = vlaneseq
    %v871 = vshrl.u32 %v870, 7
    %v872 = vsub.s32 4, %v871
    %v873 = vrot.slane %v819, %v872
    %v874 = vlaneseq
    %v875 = vshrl.u32 %v874, 7
    %v876 = vsub.s32 5, %v875
    %v877 = vrot.slane %v819, %v876
    %v878 = vlaneseq
    %v879 = vshrl.u32 %v878, 7
    %v880 = vsub.s32 6, %v879
    %v881 = vrot.slane %v819, %v880
    %v882 = vlaneseq
    %v883 = vshrl.u32 %v882, 7
    %v884 = vsub.s32 7, %v883
    %v885 = vrot.slane %v819, %v884
    %v902 = vadd.f32 %v802, %v825
    %v903 = vadd.f32 %v803, %v829
    %v904 = vadd.f32 %v804, %v833
    %v905 = vadd.f32 %v805, %v837
    %v906 = vadd.f32 %v806, %v841
    %v907 = vadd.f32 %v807, %v845
    %v908 = vadd.f32 %v808, %v849
    %v909 = vadd.f32 %v809, %v853
    %v910 = vadd.f32 %v810, %v857
    %v911 = vadd.f32 %v811, %v861
    %v912 = vadd.f32 %v812, %v865
    %v913 = vadd.f32 %v813, %v869
    %v914 = vadd.f32 %v814, %v873
    %v915 = vadd.f32 %v815, %v877
    %v916 = vadd.f32 %v816, %v881
    %v917 = vadd.f32 %v817, %v885
    %v918 = vmax.f32 %v902, 0.0
    %v919 = vmax.f32 %v903, 0.0
    %v920 = vmax.f32 %v904, 0.0
    %v921 = vmax.f32 %v905, 0.0
    %v922 = vmax.f32 %v906, 0.0
    %v923 = vmax.f32 %v907, 0.0
    %v924 = vmax.f32 %v908, 0.0
    %v925 = vmax.f32 %v909, 0.0
    %v926 = vmax.f32 %v910, 0.0
    %v927 = vmax.f32 %v911, 0.0
    %v928 = vmax.f32 %v912, 0.0
    %v929 = vmax.f32 %v913, 0.0
    %v930 = vmax.f32 %v914, 0.0
    %v931 = vmax.f32 %v915, 0.0
    %v932 = vmax.f32 %v916, 0.0
    %v933 = vmax.f32 %v917, 0.0
    %v934 = vpack.c.bf16 %v918, %v918
    %v935 = vpack.c.bf16 %v919, %v919
    %v936 = vpack.c.bf16 %v920, %v920
    %v937 = vpack.c.bf16 %v921, %v921
    %v938 = vpack.c.bf16 %v922, %v922
    %v939 = vpack.c.bf16 %v923, %v923
    %v940 = vpack.c.bf16 %v924, %v924
    %v941 = vpack.c.bf16 %v925, %v925
    %v942 = vpack.c.bf16 %v926, %v926
    %v943 = vpack.c.bf16 %v927, %v927
    %v944 = vpack.c.bf16 %v928, %v928
    %v945 = vpack.c.bf16 %v929, %v929
    %v946 = vpack.c.bf16 %v930, %v930
    %v947 = vpack.c.bf16 %v931, %v931
    %v948 = vpack.c.bf16 %v932, %v932
    %v949 = vpack.c.bf16 %v933, %v933
    %v950 = vld [vmem:[#allocation7] sm:$0xff]
    %v951 = vld [vmem:[#allocation7 + $0x8] sm:$0xff]
    %v952 = vld [vmem:[#allocation7 + $0x10] sm:$0xff]
    %v953 = vld [vmem:[#allocation7 + $0x18] sm:$0xff]
    %v954 = vld [vmem:[#allocation7 + $0x20] sm:$0xff]
    %v955 = vld [vmem:[#allocation7 + $0x28] sm:$0xff]
    %v956 = vld [vmem:[#allocation7 + $0x30] sm:$0xff]
    %v957 = vld [vmem:[#allocation7 + $0x38] sm:$0xff]
    %v958 = vld [vmem:[#allocation7 + $0x40] sm:$0xff]
    %v959 = vld [vmem:[#allocation7 + $0x48] sm:$0xff]
    %v960 = vld [vmem:[#allocation7 + $0x50] sm:$0xff]
    %v961 = vld [vmem:[#allocation7 + $0x58] sm:$0xff]
    %v962 = vld [vmem:[#allocation7 + $0x60] sm:$0xff]
    %v963 = vld [vmem:[#allocation7 + $0x68] sm:$0xff]
    %v964 = vld [vmem:[#allocation7 + $0x70] sm:$0xff]
    %v965 = vld [vmem:[#allocation7 + $0x78] sm:$0xff]
    %v966 = vld [vmem:[#allocation7 + $0x80] sm:$0xff]
    %v967 = vld [vmem:[#allocation7 + $0x88] sm:$0xff]
    %v968 = vld [vmem:[#allocation7 + $0x90] sm:$0xff]
    %v969 = vld [vmem:[#allocation7 + $0x98] sm:$0xff]
    %v970 = vld [vmem:[#allocation7 + $0xa0] sm:$0xff]
    %v971 = vld [vmem:[#allocation7 + $0xa8] sm:$0xff]
    %v972 = vld [vmem:[#allocation7 + $0xb0] sm:$0xff]
    %v973 = vld [vmem:[#allocation7 + $0xb8] sm:$0xff]
    %v974 = vld [vmem:[#allocation7 + $0xc0] sm:$0xff]
    %v975 = vld [vmem:[#allocation7 + $0xc8] sm:$0xff]
    %v976 = vld [vmem:[#allocation7 + $0xd0] sm:$0xff]
    %v977 = vld [vmem:[#allocation7 + $0xd8] sm:$0xff]
    %v978 = vld [vmem:[#allocation7 + $0xe0] sm:$0xff]
    %v979 = vld [vmem:[#allocation7 + $0xe8] sm:$0xff]
    %v980 = vld [vmem:[#allocation7 + $0xf0] sm:$0xff]
    %v981 = vld [vmem:[#allocation7 + $0xf8] sm:$0xff]
    %v982 = vld [vmem:[#allocation7 + $0x100] sm:$0xff]
    %v983 = vld [vmem:[#allocation7 + $0x108] sm:$0xff]
    %v984 = vld [vmem:[#allocation7 + $0x110] sm:$0xff]
    %v985 = vld [vmem:[#allocation7 + $0x118] sm:$0xff]
    %v986 = vld [vmem:[#allocation7 + $0x120] sm:$0xff]
    %v987 = vld [vmem:[#allocation7 + $0x128] sm:$0xff]
    %v988 = vld [vmem:[#allocation7 + $0x130] sm:$0xff]
    %v989 = vld [vmem:[#allocation7 + $0x138] sm:$0xff]
    %v990 = vld [vmem:[#allocation7 + $0x140] sm:$0xff]
    %v991 = vld [vmem:[#allocation7 + $0x148] sm:$0xff]
    %v992 = vld [vmem:[#allocation7 + $0x150] sm:$0xff]
    %v993 = vld [vmem:[#allocation7 + $0x158] sm:$0xff]
    %v994 = vld [vmem:[#allocation7 + $0x160] sm:$0xff]
    %v995 = vld [vmem:[#allocation7 + $0x168] sm:$0xff]
    %v996 = vld [vmem:[#allocation7 + $0x170] sm:$0xff]
    %v997 = vld [vmem:[#allocation7 + $0x178] sm:$0xff]
    %v998 = vld [vmem:[#allocation7 + $0x180] sm:$0xff]
    %v999 = vld [vmem:[#allocation7 + $0x188] sm:$0xff]
    %v1000 = vld [vmem:[#allocation7 + $0x190] sm:$0xff]
    %v1001 = vld [vmem:[#allocation7 + $0x198] sm:$0xff]
    %v1002 = vld [vmem:[#allocation7 + $0x1a0] sm:$0xff]
    %v1003 = vld [vmem:[#allocation7 + $0x1a8] sm:$0xff]
    %v1004 = vld [vmem:[#allocation7 + $0x1b0] sm:$0xff]
    %v1005 = vld [vmem:[#allocation7 + $0x1b8] sm:$0xff]
    %v1006 = vld [vmem:[#allocation7 + $0x1c0] sm:$0xff]
    %v1007 = vld [vmem:[#allocation7 + $0x1c8] sm:$0xff]
    %v1008 = vld [vmem:[#allocation7 + $0x1d0] sm:$0xff]
    %v1009 = vld [vmem:[#allocation7 + $0x1d8] sm:$0xff]
    %v1010 = vld [vmem:[#allocation7 + $0x1e0] sm:$0xff]
    %v1011 = vld [vmem:[#allocation7 + $0x1e8] sm:$0xff]
    %v1012 = vld [vmem:[#allocation7 + $0x1f0] sm:$0xff]
    %v1013 = vld [vmem:[#allocation7 + $0x1f8] sm:$0xff]
    %v1014 = vld [vmem:[#allocation7 + $0x200] sm:$0xff]
    %v1015 = vld [vmem:[#allocation7 + $0x208] sm:$0xff]
    %v1016 = vld [vmem:[#allocation7 + $0x210] sm:$0xff]
    %v1017 = vld [vmem:[#allocation7 + $0x218] sm:$0xff]
    %v1018 = vld [vmem:[#allocation7 + $0x220] sm:$0xff]
    %v1019 = vld [vmem:[#allocation7 + $0x228] sm:$0xff]
    %v1020 = vld [vmem:[#allocation7 + $0x230] sm:$0xff]
    %v1021 = vld [vmem:[#allocation7 + $0x238] sm:$0xff]
    %v1022 = vld [vmem:[#allocation7 + $0x240] sm:$0xff]
    %v1023 = vld [vmem:[#allocation7 + $0x248] sm:$0xff]
    %v1024 = vld [vmem:[#allocation7 + $0x250] sm:$0xff]
    %v1025 = vld [vmem:[#allocation7 + $0x258] sm:$0xff]
    %v1026 = vld [vmem:[#allocation7 + $0x260] sm:$0xff]
    %v1027 = vld [vmem:[#allocation7 + $0x268] sm:$0xff]
    %v1028 = vld [vmem:[#allocation7 + $0x270] sm:$0xff]
    %v1029 = vld [vmem:[#allocation7 + $0x278] sm:$0xff]
    %v1030 = vld [vmem:[#allocation7 + $0x280] sm:$0xff]
    %v1031 = vld [vmem:[#allocation7 + $0x288] sm:$0xff]
    %v1032 = vld [vmem:[#allocation7 + $0x290] sm:$0xff]
    %v1033 = vld [vmem:[#allocation7 + $0x298] sm:$0xff]
    %v1034 = vld [vmem:[#allocation7 + $0x2a0] sm:$0xff]
    %v1035 = vld [vmem:[#allocation7 + $0x2a8] sm:$0xff]
    %v1036 = vld [vmem:[#allocation7 + $0x2b0] sm:$0xff]
    %v1037 = vld [vmem:[#allocation7 + $0x2b8] sm:$0xff]
    %v1038 = vld [vmem:[#allocation7 + $0x2c0] sm:$0xff]
    %v1039 = vld [vmem:[#allocation7 + $0x2c8] sm:$0xff]
    %v1040 = vld [vmem:[#allocation7 + $0x2d0] sm:$0xff]
    %v1041 = vld [vmem:[#allocation7 + $0x2d8] sm:$0xff]
    %v1042 = vld [vmem:[#allocation7 + $0x2e0] sm:$0xff]
    %v1043 = vld [vmem:[#allocation7 + $0x2e8] sm:$0xff]
    %v1044 = vld [vmem:[#allocation7 + $0x2f0] sm:$0xff]
    %v1045 = vld [vmem:[#allocation7 + $0x2f8] sm:$0xff]
    %v1046 = vld [vmem:[#allocation7 + $0x300] sm:$0xff]
    %v1047 = vld [vmem:[#allocation7 + $0x308] sm:$0xff]
    %v1048 = vld [vmem:[#allocation7 + $0x310] sm:$0xff]
    %v1049 = vld [vmem:[#allocation7 + $0x318] sm:$0xff]
    %v1050 = vld [vmem:[#allocation7 + $0x320] sm:$0xff]
    %v1051 = vld [vmem:[#allocation7 + $0x328] sm:$0xff]
    %v1052 = vld [vmem:[#allocation7 + $0x330] sm:$0xff]
    %v1053 = vld [vmem:[#allocation7 + $0x338] sm:$0xff]
    %v1054 = vld [vmem:[#allocation7 + $0x340] sm:$0xff]
    %v1055 = vld [vmem:[#allocation7 + $0x348] sm:$0xff]
    %v1056 = vld [vmem:[#allocation7 + $0x350] sm:$0xff]
    %v1057 = vld [vmem:[#allocation7 + $0x358] sm:$0xff]
    %v1058 = vld [vmem:[#allocation7 + $0x360] sm:$0xff]
    %v1059 = vld [vmem:[#allocation7 + $0x368] sm:$0xff]
    %v1060 = vld [vmem:[#allocation7 + $0x370] sm:$0xff]
    %v1061 = vld [vmem:[#allocation7 + $0x378] sm:$0xff]
    %v1062 = vld [vmem:[#allocation7 + $0x380] sm:$0xff]
    %v1063 = vld [vmem:[#allocation7 + $0x388] sm:$0xff]
    %v1064 = vld [vmem:[#allocation7 + $0x390] sm:$0xff]
    %v1065 = vld [vmem:[#allocation7 + $0x398] sm:$0xff]
    %v1066 = vld [vmem:[#allocation7 + $0x3a0] sm:$0xff]
    %v1067 = vld [vmem:[#allocation7 + $0x3a8] sm:$0xff]
    %v1068 = vld [vmem:[#allocation7 + $0x3b0] sm:$0xff]
    %v1069 = vld [vmem:[#allocation7 + $0x3b8] sm:$0xff]
    %v1070 = vld [vmem:[#allocation7 + $0x3c0] sm:$0xff]
    %v1071 = vld [vmem:[#allocation7 + $0x3c8] sm:$0xff]
    %v1072 = vld [vmem:[#allocation7 + $0x3d0] sm:$0xff]
    %v1073 = vld [vmem:[#allocation7 + $0x3d8] sm:$0xff]
    %v1074 = vld [vmem:[#allocation7 + $0x3e0] sm:$0xff]
    %v1075 = vld [vmem:[#allocation7 + $0x3e8] sm:$0xff]
    %v1076 = vld [vmem:[#allocation7 + $0x3f0] sm:$0xff]
    %v1077 = vld [vmem:[#allocation7 + $0x3f8] sm:$0xff]
    %v1078 = vld [vmem:[#allocation7 + $0x400] sm:$0xff]
    %v1079 = vld [vmem:[#allocation7 + $0x408] sm:$0xff]
    %v1080 = vld [vmem:[#allocation7 + $0x410] sm:$0xff]
    %v1081 = vld [vmem:[#allocation7 + $0x418] sm:$0xff]
    %v1082 = vld [vmem:[#allocation7 + $0x420] sm:$0xff]
    %v1083 = vld [vmem:[#allocation7 + $0x428] sm:$0xff]
    %v1084 = vld [vmem:[#allocation7 + $0x430] sm:$0xff]
    %v1085 = vld [vmem:[#allocation7 + $0x438] sm:$0xff]
    %v1086 = vld [vmem:[#allocation7 + $0x440] sm:$0xff]
    %v1087 = vld [vmem:[#allocation7 + $0x448] sm:$0xff]
    %v1088 = vld [vmem:[#allocation7 + $0x450] sm:$0xff]
    %v1089 = vld [vmem:[#allocation7 + $0x458] sm:$0xff]
    %v1090 = vld [vmem:[#allocation7 + $0x460] sm:$0xff]
    %v1091 = vld [vmem:[#allocation7 + $0x468] sm:$0xff]
    %v1092 = vld [vmem:[#allocation7 + $0x470] sm:$0xff]
    %v1093 = vld [vmem:[#allocation7 + $0x478] sm:$0xff]
    %v1094 = vld [vmem:[#allocation7 + $0x480] sm:$0xff]
    %v1095 = vld [vmem:[#allocation7 + $0x488] sm:$0xff]
    %v1096 = vld [vmem:[#allocation7 + $0x490] sm:$0xff]
    %v1097 = vld [vmem:[#allocation7 + $0x498] sm:$0xff]
    %v1098 = vld [vmem:[#allocation7 + $0x4a0] sm:$0xff]
    %v1099 = vld [vmem:[#allocation7 + $0x4a8] sm:$0xff]
    %v1100 = vld [vmem:[#allocation7 + $0x4b0] sm:$0xff]
    %v1101 = vld [vmem:[#allocation7 + $0x4b8] sm:$0xff]
    %v1102 = vld [vmem:[#allocation7 + $0x4c0] sm:$0xff]
    %v1103 = vld [vmem:[#allocation7 + $0x4c8] sm:$0xff]
    %v1104 = vld [vmem:[#allocation7 + $0x4d0] sm:$0xff]
    %v1105 = vld [vmem:[#allocation7 + $0x4d8] sm:$0xff]
    %v1106 = vld [vmem:[#allocation7 + $0x4e0] sm:$0xff]
    %v1107 = vld [vmem:[#allocation7 + $0x4e8] sm:$0xff]
    %v1108 = vld [vmem:[#allocation7 + $0x4f0] sm:$0xff]
    %v1109 = vld [vmem:[#allocation7 + $0x4f8] sm:$0xff]
    %v1110 = vld [vmem:[#allocation7 + $0x500] sm:$0xff]
    %v1111 = vld [vmem:[#allocation7 + $0x508] sm:$0xff]
    %v1112 = vld [vmem:[#allocation7 + $0x510] sm:$0xff]
    %v1113 = vld [vmem:[#allocation7 + $0x518] sm:$0xff]
    %v1114 = vld [vmem:[#allocation7 + $0x520] sm:$0xff]
    %v1115 = vld [vmem:[#allocation7 + $0x528] sm:$0xff]
    %v1116 = vld [vmem:[#allocation7 + $0x530] sm:$0xff]
    %v1117 = vld [vmem:[#allocation7 + $0x538] sm:$0xff]
    %v1118 = vld [vmem:[#allocation7 + $0x540] sm:$0xff]
    %v1119 = vld [vmem:[#allocation7 + $0x548] sm:$0xff]
    %v1120 = vld [vmem:[#allocation7 + $0x550] sm:$0xff]
    %v1121 = vld [vmem:[#allocation7 + $0x558] sm:$0xff]
    %v1122 = vld [vmem:[#allocation7 + $0x560] sm:$0xff]
    %v1123 = vld [vmem:[#allocation7 + $0x568] sm:$0xff]
    %v1124 = vld [vmem:[#allocation7 + $0x570] sm:$0xff]
    %v1125 = vld [vmem:[#allocation7 + $0x578] sm:$0xff]
    %v1126 = vld [vmem:[#allocation7 + $0x580] sm:$0xff]
    %v1127 = vld [vmem:[#allocation7 + $0x588] sm:$0xff]
    %v1128 = vld [vmem:[#allocation7 + $0x590] sm:$0xff]
    %v1129 = vld [vmem:[#allocation7 + $0x598] sm:$0xff]
    %v1130 = vld [vmem:[#allocation7 + $0x5a0] sm:$0xff]
    %v1131 = vld [vmem:[#allocation7 + $0x5a8] sm:$0xff]
    %v1132 = vld [vmem:[#allocation7 + $0x5b0] sm:$0xff]
    %v1133 = vld [vmem:[#allocation7 + $0x5b8] sm:$0xff]
    %v1134 = vld [vmem:[#allocation7 + $0x5c0] sm:$0xff]
    %v1135 = vld [vmem:[#allocation7 + $0x5c8] sm:$0xff]
    %v1136 = vld [vmem:[#allocation7 + $0x5d0] sm:$0xff]
    %v1137 = vld [vmem:[#allocation7 + $0x5d8] sm:$0xff]
    %v1138 = vld [vmem:[#allocation7 + $0x5e0] sm:$0xff]
    %v1139 = vld [vmem:[#allocation7 + $0x5e8] sm:$0xff]
    %v1140 = vld [vmem:[#allocation7 + $0x5f0] sm:$0xff]
    %v1141 = vld [vmem:[#allocation7 + $0x5f8] sm:$0xff]
    %v1142 = vld [vmem:[#allocation7 + $0x600] sm:$0xff]
    %v1143 = vld [vmem:[#allocation7 + $0x608] sm:$0xff]
    %v1144 = vld [vmem:[#allocation7 + $0x610] sm:$0xff]
    %v1145 = vld [vmem:[#allocation7 + $0x618] sm:$0xff]
    %v1146 = vld [vmem:[#allocation7 + $0x620] sm:$0xff]
    %v1147 = vld [vmem:[#allocation7 + $0x628] sm:$0xff]
    %v1148 = vld [vmem:[#allocation7 + $0x630] sm:$0xff]
    %v1149 = vld [vmem:[#allocation7 + $0x638] sm:$0xff]
    %v1150 = vld [vmem:[#allocation7 + $0x640] sm:$0xff]
    %v1151 = vld [vmem:[#allocation7 + $0x648] sm:$0xff]
    %v1152 = vld [vmem:[#allocation7 + $0x650] sm:$0xff]
    %v1153 = vld [vmem:[#allocation7 + $0x658] sm:$0xff]
    %v1154 = vld [vmem:[#allocation7 + $0x660] sm:$0xff]
    %v1155 = vld [vmem:[#allocation7 + $0x668] sm:$0xff]
    %v1156 = vld [vmem:[#allocation7 + $0x670] sm:$0xff]
    %v1157 = vld [vmem:[#allocation7 + $0x678] sm:$0xff]
    %v1158 = vld [vmem:[#allocation7 + $0x680] sm:$0xff]
    %v1159 = vld [vmem:[#allocation7 + $0x688] sm:$0xff]
    %v1160 = vld [vmem:[#allocation7 + $0x690] sm:$0xff]
    %v1161 = vld [vmem:[#allocation7 + $0x698] sm:$0xff]
    %v1162 = vld [vmem:[#allocation7 + $0x6a0] sm:$0xff]
    %v1163 = vld [vmem:[#allocation7 + $0x6a8] sm:$0xff]
    %v1164 = vld [vmem:[#allocation7 + $0x6b0] sm:$0xff]
    %v1165 = vld [vmem:[#allocation7 + $0x6b8] sm:$0xff]
    %v1166 = vld [vmem:[#allocation7 + $0x6c0] sm:$0xff]
    %v1167 = vld [vmem:[#allocation7 + $0x6c8] sm:$0xff]
    %v1168 = vld [vmem:[#allocation7 + $0x6d0] sm:$0xff]
    %v1169 = vld [vmem:[#allocation7 + $0x6d8] sm:$0xff]
    %v1170 = vld [vmem:[#allocation7 + $0x6e0] sm:$0xff]
    %v1171 = vld [vmem:[#allocation7 + $0x6e8] sm:$0xff]
    %v1172 = vld [vmem:[#allocation7 + $0x6f0] sm:$0xff]
    %v1173 = vld [vmem:[#allocation7 + $0x6f8] sm:$0xff]
    %v1174 = vld [vmem:[#allocation7 + $0x700] sm:$0xff]
    %v1175 = vld [vmem:[#allocation7 + $0x708] sm:$0xff]
    %v1176 = vld [vmem:[#allocation7 + $0x710] sm:$0xff]
    %v1177 = vld [vmem:[#allocation7 + $0x718] sm:$0xff]
    %v1178 = vld [vmem:[#allocation7 + $0x720] sm:$0xff]
    %v1179 = vld [vmem:[#allocation7 + $0x728] sm:$0xff]
    %v1180 = vld [vmem:[#allocation7 + $0x730] sm:$0xff]
    %v1181 = vld [vmem:[#allocation7 + $0x738] sm:$0xff]
    %v1182 = vld [vmem:[#allocation7 + $0x740] sm:$0xff]
    %v1183 = vld [vmem:[#allocation7 + $0x748] sm:$0xff]
    %v1184 = vld [vmem:[#allocation7 + $0x750] sm:$0xff]
    %v1185 = vld [vmem:[#allocation7 + $0x758] sm:$0xff]
    %v1186 = vld [vmem:[#allocation7 + $0x760] sm:$0xff]
    %v1187 = vld [vmem:[#allocation7 + $0x768] sm:$0xff]
    %v1188 = vld [vmem:[#allocation7 + $0x770] sm:$0xff]
    %v1189 = vld [vmem:[#allocation7 + $0x778] sm:$0xff]
    %v1190 = vld [vmem:[#allocation7 + $0x780] sm:$0xff]
    %v1191 = vld [vmem:[#allocation7 + $0x788] sm:$0xff]
    %v1192 = vld [vmem:[#allocation7 + $0x790] sm:$0xff]
    %v1193 = vld [vmem:[#allocation7 + $0x798] sm:$0xff]
    %v1194 = vld [vmem:[#allocation7 + $0x7a0] sm:$0xff]
    %v1195 = vld [vmem:[#allocation7 + $0x7a8] sm:$0xff]
    %v1196 = vld [vmem:[#allocation7 + $0x7b0] sm:$0xff]
    %v1197 = vld [vmem:[#allocation7 + $0x7b8] sm:$0xff]
    %v1198 = vld [vmem:[#allocation7 + $0x7c0] sm:$0xff]
    %v1199 = vld [vmem:[#allocation7 + $0x7c8] sm:$0xff]
    %v1200 = vld [vmem:[#allocation7 + $0x7d0] sm:$0xff]
    %v1201 = vld [vmem:[#allocation7 + $0x7d8] sm:$0xff]
    %v1202 = vld [vmem:[#allocation7 + $0x7e0] sm:$0xff]
    %v1203 = vld [vmem:[#allocation7 + $0x7e8] sm:$0xff]
    %v1204 = vld [vmem:[#allocation7 + $0x7f0] sm:$0xff]
    %v1205 = vld [vmem:[#allocation7 + $0x7f8] sm:$0xff]
    %v1206 = vld [vmem:[#allocation7 + $0x800] sm:$0xff]
    %v1207 = vld [vmem:[#allocation7 + $0x808] sm:$0xff]
    %v1208 = vld [vmem:[#allocation7 + $0x810] sm:$0xff]
    %v1209 = vld [vmem:[#allocation7 + $0x818] sm:$0xff]
    %v1210 = vld [vmem:[#allocation7 + $0x820] sm:$0xff]
    %v1211 = vld [vmem:[#allocation7 + $0x828] sm:$0xff]
    %v1212 = vld [vmem:[#allocation7 + $0x830] sm:$0xff]
    %v1213 = vld [vmem:[#allocation7 + $0x838] sm:$0xff]
    %v1214 = vld [vmem:[#allocation7 + $0x840] sm:$0xff]
    %v1215 = vld [vmem:[#allocation7 + $0x848] sm:$0xff]
    %v1216 = vld [vmem:[#allocation7 + $0x850] sm:$0xff]
    %v1217 = vld [vmem:[#allocation7 + $0x858] sm:$0xff]
    %v1218 = vld [vmem:[#allocation7 + $0x860] sm:$0xff]
    %v1219 = vld [vmem:[#allocation7 + $0x868] sm:$0xff]
    %v1220 = vld [vmem:[#allocation7 + $0x870] sm:$0xff]
    %v1221 = vld [vmem:[#allocation7 + $0x878] sm:$0xff]
    %v1222 = vld [vmem:[#allocation7 + $0x880] sm:$0xff]
    %v1223 = vld [vmem:[#allocation7 + $0x888] sm:$0xff]
    %v1224 = vld [vmem:[#allocation7 + $0x890] sm:$0xff]
    %v1225 = vld [vmem:[#allocation7 + $0x898] sm:$0xff]
    %v1226 = vld [vmem:[#allocation7 + $0x8a0] sm:$0xff]
    %v1227 = vld [vmem:[#allocation7 + $0x8a8] sm:$0xff]
    %v1228 = vld [vmem:[#allocation7 + $0x8b0] sm:$0xff]
    %v1229 = vld [vmem:[#allocation7 + $0x8b8] sm:$0xff]
    %v1230 = vld [vmem:[#allocation7 + $0x8c0] sm:$0xff]
    %v1231 = vld [vmem:[#allocation7 + $0x8c8] sm:$0xff]
    %v1232 = vld [vmem:[#allocation7 + $0x8d0] sm:$0xff]
    %v1233 = vld [vmem:[#allocation7 + $0x8d8] sm:$0xff]
    %v1234 = vld [vmem:[#allocation7 + $0x8e0] sm:$0xff]
    %v1235 = vld [vmem:[#allocation7 + $0x8e8] sm:$0xff]
    %v1236 = vld [vmem:[#allocation7 + $0x8f0] sm:$0xff]
    %v1237 = vld [vmem:[#allocation7 + $0x8f8] sm:$0xff]
    %v1238 = vld [vmem:[#allocation7 + $0x900] sm:$0xff]
    %v1239 = vld [vmem:[#allocation7 + $0x908] sm:$0xff]
    %v1240 = vld [vmem:[#allocation7 + $0x910] sm:$0xff]
    %v1241 = vld [vmem:[#allocation7 + $0x918] sm:$0xff]
    %v1242 = vld [vmem:[#allocation7 + $0x920] sm:$0xff]
    %v1243 = vld [vmem:[#allocation7 + $0x928] sm:$0xff]
    %v1244 = vld [vmem:[#allocation7 + $0x930] sm:$0xff]
    %v1245 = vld [vmem:[#allocation7 + $0x938] sm:$0xff]
    %v1246 = vld [vmem:[#allocation7 + $0x940] sm:$0xff]
    %v1247 = vld [vmem:[#allocation7 + $0x948] sm:$0xff]
    %v1248 = vld [vmem:[#allocation7 + $0x950] sm:$0xff]
    %v1249 = vld [vmem:[#allocation7 + $0x958] sm:$0xff]
    %v1250 = vld [vmem:[#allocation7 + $0x960] sm:$0xff]
    %v1251 = vld [vmem:[#allocation7 + $0x968] sm:$0xff]
    %v1252 = vld [vmem:[#allocation7 + $0x970] sm:$0xff]
    %v1253 = vld [vmem:[#allocation7 + $0x978] sm:$0xff]
    %v1254 = vld [vmem:[#allocation7 + $0x980] sm:$0xff]
    %v1255 = vld [vmem:[#allocation7 + $0x988] sm:$0xff]
    %v1256 = vld [vmem:[#allocation7 + $0x990] sm:$0xff]
    %v1257 = vld [vmem:[#allocation7 + $0x998] sm:$0xff]
    %v1258 = vld [vmem:[#allocation7 + $0x9a0] sm:$0xff]
    %v1259 = vld [vmem:[#allocation7 + $0x9a8] sm:$0xff]
    %v1260 = vld [vmem:[#allocation7 + $0x9b0] sm:$0xff]
    %v1261 = vld [vmem:[#allocation7 + $0x9b8] sm:$0xff]
    %v1262 = vld [vmem:[#allocation7 + $0x9c0] sm:$0xff]
    %v1263 = vld [vmem:[#allocation7 + $0x9c8] sm:$0xff]
    %v1264 = vld [vmem:[#allocation7 + $0x9d0] sm:$0xff]
    %v1265 = vld [vmem:[#allocation7 + $0x9d8] sm:$0xff]
    %v1266 = vld [vmem:[#allocation7 + $0x9e0] sm:$0xff]
    %v1267 = vld [vmem:[#allocation7 + $0x9e8] sm:$0xff]
    %v1268 = vld [vmem:[#allocation7 + $0x9f0] sm:$0xff]
    %v1269 = vld [vmem:[#allocation7 + $0x9f8] sm:$0xff]
    %v1270 = vld [vmem:[#allocation7 + $0xa00] sm:$0xff]
    %v1271 = vld [vmem:[#allocation7 + $0xa08] sm:$0xff]
    %v1272 = vld [vmem:[#allocation7 + $0xa10] sm:$0xff]
    %v1273 = vld [vmem:[#allocation7 + $0xa18] sm:$0xff]
    %v1274 = vld [vmem:[#allocation7 + $0xa20] sm:$0xff]
    %v1275 = vld [vmem:[#allocation7 + $0xa28] sm:$0xff]
    %v1276 = vld [vmem:[#allocation7 + $0xa30] sm:$0xff]
    %v1277 = vld [vmem:[#allocation7 + $0xa38] sm:$0xff]
    %v1278 = vld [vmem:[#allocation7 + $0xa40] sm:$0xff]
    %v1279 = vld [vmem:[#allocation7 + $0xa48] sm:$0xff]
    %v1280 = vld [vmem:[#allocation7 + $0xa50] sm:$0xff]
    %v1281 = vld [vmem:[#allocation7 + $0xa58] sm:$0xff]
    %v1282 = vld [vmem:[#allocation7 + $0xa60] sm:$0xff]
    %v1283 = vld [vmem:[#allocation7 + $0xa68] sm:$0xff]
    %v1284 = vld [vmem:[#allocation7 + $0xa70] sm:$0xff]
    %v1285 = vld [vmem:[#allocation7 + $0xa78] sm:$0xff]
    %v1286 = vld [vmem:[#allocation7 + $0xa80] sm:$0xff]
    %v1287 = vld [vmem:[#allocation7 + $0xa88] sm:$0xff]
    %v1288 = vld [vmem:[#allocation7 + $0xa90] sm:$0xff]
    %v1289 = vld [vmem:[#allocation7 + $0xa98] sm:$0xff]
    %v1290 = vld [vmem:[#allocation7 + $0xaa0] sm:$0xff]
    %v1291 = vld [vmem:[#allocation7 + $0xaa8] sm:$0xff]
    %v1292 = vld [vmem:[#allocation7 + $0xab0] sm:$0xff]
    %v1293 = vld [vmem:[#allocation7 + $0xab8] sm:$0xff]
    %v1294 = vld [vmem:[#allocation7 + $0xac0] sm:$0xff]
    %v1295 = vld [vmem:[#allocation7 + $0xac8] sm:$0xff]
    %v1296 = vld [vmem:[#allocation7 + $0xad0] sm:$0xff]
    %v1297 = vld [vmem:[#allocation7 + $0xad8] sm:$0xff]
    %v1298 = vld [vmem:[#allocation7 + $0xae0] sm:$0xff]
    %v1299 = vld [vmem:[#allocation7 + $0xae8] sm:$0xff]
    %v1300 = vld [vmem:[#allocation7 + $0xaf0] sm:$0xff]
    %v1301 = vld [vmem:[#allocation7 + $0xaf8] sm:$0xff]
    %v1302 = vld [vmem:[#allocation7 + $0xb00] sm:$0xff]
    %v1303 = vld [vmem:[#allocation7 + $0xb08] sm:$0xff]
    %v1304 = vld [vmem:[#allocation7 + $0xb10] sm:$0xff]
    %v1305 = vld [vmem:[#allocation7 + $0xb18] sm:$0xff]
    %v1306 = vld [vmem:[#allocation7 + $0xb20] sm:$0xff]
    %v1307 = vld [vmem:[#allocation7 + $0xb28] sm:$0xff]
    %v1308 = vld [vmem:[#allocation7 + $0xb30] sm:$0xff]
    %v1309 = vld [vmem:[#allocation7 + $0xb38] sm:$0xff]
    %v1310 = vld [vmem:[#allocation7 + $0xb40] sm:$0xff]
    %v1311 = vld [vmem:[#allocation7 + $0xb48] sm:$0xff]
    %v1312 = vld [vmem:[#allocation7 + $0xb50] sm:$0xff]
    %v1313 = vld [vmem:[#allocation7 + $0xb58] sm:$0xff]
    %v1314 = vld [vmem:[#allocation7 + $0xb60] sm:$0xff]
    %v1315 = vld [vmem:[#allocation7 + $0xb68] sm:$0xff]
    %v1316 = vld [vmem:[#allocation7 + $0xb70] sm:$0xff]
    %v1317 = vld [vmem:[#allocation7 + $0xb78] sm:$0xff]
    %v1318 = vld [vmem:[#allocation7 + $0xb80] sm:$0xff]
    %v1319 = vld [vmem:[#allocation7 + $0xb88] sm:$0xff]
    %v1320 = vld [vmem:[#allocation7 + $0xb90] sm:$0xff]
    %v1321 = vld [vmem:[#allocation7 + $0xb98] sm:$0xff]
    %v1322 = vld [vmem:[#allocation7 + $0xba0] sm:$0xff]
    %v1323 = vld [vmem:[#allocation7 + $0xba8] sm:$0xff]
    %v1324 = vld [vmem:[#allocation7 + $0xbb0] sm:$0xff]
    %v1325 = vld [vmem:[#allocation7 + $0xbb8] sm:$0xff]
    %v1326 = vld [vmem:[#allocation7 + $0xbc0] sm:$0xff]
    %v1327 = vld [vmem:[#allocation7 + $0xbc8] sm:$0xff]
    %v1328 = vld [vmem:[#allocation7 + $0xbd0] sm:$0xff]
    %v1329 = vld [vmem:[#allocation7 + $0xbd8] sm:$0xff]
    %v1330 = vld [vmem:[#allocation7 + $0xbe0] sm:$0xff]
    %v1331 = vld [vmem:[#allocation7 + $0xbe8] sm:$0xff]
    %v1332 = vld [vmem:[#allocation7 + $0xbf0] sm:$0xff]
    %v1333 = vld [vmem:[#allocation7 + $0xbf8] sm:$0xff]
    %v1334 = vld [vmem:[#allocation7 + $0xc00] sm:$0xff]
    %v1335 = vld [vmem:[#allocation7 + $0xc08] sm:$0xff]
    %v1336 = vld [vmem:[#allocation7 + $0xc10] sm:$0xff]
    %v1337 = vld [vmem:[#allocation7 + $0xc18] sm:$0xff]
    %v1338 = vld [vmem:[#allocation7 + $0xc20] sm:$0xff]
    %v1339 = vld [vmem:[#allocation7 + $0xc28] sm:$0xff]
    %v1340 = vld [vmem:[#allocation7 + $0xc30] sm:$0xff]
    %v1341 = vld [vmem:[#allocation7 + $0xc38] sm:$0xff]
    %v1342 = vld [vmem:[#allocation7 + $0xc40] sm:$0xff]
    %v1343 = vld [vmem:[#allocation7 + $0xc48] sm:$0xff]
    %v1344 = vld [vmem:[#allocation7 + $0xc50] sm:$0xff]
    %v1345 = vld [vmem:[#allocation7 + $0xc58] sm:$0xff]
    %v1346 = vld [vmem:[#allocation7 + $0xc60] sm:$0xff]
    %v1347 = vld [vmem:[#allocation7 + $0xc68] sm:$0xff]
    %v1348 = vld [vmem:[#allocation7 + $0xc70] sm:$0xff]
    %v1349 = vld [vmem:[#allocation7 + $0xc78] sm:$0xff]
    %v1350 = vld [vmem:[#allocation7 + $0xc80] sm:$0xff]
    %v1351 = vld [vmem:[#allocation7 + $0xc88] sm:$0xff]
    %v1352 = vld [vmem:[#allocation7 + $0xc90] sm:$0xff]
    %v1353 = vld [vmem:[#allocation7 + $0xc98] sm:$0xff]
    %v1354 = vld [vmem:[#allocation7 + $0xca0] sm:$0xff]
    %v1355 = vld [vmem:[#allocation7 + $0xca8] sm:$0xff]
    %v1356 = vld [vmem:[#allocation7 + $0xcb0] sm:$0xff]
    %v1357 = vld [vmem:[#allocation7 + $0xcb8] sm:$0xff]
    %v1358 = vld [vmem:[#allocation7 + $0xcc0] sm:$0xff]
    %v1359 = vld [vmem:[#allocation7 + $0xcc8] sm:$0xff]
    %v1360 = vld [vmem:[#allocation7 + $0xcd0] sm:$0xff]
    %v1361 = vld [vmem:[#allocation7 + $0xcd8] sm:$0xff]
    %v1362 = vld [vmem:[#allocation7 + $0xce0] sm:$0xff]
    %v1363 = vld [vmem:[#allocation7 + $0xce8] sm:$0xff]
    %v1364 = vld [vmem:[#allocation7 + $0xcf0] sm:$0xff]
    %v1365 = vld [vmem:[#allocation7 + $0xcf8] sm:$0xff]
    %v1366 = vld [vmem:[#allocation7 + $0xd00] sm:$0xff]
    %v1367 = vld [vmem:[#allocation7 + $0xd08] sm:$0xff]
    %v1368 = vld [vmem:[#allocation7 + $0xd10] sm:$0xff]
    %v1369 = vld [vmem:[#allocation7 + $0xd18] sm:$0xff]
    %v1370 = vld [vmem:[#allocation7 + $0xd20] sm:$0xff]
    %v1371 = vld [vmem:[#allocation7 + $0xd28] sm:$0xff]
    %v1372 = vld [vmem:[#allocation7 + $0xd30] sm:$0xff]
    %v1373 = vld [vmem:[#allocation7 + $0xd38] sm:$0xff]
    %v1374 = vld [vmem:[#allocation7 + $0xd40] sm:$0xff]
    %v1375 = vld [vmem:[#allocation7 + $0xd48] sm:$0xff]
    %v1376 = vld [vmem:[#allocation7 + $0xd50] sm:$0xff]
    %v1377 = vld [vmem:[#allocation7 + $0xd58] sm:$0xff]
    %v1378 = vld [vmem:[#allocation7 + $0xd60] sm:$0xff]
    %v1379 = vld [vmem:[#allocation7 + $0xd68] sm:$0xff]
    %v1380 = vld [vmem:[#allocation7 + $0xd70] sm:$0xff]
    %v1381 = vld [vmem:[#allocation7 + $0xd78] sm:$0xff]
    %v1382 = vld [vmem:[#allocation7 + $0xd80] sm:$0xff]
    %v1383 = vld [vmem:[#allocation7 + $0xd88] sm:$0xff]
    %v1384 = vld [vmem:[#allocation7 + $0xd90] sm:$0xff]
    %v1385 = vld [vmem:[#allocation7 + $0xd98] sm:$0xff]
    %v1386 = vld [vmem:[#allocation7 + $0xda0] sm:$0xff]
    %v1387 = vld [vmem:[#allocation7 + $0xda8] sm:$0xff]
    %v1388 = vld [vmem:[#allocation7 + $0xdb0] sm:$0xff]
    %v1389 = vld [vmem:[#allocation7 + $0xdb8] sm:$0xff]
    %v1390 = vld [vmem:[#allocation7 + $0xdc0] sm:$0xff]
    %v1391 = vld [vmem:[#allocation7 + $0xdc8] sm:$0xff]
    %v1392 = vld [vmem:[#allocation7 + $0xdd0] sm:$0xff]
    %v1393 = vld [vmem:[#allocation7 + $0xdd8] sm:$0xff]
    %v1394 = vld [vmem:[#allocation7 + $0xde0] sm:$0xff]
    %v1395 = vld [vmem:[#allocation7 + $0xde8] sm:$0xff]
    %v1396 = vld [vmem:[#allocation7 + $0xdf0] sm:$0xff]
    %v1397 = vld [vmem:[#allocation7 + $0xdf8] sm:$0xff]
    %v1398 = vld [vmem:[#allocation7 + $0xe00] sm:$0xff]
    %v1399 = vld [vmem:[#allocation7 + $0xe08] sm:$0xff]
    %v1400 = vld [vmem:[#allocation7 + $0xe10] sm:$0xff]
    %v1401 = vld [vmem:[#allocation7 + $0xe18] sm:$0xff]
    %v1402 = vld [vmem:[#allocation7 + $0xe20] sm:$0xff]
    %v1403 = vld [vmem:[#allocation7 + $0xe28] sm:$0xff]
    %v1404 = vld [vmem:[#allocation7 + $0xe30] sm:$0xff]
    %v1405 = vld [vmem:[#allocation7 + $0xe38] sm:$0xff]
    %v1406 = vld [vmem:[#allocation7 + $0xe40] sm:$0xff]
    %v1407 = vld [vmem:[#allocation7 + $0xe48] sm:$0xff]
    %v1408 = vld [vmem:[#allocation7 + $0xe50] sm:$0xff]
    %v1409 = vld [vmem:[#allocation7 + $0xe58] sm:$0xff]
    %v1410 = vld [vmem:[#allocation7 + $0xe60] sm:$0xff]
    %v1411 = vld [vmem:[#allocation7 + $0xe68] sm:$0xff]
    %v1412 = vld [vmem:[#allocation7 + $0xe70] sm:$0xff]
    %v1413 = vld [vmem:[#allocation7 + $0xe78] sm:$0xff]
    %v1414 = vld [vmem:[#allocation7 + $0xe80] sm:$0xff]
    %v1415 = vld [vmem:[#allocation7 + $0xe88] sm:$0xff]
    %v1416 = vld [vmem:[#allocation7 + $0xe90] sm:$0xff]
    %v1417 = vld [vmem:[#allocation7 + $0xe98] sm:$0xff]
    %v1418 = vld [vmem:[#allocation7 + $0xea0] sm:$0xff]
    %v1419 = vld [vmem:[#allocation7 + $0xea8] sm:$0xff]
    %v1420 = vld [vmem:[#allocation7 + $0xeb0] sm:$0xff]
    %v1421 = vld [vmem:[#allocation7 + $0xeb8] sm:$0xff]
    %v1422 = vld [vmem:[#allocation7 + $0xec0] sm:$0xff]
    %v1423 = vld [vmem:[#allocation7 + $0xec8] sm:$0xff]
    %v1424 = vld [vmem:[#allocation7 + $0xed0] sm:$0xff]
    %v1425 = vld [vmem:[#allocation7 + $0xed8] sm:$0xff]
    %v1426 = vld [vmem:[#allocation7 + $0xee0] sm:$0xff]
    %v1427 = vld [vmem:[#allocation7 + $0xee8] sm:$0xff]
    %v1428 = vld [vmem:[#allocation7 + $0xef0] sm:$0xff]
    %v1429 = vld [vmem:[#allocation7 + $0xef8] sm:$0xff]
    %v1430 = vld [vmem:[#allocation7 + $0xf00] sm:$0xff]
    %v1431 = vld [vmem:[#allocation7 + $0xf08] sm:$0xff]
    %v1432 = vld [vmem:[#allocation7 + $0xf10] sm:$0xff]
    %v1433 = vld [vmem:[#allocation7 + $0xf18] sm:$0xff]
    %v1434 = vld [vmem:[#allocation7 + $0xf20] sm:$0xff]
    %v1435 = vld [vmem:[#allocation7 + $0xf28] sm:$0xff]
    %v1436 = vld [vmem:[#allocation7 + $0xf30] sm:$0xff]
    %v1437 = vld [vmem:[#allocation7 + $0xf38] sm:$0xff]
    %v1438 = vld [vmem:[#allocation7 + $0xf40] sm:$0xff]
    %v1439 = vld [vmem:[#allocation7 + $0xf48] sm:$0xff]
    %v1440 = vld [vmem:[#allocation7 + $0xf50] sm:$0xff]
    %v1441 = vld [vmem:[#allocation7 + $0xf58] sm:$0xff]
    %v1442 = vld [vmem:[#allocation7 + $0xf60] sm:$0xff]
    %v1443 = vld [vmem:[#allocation7 + $0xf68] sm:$0xff]
    %v1444 = vld [vmem:[#allocation7 + $0xf70] sm:$0xff]
    %v1445 = vld [vmem:[#allocation7 + $0xf78] sm:$0xff]
    %v1446 = vld [vmem:[#allocation7 + $0xf80] sm:$0xff]
    %v1447 = vld [vmem:[#allocation7 + $0xf88] sm:$0xff]
    %v1448 = vld [vmem:[#allocation7 + $0xf90] sm:$0xff]
    %v1449 = vld [vmem:[#allocation7 + $0xf98] sm:$0xff]
    %v1450 = vld [vmem:[#allocation7 + $0xfa0] sm:$0xff]
    %v1451 = vld [vmem:[#allocation7 + $0xfa8] sm:$0xff]
    %v1452 = vld [vmem:[#allocation7 + $0xfb0] sm:$0xff]
    %v1453 = vld [vmem:[#allocation7 + $0xfb8] sm:$0xff]
    %v1454 = vld [vmem:[#allocation7 + $0xfc0] sm:$0xff]
    %v1455 = vld [vmem:[#allocation7 + $0xfc8] sm:$0xff]
    %v1456 = vld [vmem:[#allocation7 + $0xfd0] sm:$0xff]
    %v1457 = vld [vmem:[#allocation7 + $0xfd8] sm:$0xff]
    %v1458 = vld [vmem:[#allocation7 + $0xfe0] sm:$0xff]
    %v1459 = vld [vmem:[#allocation7 + $0xfe8] sm:$0xff]
    %v1460 = vld [vmem:[#allocation7 + $0xff0] sm:$0xff]
    %v1461 = vld [vmem:[#allocation7 + $0xff8] sm:$0xff]
    %v1974 = vunpack.c.l.b16 %v950
    %v1975 = vunpack.c.h.b16 %v950
    %v1976 = vunpack.c.l.b16 %v951
    %v1977 = vunpack.c.h.b16 %v951
    %v1978 = vunpack.c.l.b16 %v952
    %v1979 = vunpack.c.h.b16 %v952
    %v1980 = vunpack.c.l.b16 %v953
    %v1981 = vunpack.c.h.b16 %v953
    %v1982 = vunpack.c.l.b16 %v954
    %v1983 = vunpack.c.h.b16 %v954
    %v1984 = vunpack.c.l.b16 %v955
    %v1985 = vunpack.c.h.b16 %v955
    %v1986 = vunpack.c.l.b16 %v956
    %v1987 = vunpack.c.h.b16 %v956
    %v1988 = vunpack.c.l.b16 %v957
    %v1989 = vunpack.c.h.b16 %v957
    %v1990 = vunpack.c.l.b16 %v958
    %v1991 = vunpack.c.h.b16 %v958
    %v1992 = vunpack.c.l.b16 %v959
    %v1993 = vunpack.c.h.b16 %v959
    %v1994 = vunpack.c.l.b16 %v960
    %v1995 = vunpack.c.h.b16 %v960
    %v1996 = vunpack.c.l.b16 %v961
    %v1997 = vunpack.c.h.b16 %v961
    %v1998 = vunpack.c.l.b16 %v962
    %v1999 = vunpack.c.h.b16 %v962
    %v2000 = vunpack.c.l.b16 %v963
    %v2001 = vunpack.c.h.b16 %v963
    %v2002 = vunpack.c.l.b16 %v964
    %v2003 = vunpack.c.h.b16 %v964
    %v2004 = vunpack.c.l.b16 %v965
    %v2005 = vunpack.c.h.b16 %v965
    %v2006 = vunpack.c.l.b16 %v966
    %v2007 = vunpack.c.h.b16 %v966
    %v2008 = vunpack.c.l.b16 %v967
    %v2009 = vunpack.c.h.b16 %v967
    %v2010 = vunpack.c.l.b16 %v968
    %v2011 = vunpack.c.h.b16 %v968
    %v2012 = vunpack.c.l.b16 %v969
    %v2013 = vunpack.c.h.b16 %v969
    %v2014 = vunpack.c.l.b16 %v970
    %v2015 = vunpack.c.h.b16 %v970
    %v2016 = vunpack.c.l.b16 %v971
    %v2017 = vunpack.c.h.b16 %v971
    %v2018 = vunpack.c.l.b16 %v972
    %v2019 = vunpack.c.h.b16 %v972
    %v2020 = vunpack.c.l.b16 %v973
    %v2021 = vunpack.c.h.b16 %v973
    %v2022 = vunpack.c.l.b16 %v974
    %v2023 = vunpack.c.h.b16 %v974
    %v2024 = vunpack.c.l.b16 %v975
    %v2025 = vunpack.c.h.b16 %v975
    %v2026 = vunpack.c.l.b16 %v976
    %v2027 = vunpack.c.h.b16 %v976
    %v2028 = vunpack.c.l.b16 %v977
    %v2029 = vunpack.c.h.b16 %v977
    %v2030 = vunpack.c.l.b16 %v978
    %v2031 = vunpack.c.h.b16 %v978
    %v2032 = vunpack.c.l.b16 %v979
    %v2033 = vunpack.c.h.b16 %v979
    %v2034 = vunpack.c.l.b16 %v980
    %v2035 = vunpack.c.h.b16 %v980
    %v2036 = vunpack.c.l.b16 %v981
    %v2037 = vunpack.c.h.b16 %v981
    %v2038 = vunpack.c.l.b16 %v982
    %v2039 = vunpack.c.h.b16 %v982
    %v2040 = vunpack.c.l.b16 %v983
    %v2041 = vunpack.c.h.b16 %v983
    %v2042 = vunpack.c.l.b16 %v984
    %v2043 = vunpack.c.h.b16 %v984
    %v2044 = vunpack.c.l.b16 %v985
    %v2045 = vunpack.c.h.b16 %v985
    %v2046 = vunpack.c.l.b16 %v986
    %v2047 = vunpack.c.h.b16 %v986
    %v2048 = vunpack.c.l.b16 %v987
    %v2049 = vunpack.c.h.b16 %v987
    %v2050 = vunpack.c.l.b16 %v988
    %v2051 = vunpack.c.h.b16 %v988
    %v2052 = vunpack.c.l.b16 %v989
    %v2053 = vunpack.c.h.b16 %v989
    %v2054 = vunpack.c.l.b16 %v990
    %v2055 = vunpack.c.h.b16 %v990
    %v2056 = vunpack.c.l.b16 %v991
    %v2057 = vunpack.c.h.b16 %v991
    %v2058 = vunpack.c.l.b16 %v992
    %v2059 = vunpack.c.h.b16 %v992
    %v2060 = vunpack.c.l.b16 %v993
    %v2061 = vunpack.c.h.b16 %v993
    %v2062 = vunpack.c.l.b16 %v994
    %v2063 = vunpack.c.h.b16 %v994
    %v2064 = vunpack.c.l.b16 %v995
    %v2065 = vunpack.c.h.b16 %v995
    %v2066 = vunpack.c.l.b16 %v996
    %v2067 = vunpack.c.h.b16 %v996
    %v2068 = vunpack.c.l.b16 %v997
    %v2069 = vunpack.c.h.b16 %v997
    %v2070 = vunpack.c.l.b16 %v998
    %v2071 = vunpack.c.h.b16 %v998
    %v2072 = vunpack.c.l.b16 %v999
    %v2073 = vunpack.c.h.b16 %v999
    %v2074 = vunpack.c.l.b16 %v1000
    %v2075 = vunpack.c.h.b16 %v1000
    %v2076 = vunpack.c.l.b16 %v1001
    %v2077 = vunpack.c.h.b16 %v1001
    %v2078 = vunpack.c.l.b16 %v1002
    %v2079 = vunpack.c.h.b16 %v1002
    %v2080 = vunpack.c.l.b16 %v1003
    %v2081 = vunpack.c.h.b16 %v1003
    %v2082 = vunpack.c.l.b16 %v1004
    %v2083 = vunpack.c.h.b16 %v1004
    %v2084 = vunpack.c.l.b16 %v1005
    %v2085 = vunpack.c.h.b16 %v1005
    %v2086 = vunpack.c.l.b16 %v1006
    %v2087 = vunpack.c.h.b16 %v1006
    %v2088 = vunpack.c.l.b16 %v1007
    %v2089 = vunpack.c.h.b16 %v1007
    %v2090 = vunpack.c.l.b16 %v1008
    %v2091 = vunpack.c.h.b16 %v1008
    %v2092 = vunpack.c.l.b16 %v1009
    %v2093 = vunpack.c.h.b16 %v1009
    %v2094 = vunpack.c.l.b16 %v1010
    %v2095 = vunpack.c.h.b16 %v1010
    %v2096 = vunpack.c.l.b16 %v1011
    %v2097 = vunpack.c.h.b16 %v1011
    %v2098 = vunpack.c.l.b16 %v1012
    %v2099 = vunpack.c.h.b16 %v1012
    %v2100 = vunpack.c.l.b16 %v1013
    %v2101 = vunpack.c.h.b16 %v1013
    %v2102 = vunpack.c.l.b16 %v1014
    %v2103 = vunpack.c.h.b16 %v1014
    %v2104 = vunpack.c.l.b16 %v1015
    %v2105 = vunpack.c.h.b16 %v1015
    %v2106 = vunpack.c.l.b16 %v1016
    %v2107 = vunpack.c.h.b16 %v1016
    %v2108 = vunpack.c.l.b16 %v1017
    %v2109 = vunpack.c.h.b16 %v1017
    %v2110 = vunpack.c.l.b16 %v1018
    %v2111 = vunpack.c.h.b16 %v1018
    %v2112 = vunpack.c.l.b16 %v1019
    %v2113 = vunpack.c.h.b16 %v1019
    %v2114 = vunpack.c.l.b16 %v1020
    %v2115 = vunpack.c.h.b16 %v1020
    %v2116 = vunpack.c.l.b16 %v1021
    %v2117 = vunpack.c.h.b16 %v1021
    %v2118 = vunpack.c.l.b16 %v1022
    %v2119 = vunpack.c.h.b16 %v1022
    %v2120 = vunpack.c.l.b16 %v1023
    %v2121 = vunpack.c.h.b16 %v1023
    %v2122 = vunpack.c.l.b16 %v1024
    %v2123 = vunpack.c.h.b16 %v1024
    %v2124 = vunpack.c.l.b16 %v1025
    %v2125 = vunpack.c.h.b16 %v1025
    %v2126 = vunpack.c.l.b16 %v1026
    %v2127 = vunpack.c.h.b16 %v1026
    %v2128 = vunpack.c.l.b16 %v1027
    %v2129 = vunpack.c.h.b16 %v1027
    %v2130 = vunpack.c.l.b16 %v1028
    %v2131 = vunpack.c.h.b16 %v1028
    %v2132 = vunpack.c.l.b16 %v1029
    %v2133 = vunpack.c.h.b16 %v1029
    %v2134 = vunpack.c.l.b16 %v1030
    %v2135 = vunpack.c.h.b16 %v1030
    %v2136 = vunpack.c.l.b16 %v1031
    %v2137 = vunpack.c.h.b16 %v1031
    %v2138 = vunpack.c.l.b16 %v1032
    %v2139 = vunpack.c.h.b16 %v1032
    %v2140 = vunpack.c.l.b16 %v1033
    %v2141 = vunpack.c.h.b16 %v1033
    %v2142 = vunpack.c.l.b16 %v1034
    %v2143 = vunpack.c.h.b16 %v1034
    %v2144 = vunpack.c.l.b16 %v1035
    %v2145 = vunpack.c.h.b16 %v1035
    %v2146 = vunpack.c.l.b16 %v1036
    %v2147 = vunpack.c.h.b16 %v1036
    %v2148 = vunpack.c.l.b16 %v1037
    %v2149 = vunpack.c.h.b16 %v1037
    %v2150 = vunpack.c.l.b16 %v1038
    %v2151 = vunpack.c.h.b16 %v1038
    %v2152 = vunpack.c.l.b16 %v1039
    %v2153 = vunpack.c.h.b16 %v1039
    %v2154 = vunpack.c.l.b16 %v1040
    %v2155 = vunpack.c.h.b16 %v1040
    %v2156 = vunpack.c.l.b16 %v1041
    %v2157 = vunpack.c.h.b16 %v1041
    %v2158 = vunpack.c.l.b16 %v1042
    %v2159 = vunpack.c.h.b16 %v1042
    %v2160 = vunpack.c.l.b16 %v1043
    %v2161 = vunpack.c.h.b16 %v1043
    %v2162 = vunpack.c.l.b16 %v1044
    %v2163 = vunpack.c.h.b16 %v1044
    %v2164 = vunpack.c.l.b16 %v1045
    %v2165 = vunpack.c.h.b16 %v1045
    %v2166 = vunpack.c.l.b16 %v1046
    %v2167 = vunpack.c.h.b16 %v1046
    %v2168 = vunpack.c.l.b16 %v1047
    %v2169 = vunpack.c.h.b16 %v1047
    %v2170 = vunpack.c.l.b16 %v1048
    %v2171 = vunpack.c.h.b16 %v1048
    %v2172 = vunpack.c.l.b16 %v1049
    %v2173 = vunpack.c.h.b16 %v1049
    %v2174 = vunpack.c.l.b16 %v1050
    %v2175 = vunpack.c.h.b16 %v1050
    %v2176 = vunpack.c.l.b16 %v1051
    %v2177 = vunpack.c.h.b16 %v1051
    %v2178 = vunpack.c.l.b16 %v1052
    %v2179 = vunpack.c.h.b16 %v1052
    %v2180 = vunpack.c.l.b16 %v1053
    %v2181 = vunpack.c.h.b16 %v1053
    %v2182 = vunpack.c.l.b16 %v1054
    %v2183 = vunpack.c.h.b16 %v1054
    %v2184 = vunpack.c.l.b16 %v1055
    %v2185 = vunpack.c.h.b16 %v1055
    %v2186 = vunpack.c.l.b16 %v1056
    %v2187 = vunpack.c.h.b16 %v1056
    %v2188 = vunpack.c.l.b16 %v1057
    %v2189 = vunpack.c.h.b16 %v1057
    %v2190 = vunpack.c.l.b16 %v1058
    %v2191 = vunpack.c.h.b16 %v1058
    %v2192 = vunpack.c.l.b16 %v1059
    %v2193 = vunpack.c.h.b16 %v1059
    %v2194 = vunpack.c.l.b16 %v1060
    %v2195 = vunpack.c.h.b16 %v1060
    %v2196 = vunpack.c.l.b16 %v1061
    %v2197 = vunpack.c.h.b16 %v1061
    %v2198 = vunpack.c.l.b16 %v1062
    %v2199 = vunpack.c.h.b16 %v1062
    %v2200 = vunpack.c.l.b16 %v1063
    %v2201 = vunpack.c.h.b16 %v1063
    %v2202 = vunpack.c.l.b16 %v1064
    %v2203 = vunpack.c.h.b16 %v1064
    %v2204 = vunpack.c.l.b16 %v1065
    %v2205 = vunpack.c.h.b16 %v1065
    %v2206 = vunpack.c.l.b16 %v1066
    %v2207 = vunpack.c.h.b16 %v1066
    %v2208 = vunpack.c.l.b16 %v1067
    %v2209 = vunpack.c.h.b16 %v1067
    %v2210 = vunpack.c.l.b16 %v1068
    %v2211 = vunpack.c.h.b16 %v1068
    %v2212 = vunpack.c.l.b16 %v1069
    %v2213 = vunpack.c.h.b16 %v1069
    %v2214 = vunpack.c.l.b16 %v1070
    %v2215 = vunpack.c.h.b16 %v1070
    %v2216 = vunpack.c.l.b16 %v1071
    %v2217 = vunpack.c.h.b16 %v1071
    %v2218 = vunpack.c.l.b16 %v1072
    %v2219 = vunpack.c.h.b16 %v1072
    %v2220 = vunpack.c.l.b16 %v1073
    %v2221 = vunpack.c.h.b16 %v1073
    %v2222 = vunpack.c.l.b16 %v1074
    %v2223 = vunpack.c.h.b16 %v1074
    %v2224 = vunpack.c.l.b16 %v1075
    %v2225 = vunpack.c.h.b16 %v1075
    %v2226 = vunpack.c.l.b16 %v1076
    %v2227 = vunpack.c.h.b16 %v1076
    %v2228 = vunpack.c.l.b16 %v1077
    %v2229 = vunpack.c.h.b16 %v1077
    %v2230 = vunpack.c.l.b16 %v1078
    %v2231 = vunpack.c.h.b16 %v1078
    %v2232 = vunpack.c.l.b16 %v1079
    %v2233 = vunpack.c.h.b16 %v1079
    %v2234 = vunpack.c.l.b16 %v1080
    %v2235 = vunpack.c.h.b16 %v1080
    %v2236 = vunpack.c.l.b16 %v1081
    %v2237 = vunpack.c.h.b16 %v1081
    %v2238 = vunpack.c.l.b16 %v1082
    %v2239 = vunpack.c.h.b16 %v1082
    %v2240 = vunpack.c.l.b16 %v1083
    %v2241 = vunpack.c.h.b16 %v1083
    %v2242 = vunpack.c.l.b16 %v1084
    %v2243 = vunpack.c.h.b16 %v1084
    %v2244 = vunpack.c.l.b16 %v1085
    %v2245 = vunpack.c.h.b16 %v1085
    %v2246 = vunpack.c.l.b16 %v1086
    %v2247 = vunpack.c.h.b16 %v1086
    %v2248 = vunpack.c.l.b16 %v1087
    %v2249 = vunpack.c.h.b16 %v1087
    %v2250 = vunpack.c.l.b16 %v1088
    %v2251 = vunpack.c.h.b16 %v1088
    %v2252 = vunpack.c.l.b16 %v1089
    %v2253 = vunpack.c.h.b16 %v1089
    %v2254 = vunpack.c.l.b16 %v1090
    %v2255 = vunpack.c.h.b16 %v1090
    %v2256 = vunpack.c.l.b16 %v1091
    %v2257 = vunpack.c.h.b16 %v1091
    %v2258 = vunpack.c.l.b16 %v1092
    %v2259 = vunpack.c.h.b16 %v1092
    %v2260 = vunpack.c.l.b16 %v1093
    %v2261 = vunpack.c.h.b16 %v1093
    %v2262 = vunpack.c.l.b16 %v1094
    %v2263 = vunpack.c.h.b16 %v1094
    %v2264 = vunpack.c.l.b16 %v1095
    %v2265 = vunpack.c.h.b16 %v1095
    %v2266 = vunpack.c.l.b16 %v1096
    %v2267 = vunpack.c.h.b16 %v1096
    %v2268 = vunpack.c.l.b16 %v1097
    %v2269 = vunpack.c.h.b16 %v1097
    %v2270 = vunpack.c.l.b16 %v1098
    %v2271 = vunpack.c.h.b16 %v1098
    %v2272 = vunpack.c.l.b16 %v1099
    %v2273 = vunpack.c.h.b16 %v1099
    %v2274 = vunpack.c.l.b16 %v1100
    %v2275 = vunpack.c.h.b16 %v1100
    %v2276 = vunpack.c.l.b16 %v1101
    %v2277 = vunpack.c.h.b16 %v1101
    %v2278 = vunpack.c.l.b16 %v1102
    %v2279 = vunpack.c.h.b16 %v1102
    %v2280 = vunpack.c.l.b16 %v1103
    %v2281 = vunpack.c.h.b16 %v1103
    %v2282 = vunpack.c.l.b16 %v1104
    %v2283 = vunpack.c.h.b16 %v1104
    %v2284 = vunpack.c.l.b16 %v1105
    %v2285 = vunpack.c.h.b16 %v1105
    %v2286 = vunpack.c.l.b16 %v1106
    %v2287 = vunpack.c.h.b16 %v1106
    %v2288 = vunpack.c.l.b16 %v1107
    %v2289 = vunpack.c.h.b16 %v1107
    %v2290 = vunpack.c.l.b16 %v1108
    %v2291 = vunpack.c.h.b16 %v1108
    %v2292 = vunpack.c.l.b16 %v1109
    %v2293 = vunpack.c.h.b16 %v1109
    %v2294 = vunpack.c.l.b16 %v1110
    %v2295 = vunpack.c.h.b16 %v1110
    %v2296 = vunpack.c.l.b16 %v1111
    %v2297 = vunpack.c.h.b16 %v1111
    %v2298 = vunpack.c.l.b16 %v1112
    %v2299 = vunpack.c.h.b16 %v1112
    %v2300 = vunpack.c.l.b16 %v1113
    %v2301 = vunpack.c.h.b16 %v1113
    %v2302 = vunpack.c.l.b16 %v1114
    %v2303 = vunpack.c.h.b16 %v1114
    %v2304 = vunpack.c.l.b16 %v1115
    %v2305 = vunpack.c.h.b16 %v1115
    %v2306 = vunpack.c.l.b16 %v1116
    %v2307 = vunpack.c.h.b16 %v1116
    %v2308 = vunpack.c.l.b16 %v1117
    %v2309 = vunpack.c.h.b16 %v1117
    %v2310 = vunpack.c.l.b16 %v1118
    %v2311 = vunpack.c.h.b16 %v1118
    %v2312 = vunpack.c.l.b16 %v1119
    %v2313 = vunpack.c.h.b16 %v1119
    %v2314 = vunpack.c.l.b16 %v1120
    %v2315 = vunpack.c.h.b16 %v1120
    %v2316 = vunpack.c.l.b16 %v1121
    %v2317 = vunpack.c.h.b16 %v1121
    %v2318 = vunpack.c.l.b16 %v1122
    %v2319 = vunpack.c.h.b16 %v1122
    %v2320 = vunpack.c.l.b16 %v1123
    %v2321 = vunpack.c.h.b16 %v1123
    %v2322 = vunpack.c.l.b16 %v1124
    %v2323 = vunpack.c.h.b16 %v1124
    %v2324 = vunpack.c.l.b16 %v1125
    %v2325 = vunpack.c.h.b16 %v1125
    %v2326 = vunpack.c.l.b16 %v1126
    %v2327 = vunpack.c.h.b16 %v1126
    %v2328 = vunpack.c.l.b16 %v1127
    %v2329 = vunpack.c.h.b16 %v1127
    %v2330 = vunpack.c.l.b16 %v1128
    %v2331 = vunpack.c.h.b16 %v1128
    %v2332 = vunpack.c.l.b16 %v1129
    %v2333 = vunpack.c.h.b16 %v1129
    %v2334 = vunpack.c.l.b16 %v1130
    %v2335 = vunpack.c.h.b16 %v1130
    %v2336 = vunpack.c.l.b16 %v1131
    %v2337 = vunpack.c.h.b16 %v1131
    %v2338 = vunpack.c.l.b16 %v1132
    %v2339 = vunpack.c.h.b16 %v1132
    %v2340 = vunpack.c.l.b16 %v1133
    %v2341 = vunpack.c.h.b16 %v1133
    %v2342 = vunpack.c.l.b16 %v1134
    %v2343 = vunpack.c.h.b16 %v1134
    %v2344 = vunpack.c.l.b16 %v1135
    %v2345 = vunpack.c.h.b16 %v1135
    %v2346 = vunpack.c.l.b16 %v1136
    %v2347 = vunpack.c.h.b16 %v1136
    %v2348 = vunpack.c.l.b16 %v1137
    %v2349 = vunpack.c.h.b16 %v1137
    %v2350 = vunpack.c.l.b16 %v1138
    %v2351 = vunpack.c.h.b16 %v1138
    %v2352 = vunpack.c.l.b16 %v1139
    %v2353 = vunpack.c.h.b16 %v1139
    %v2354 = vunpack.c.l.b16 %v1140
    %v2355 = vunpack.c.h.b16 %v1140
    %v2356 = vunpack.c.l.b16 %v1141
    %v2357 = vunpack.c.h.b16 %v1141
    %v2358 = vunpack.c.l.b16 %v1142
    %v2359 = vunpack.c.h.b16 %v1142
    %v2360 = vunpack.c.l.b16 %v1143
    %v2361 = vunpack.c.h.b16 %v1143
    %v2362 = vunpack.c.l.b16 %v1144
    %v2363 = vunpack.c.h.b16 %v1144
    %v2364 = vunpack.c.l.b16 %v1145
    %v2365 = vunpack.c.h.b16 %v1145
    %v2366 = vunpack.c.l.b16 %v1146
    %v2367 = vunpack.c.h.b16 %v1146
    %v2368 = vunpack.c.l.b16 %v1147
    %v2369 = vunpack.c.h.b16 %v1147
    %v2370 = vunpack.c.l.b16 %v1148
    %v2371 = vunpack.c.h.b16 %v1148
    %v2372 = vunpack.c.l.b16 %v1149
    %v2373 = vunpack.c.h.b16 %v1149
    %v2374 = vunpack.c.l.b16 %v1150
    %v2375 = vunpack.c.h.b16 %v1150
    %v2376 = vunpack.c.l.b16 %v1151
    %v2377 = vunpack.c.h.b16 %v1151
    %v2378 = vunpack.c.l.b16 %v1152
    %v2379 = vunpack.c.h.b16 %v1152
    %v2380 = vunpack.c.l.b16 %v1153
    %v2381 = vunpack.c.h.b16 %v1153
    %v2382 = vunpack.c.l.b16 %v1154
    %v2383 = vunpack.c.h.b16 %v1154
    %v2384 = vunpack.c.l.b16 %v1155
    %v2385 = vunpack.c.h.b16 %v1155
    %v2386 = vunpack.c.l.b16 %v1156
    %v2387 = vunpack.c.h.b16 %v1156
    %v2388 = vunpack.c.l.b16 %v1157
    %v2389 = vunpack.c.h.b16 %v1157
    %v2390 = vunpack.c.l.b16 %v1158
    %v2391 = vunpack.c.h.b16 %v1158
    %v2392 = vunpack.c.l.b16 %v1159
    %v2393 = vunpack.c.h.b16 %v1159
    %v2394 = vunpack.c.l.b16 %v1160
    %v2395 = vunpack.c.h.b16 %v1160
    %v2396 = vunpack.c.l.b16 %v1161
    %v2397 = vunpack.c.h.b16 %v1161
    %v2398 = vunpack.c.l.b16 %v1162
    %v2399 = vunpack.c.h.b16 %v1162
    %v2400 = vunpack.c.l.b16 %v1163
    %v2401 = vunpack.c.h.b16 %v1163
    %v2402 = vunpack.c.l.b16 %v1164
    %v2403 = vunpack.c.h.b16 %v1164
    %v2404 = vunpack.c.l.b16 %v1165
    %v2405 = vunpack.c.h.b16 %v1165
    %v2406 = vunpack.c.l.b16 %v1166
    %v2407 = vunpack.c.h.b16 %v1166
    %v2408 = vunpack.c.l.b16 %v1167
    %v2409 = vunpack.c.h.b16 %v1167
    %v2410 = vunpack.c.l.b16 %v1168
    %v2411 = vunpack.c.h.b16 %v1168
    %v2412 = vunpack.c.l.b16 %v1169
    %v2413 = vunpack.c.h.b16 %v1169
    %v2414 = vunpack.c.l.b16 %v1170
    %v2415 = vunpack.c.h.b16 %v1170
    %v2416 = vunpack.c.l.b16 %v1171
    %v2417 = vunpack.c.h.b16 %v1171
    %v2418 = vunpack.c.l.b16 %v1172
    %v2419 = vunpack.c.h.b16 %v1172
    %v2420 = vunpack.c.l.b16 %v1173
    %v2421 = vunpack.c.h.b16 %v1173
    %v2422 = vunpack.c.l.b16 %v1174
    %v2423 = vunpack.c.h.b16 %v1174
    %v2424 = vunpack.c.l.b16 %v1175
    %v2425 = vunpack.c.h.b16 %v1175
    %v2426 = vunpack.c.l.b16 %v1176
    %v2427 = vunpack.c.h.b16 %v1176
    %v2428 = vunpack.c.l.b16 %v1177
    %v2429 = vunpack.c.h.b16 %v1177
    %v2430 = vunpack.c.l.b16 %v1178
    %v2431 = vunpack.c.h.b16 %v1178
    %v2432 = vunpack.c.l.b16 %v1179
    %v2433 = vunpack.c.h.b16 %v1179
    %v2434 = vunpack.c.l.b16 %v1180
    %v2435 = vunpack.c.h.b16 %v1180
    %v2436 = vunpack.c.l.b16 %v1181
    %v2437 = vunpack.c.h.b16 %v1181
    %v2438 = vunpack.c.l.b16 %v1182
    %v2439 = vunpack.c.h.b16 %v1182
    %v2440 = vunpack.c.l.b16 %v1183
    %v2441 = vunpack.c.h.b16 %v1183
    %v2442 = vunpack.c.l.b16 %v1184
    %v2443 = vunpack.c.h.b16 %v1184
    %v2444 = vunpack.c.l.b16 %v1185
    %v2445 = vunpack.c.h.b16 %v1185
    %v2446 = vunpack.c.l.b16 %v1186
    %v2447 = vunpack.c.h.b16 %v1186
    %v2448 = vunpack.c.l.b16 %v1187
    %v2449 = vunpack.c.h.b16 %v1187
    %v2450 = vunpack.c.l.b16 %v1188
    %v2451 = vunpack.c.h.b16 %v1188
    %v2452 = vunpack.c.l.b16 %v1189
    %v2453 = vunpack.c.h.b16 %v1189
    %v2454 = vunpack.c.l.b16 %v1190
    %v2455 = vunpack.c.h.b16 %v1190
    %v2456 = vunpack.c.l.b16 %v1191
    %v2457 = vunpack.c.h.b16 %v1191
    %v2458 = vunpack.c.l.b16 %v1192
    %v2459 = vunpack.c.h.b16 %v1192
    %v2460 = vunpack.c.l.b16 %v1193
    %v2461 = vunpack.c.h.b16 %v1193
    %v2462 = vunpack.c.l.b16 %v1194
    %v2463 = vunpack.c.h.b16 %v1194
    %v2464 = vunpack.c.l.b16 %v1195
    %v2465 = vunpack.c.h.b16 %v1195
    %v2466 = vunpack.c.l.b16 %v1196
    %v2467 = vunpack.c.h.b16 %v1196
    %v2468 = vunpack.c.l.b16 %v1197
    %v2469 = vunpack.c.h.b16 %v1197
    %v2470 = vunpack.c.l.b16 %v1198
    %v2471 = vunpack.c.h.b16 %v1198
    %v2472 = vunpack.c.l.b16 %v1199
    %v2473 = vunpack.c.h.b16 %v1199
    %v2474 = vunpack.c.l.b16 %v1200
    %v2475 = vunpack.c.h.b16 %v1200
    %v2476 = vunpack.c.l.b16 %v1201
    %v2477 = vunpack.c.h.b16 %v1201
    %v2478 = vunpack.c.l.b16 %v1202
    %v2479 = vunpack.c.h.b16 %v1202
    %v2480 = vunpack.c.l.b16 %v1203
    %v2481 = vunpack.c.h.b16 %v1203
    %v2482 = vunpack.c.l.b16 %v1204
    %v2483 = vunpack.c.h.b16 %v1204
    %v2484 = vunpack.c.l.b16 %v1205
    %v2485 = vunpack.c.h.b16 %v1205
    %v2486 = vunpack.c.l.b16 %v1206
    %v2487 = vunpack.c.h.b16 %v1206
    %v2488 = vunpack.c.l.b16 %v1207
    %v2489 = vunpack.c.h.b16 %v1207
    %v2490 = vunpack.c.l.b16 %v1208
    %v2491 = vunpack.c.h.b16 %v1208
    %v2492 = vunpack.c.l.b16 %v1209
    %v2493 = vunpack.c.h.b16 %v1209
    %v2494 = vunpack.c.l.b16 %v1210
    %v2495 = vunpack.c.h.b16 %v1210
    %v2496 = vunpack.c.l.b16 %v1211
    %v2497 = vunpack.c.h.b16 %v1211
    %v2498 = vunpack.c.l.b16 %v1212
    %v2499 = vunpack.c.h.b16 %v1212
    %v2500 = vunpack.c.l.b16 %v1213
    %v2501 = vunpack.c.h.b16 %v1213
    %v2502 = vunpack.c.l.b16 %v1214
    %v2503 = vunpack.c.h.b16 %v1214
    %v2504 = vunpack.c.l.b16 %v1215
    %v2505 = vunpack.c.h.b16 %v1215
    %v2506 = vunpack.c.l.b16 %v1216
    %v2507 = vunpack.c.h.b16 %v1216
    %v2508 = vunpack.c.l.b16 %v1217
    %v2509 = vunpack.c.h.b16 %v1217
    %v2510 = vunpack.c.l.b16 %v1218
    %v2511 = vunpack.c.h.b16 %v1218
    %v2512 = vunpack.c.l.b16 %v1219
    %v2513 = vunpack.c.h.b16 %v1219
    %v2514 = vunpack.c.l.b16 %v1220
    %v2515 = vunpack.c.h.b16 %v1220
    %v2516 = vunpack.c.l.b16 %v1221
    %v2517 = vunpack.c.h.b16 %v1221
    %v2518 = vunpack.c.l.b16 %v1222
    %v2519 = vunpack.c.h.b16 %v1222
    %v2520 = vunpack.c.l.b16 %v1223
    %v2521 = vunpack.c.h.b16 %v1223
    %v2522 = vunpack.c.l.b16 %v1224
    %v2523 = vunpack.c.h.b16 %v1224
    %v2524 = vunpack.c.l.b16 %v1225
    %v2525 = vunpack.c.h.b16 %v1225
    %v2526 = vunpack.c.l.b16 %v1226
    %v2527 = vunpack.c.h.b16 %v1226
    %v2528 = vunpack.c.l.b16 %v1227
    %v2529 = vunpack.c.h.b16 %v1227
    %v2530 = vunpack.c.l.b16 %v1228
    %v2531 = vunpack.c.h.b16 %v1228
    %v2532 = vunpack.c.l.b16 %v1229
    %v2533 = vunpack.c.h.b16 %v1229
    %v2534 = vunpack.c.l.b16 %v1230
    %v2535 = vunpack.c.h.b16 %v1230
    %v2536 = vunpack.c.l.b16 %v1231
    %v2537 = vunpack.c.h.b16 %v1231
    %v2538 = vunpack.c.l.b16 %v1232
    %v2539 = vunpack.c.h.b16 %v1232
    %v2540 = vunpack.c.l.b16 %v1233
    %v2541 = vunpack.c.h.b16 %v1233
    %v2542 = vunpack.c.l.b16 %v1234
    %v2543 = vunpack.c.h.b16 %v1234
    %v2544 = vunpack.c.l.b16 %v1235
    %v2545 = vunpack.c.h.b16 %v1235
    %v2546 = vunpack.c.l.b16 %v1236
    %v2547 = vunpack.c.h.b16 %v1236
    %v2548 = vunpack.c.l.b16 %v1237
    %v2549 = vunpack.c.h.b16 %v1237
    %v2550 = vunpack.c.l.b16 %v1238
    %v2551 = vunpack.c.h.b16 %v1238
    %v2552 = vunpack.c.l.b16 %v1239
    %v2553 = vunpack.c.h.b16 %v1239
    %v2554 = vunpack.c.l.b16 %v1240
    %v2555 = vunpack.c.h.b16 %v1240
    %v2556 = vunpack.c.l.b16 %v1241
    %v2557 = vunpack.c.h.b16 %v1241
    %v2558 = vunpack.c.l.b16 %v1242
    %v2559 = vunpack.c.h.b16 %v1242
    %v2560 = vunpack.c.l.b16 %v1243
    %v2561 = vunpack.c.h.b16 %v1243
    %v2562 = vunpack.c.l.b16 %v1244
    %v2563 = vunpack.c.h.b16 %v1244
    %v2564 = vunpack.c.l.b16 %v1245
    %v2565 = vunpack.c.h.b16 %v1245
    %v2566 = vunpack.c.l.b16 %v1246
    %v2567 = vunpack.c.h.b16 %v1246
    %v2568 = vunpack.c.l.b16 %v1247
    %v2569 = vunpack.c.h.b16 %v1247
    %v2570 = vunpack.c.l.b16 %v1248
    %v2571 = vunpack.c.h.b16 %v1248
    %v2572 = vunpack.c.l.b16 %v1249
    %v2573 = vunpack.c.h.b16 %v1249
    %v2574 = vunpack.c.l.b16 %v1250
    %v2575 = vunpack.c.h.b16 %v1250
    %v2576 = vunpack.c.l.b16 %v1251
    %v2577 = vunpack.c.h.b16 %v1251
    %v2578 = vunpack.c.l.b16 %v1252
    %v2579 = vunpack.c.h.b16 %v1252
    %v2580 = vunpack.c.l.b16 %v1253
    %v2581 = vunpack.c.h.b16 %v1253
    %v2582 = vunpack.c.l.b16 %v1254
    %v2583 = vunpack.c.h.b16 %v1254
    %v2584 = vunpack.c.l.b16 %v1255
    %v2585 = vunpack.c.h.b16 %v1255
    %v2586 = vunpack.c.l.b16 %v1256
    %v2587 = vunpack.c.h.b16 %v1256
    %v2588 = vunpack.c.l.b16 %v1257
    %v2589 = vunpack.c.h.b16 %v1257
    %v2590 = vunpack.c.l.b16 %v1258
    %v2591 = vunpack.c.h.b16 %v1258
    %v2592 = vunpack.c.l.b16 %v1259
    %v2593 = vunpack.c.h.b16 %v1259
    %v2594 = vunpack.c.l.b16 %v1260
    %v2595 = vunpack.c.h.b16 %v1260
    %v2596 = vunpack.c.l.b16 %v1261
    %v2597 = vunpack.c.h.b16 %v1261
    %v2598 = vunpack.c.l.b16 %v1262
    %v2599 = vunpack.c.h.b16 %v1262
    %v2600 = vunpack.c.l.b16 %v1263
    %v2601 = vunpack.c.h.b16 %v1263
    %v2602 = vunpack.c.l.b16 %v1264
    %v2603 = vunpack.c.h.b16 %v1264
    %v2604 = vunpack.c.l.b16 %v1265
    %v2605 = vunpack.c.h.b16 %v1265
    %v2606 = vunpack.c.l.b16 %v1266
    %v2607 = vunpack.c.h.b16 %v1266
    %v2608 = vunpack.c.l.b16 %v1267
    %v2609 = vunpack.c.h.b16 %v1267
    %v2610 = vunpack.c.l.b16 %v1268
    %v2611 = vunpack.c.h.b16 %v1268
    %v2612 = vunpack.c.l.b16 %v1269
    %v2613 = vunpack.c.h.b16 %v1269
    %v2614 = vunpack.c.l.b16 %v1270
    %v2615 = vunpack.c.h.b16 %v1270
    %v2616 = vunpack.c.l.b16 %v1271
    %v2617 = vunpack.c.h.b16 %v1271
    %v2618 = vunpack.c.l.b16 %v1272
    %v2619 = vunpack.c.h.b16 %v1272
    %v2620 = vunpack.c.l.b16 %v1273
    %v2621 = vunpack.c.h.b16 %v1273
    %v2622 = vunpack.c.l.b16 %v1274
    %v2623 = vunpack.c.h.b16 %v1274
    %v2624 = vunpack.c.l.b16 %v1275
    %v2625 = vunpack.c.h.b16 %v1275
    %v2626 = vunpack.c.l.b16 %v1276
    %v2627 = vunpack.c.h.b16 %v1276
    %v2628 = vunpack.c.l.b16 %v1277
    %v2629 = vunpack.c.h.b16 %v1277
    %v2630 = vunpack.c.l.b16 %v1278
    %v2631 = vunpack.c.h.b16 %v1278
    %v2632 = vunpack.c.l.b16 %v1279
    %v2633 = vunpack.c.h.b16 %v1279
    %v2634 = vunpack.c.l.b16 %v1280
    %v2635 = vunpack.c.h.b16 %v1280
    %v2636 = vunpack.c.l.b16 %v1281
    %v2637 = vunpack.c.h.b16 %v1281
    %v2638 = vunpack.c.l.b16 %v1282
    %v2639 = vunpack.c.h.b16 %v1282
    %v2640 = vunpack.c.l.b16 %v1283
    %v2641 = vunpack.c.h.b16 %v1283
    %v2642 = vunpack.c.l.b16 %v1284
    %v2643 = vunpack.c.h.b16 %v1284
    %v2644 = vunpack.c.l.b16 %v1285
    %v2645 = vunpack.c.h.b16 %v1285
    %v2646 = vunpack.c.l.b16 %v1286
    %v2647 = vunpack.c.h.b16 %v1286
    %v2648 = vunpack.c.l.b16 %v1287
    %v2649 = vunpack.c.h.b16 %v1287
    %v2650 = vunpack.c.l.b16 %v1288
    %v2651 = vunpack.c.h.b16 %v1288
    %v2652 = vunpack.c.l.b16 %v1289
    %v2653 = vunpack.c.h.b16 %v1289
    %v2654 = vunpack.c.l.b16 %v1290
    %v2655 = vunpack.c.h.b16 %v1290
    %v2656 = vunpack.c.l.b16 %v1291
    %v2657 = vunpack.c.h.b16 %v1291
    %v2658 = vunpack.c.l.b16 %v1292
    %v2659 = vunpack.c.h.b16 %v1292
    %v2660 = vunpack.c.l.b16 %v1293
    %v2661 = vunpack.c.h.b16 %v1293
    %v2662 = vunpack.c.l.b16 %v1294
    %v2663 = vunpack.c.h.b16 %v1294
    %v2664 = vunpack.c.l.b16 %v1295
    %v2665 = vunpack.c.h.b16 %v1295
    %v2666 = vunpack.c.l.b16 %v1296
    %v2667 = vunpack.c.h.b16 %v1296
    %v2668 = vunpack.c.l.b16 %v1297
    %v2669 = vunpack.c.h.b16 %v1297
    %v2670 = vunpack.c.l.b16 %v1298
    %v2671 = vunpack.c.h.b16 %v1298
    %v2672 = vunpack.c.l.b16 %v1299
    %v2673 = vunpack.c.h.b16 %v1299
    %v2674 = vunpack.c.l.b16 %v1300
    %v2675 = vunpack.c.h.b16 %v1300
    %v2676 = vunpack.c.l.b16 %v1301
    %v2677 = vunpack.c.h.b16 %v1301
    %v2678 = vunpack.c.l.b16 %v1302
    %v2679 = vunpack.c.h.b16 %v1302
    %v2680 = vunpack.c.l.b16 %v1303
    %v2681 = vunpack.c.h.b16 %v1303
    %v2682 = vunpack.c.l.b16 %v1304
    %v2683 = vunpack.c.h.b16 %v1304
    %v2684 = vunpack.c.l.b16 %v1305
    %v2685 = vunpack.c.h.b16 %v1305
    %v2686 = vunpack.c.l.b16 %v1306
    %v2687 = vunpack.c.h.b16 %v1306
    %v2688 = vunpack.c.l.b16 %v1307
    %v2689 = vunpack.c.h.b16 %v1307
    %v2690 = vunpack.c.l.b16 %v1308
    %v2691 = vunpack.c.h.b16 %v1308
    %v2692 = vunpack.c.l.b16 %v1309
    %v2693 = vunpack.c.h.b16 %v1309
    %v2694 = vunpack.c.l.b16 %v1310
    %v2695 = vunpack.c.h.b16 %v1310
    %v2696 = vunpack.c.l.b16 %v1311
    %v2697 = vunpack.c.h.b16 %v1311
    %v2698 = vunpack.c.l.b16 %v1312
    %v2699 = vunpack.c.h.b16 %v1312
    %v2700 = vunpack.c.l.b16 %v1313
    %v2701 = vunpack.c.h.b16 %v1313
    %v2702 = vunpack.c.l.b16 %v1314
    %v2703 = vunpack.c.h.b16 %v1314
    %v2704 = vunpack.c.l.b16 %v1315
    %v2705 = vunpack.c.h.b16 %v1315
    %v2706 = vunpack.c.l.b16 %v1316
    %v2707 = vunpack.c.h.b16 %v1316
    %v2708 = vunpack.c.l.b16 %v1317
    %v2709 = vunpack.c.h.b16 %v1317
    %v2710 = vunpack.c.l.b16 %v1318
    %v2711 = vunpack.c.h.b16 %v1318
    %v2712 = vunpack.c.l.b16 %v1319
    %v2713 = vunpack.c.h.b16 %v1319
    %v2714 = vunpack.c.l.b16 %v1320
    %v2715 = vunpack.c.h.b16 %v1320
    %v2716 = vunpack.c.l.b16 %v1321
    %v2717 = vunpack.c.h.b16 %v1321
    %v2718 = vunpack.c.l.b16 %v1322
    %v2719 = vunpack.c.h.b16 %v1322
    %v2720 = vunpack.c.l.b16 %v1323
    %v2721 = vunpack.c.h.b16 %v1323
    %v2722 = vunpack.c.l.b16 %v1324
    %v2723 = vunpack.c.h.b16 %v1324
    %v2724 = vunpack.c.l.b16 %v1325
    %v2725 = vunpack.c.h.b16 %v1325
    %v2726 = vunpack.c.l.b16 %v1326
    %v2727 = vunpack.c.h.b16 %v1326
    %v2728 = vunpack.c.l.b16 %v1327
    %v2729 = vunpack.c.h.b16 %v1327
    %v2730 = vunpack.c.l.b16 %v1328
    %v2731 = vunpack.c.h.b16 %v1328
    %v2732 = vunpack.c.l.b16 %v1329
    %v2733 = vunpack.c.h.b16 %v1329
    %v2734 = vunpack.c.l.b16 %v1330
    %v2735 = vunpack.c.h.b16 %v1330
    %v2736 = vunpack.c.l.b16 %v1331
    %v2737 = vunpack.c.h.b16 %v1331
    %v2738 = vunpack.c.l.b16 %v1332
    %v2739 = vunpack.c.h.b16 %v1332
    %v2740 = vunpack.c.l.b16 %v1333
    %v2741 = vunpack.c.h.b16 %v1333
    %v2742 = vunpack.c.l.b16 %v1334
    %v2743 = vunpack.c.h.b16 %v1334
    %v2744 = vunpack.c.l.b16 %v1335
    %v2745 = vunpack.c.h.b16 %v1335
    %v2746 = vunpack.c.l.b16 %v1336
    %v2747 = vunpack.c.h.b16 %v1336
    %v2748 = vunpack.c.l.b16 %v1337
    %v2749 = vunpack.c.h.b16 %v1337
    %v2750 = vunpack.c.l.b16 %v1338
    %v2751 = vunpack.c.h.b16 %v1338
    %v2752 = vunpack.c.l.b16 %v1339
    %v2753 = vunpack.c.h.b16 %v1339
    %v2754 = vunpack.c.l.b16 %v1340
    %v2755 = vunpack.c.h.b16 %v1340
    %v2756 = vunpack.c.l.b16 %v1341
    %v2757 = vunpack.c.h.b16 %v1341
    %v2758 = vunpack.c.l.b16 %v1342
    %v2759 = vunpack.c.h.b16 %v1342
    %v2760 = vunpack.c.l.b16 %v1343
    %v2761 = vunpack.c.h.b16 %v1343
    %v2762 = vunpack.c.l.b16 %v1344
    %v2763 = vunpack.c.h.b16 %v1344
    %v2764 = vunpack.c.l.b16 %v1345
    %v2765 = vunpack.c.h.b16 %v1345
    %v2766 = vunpack.c.l.b16 %v1346
    %v2767 = vunpack.c.h.b16 %v1346
    %v2768 = vunpack.c.l.b16 %v1347
    %v2769 = vunpack.c.h.b16 %v1347
    %v2770 = vunpack.c.l.b16 %v1348
    %v2771 = vunpack.c.h.b16 %v1348
    %v2772 = vunpack.c.l.b16 %v1349
    %v2773 = vunpack.c.h.b16 %v1349
    %v2774 = vunpack.c.l.b16 %v1350
    %v2775 = vunpack.c.h.b16 %v1350
    %v2776 = vunpack.c.l.b16 %v1351
    %v2777 = vunpack.c.h.b16 %v1351
    %v2778 = vunpack.c.l.b16 %v1352
    %v2779 = vunpack.c.h.b16 %v1352
    %v2780 = vunpack.c.l.b16 %v1353
    %v2781 = vunpack.c.h.b16 %v1353
    %v2782 = vunpack.c.l.b16 %v1354
    %v2783 = vunpack.c.h.b16 %v1354
    %v2784 = vunpack.c.l.b16 %v1355
    %v2785 = vunpack.c.h.b16 %v1355
    %v2786 = vunpack.c.l.b16 %v1356
    %v2787 = vunpack.c.h.b16 %v1356
    %v2788 = vunpack.c.l.b16 %v1357
    %v2789 = vunpack.c.h.b16 %v1357
    %v2790 = vunpack.c.l.b16 %v1358
    %v2791 = vunpack.c.h.b16 %v1358
    %v2792 = vunpack.c.l.b16 %v1359
    %v2793 = vunpack.c.h.b16 %v1359
    %v2794 = vunpack.c.l.b16 %v1360
    %v2795 = vunpack.c.h.b16 %v1360
    %v2796 = vunpack.c.l.b16 %v1361
    %v2797 = vunpack.c.h.b16 %v1361
    %v2798 = vunpack.c.l.b16 %v1362
    %v2799 = vunpack.c.h.b16 %v1362
    %v2800 = vunpack.c.l.b16 %v1363
    %v2801 = vunpack.c.h.b16 %v1363
    %v2802 = vunpack.c.l.b16 %v1364
    %v2803 = vunpack.c.h.b16 %v1364
    %v2804 = vunpack.c.l.b16 %v1365
    %v2805 = vunpack.c.h.b16 %v1365
    %v2806 = vunpack.c.l.b16 %v1366
    %v2807 = vunpack.c.h.b16 %v1366
    %v2808 = vunpack.c.l.b16 %v1367
    %v2809 = vunpack.c.h.b16 %v1367
    %v2810 = vunpack.c.l.b16 %v1368
    %v2811 = vunpack.c.h.b16 %v1368
    %v2812 = vunpack.c.l.b16 %v1369
    %v2813 = vunpack.c.h.b16 %v1369
    %v2814 = vunpack.c.l.b16 %v1370
    %v2815 = vunpack.c.h.b16 %v1370
    %v2816 = vunpack.c.l.b16 %v1371
    %v2817 = vunpack.c.h.b16 %v1371
    %v2818 = vunpack.c.l.b16 %v1372
    %v2819 = vunpack.c.h.b16 %v1372
    %v2820 = vunpack.c.l.b16 %v1373
    %v2821 = vunpack.c.h.b16 %v1373
    %v2822 = vunpack.c.l.b16 %v1374
    %v2823 = vunpack.c.h.b16 %v1374
    %v2824 = vunpack.c.l.b16 %v1375
    %v2825 = vunpack.c.h.b16 %v1375
    %v2826 = vunpack.c.l.b16 %v1376
    %v2827 = vunpack.c.h.b16 %v1376
    %v2828 = vunpack.c.l.b16 %v1377
    %v2829 = vunpack.c.h.b16 %v1377
    %v2830 = vunpack.c.l.b16 %v1378
    %v2831 = vunpack.c.h.b16 %v1378
    %v2832 = vunpack.c.l.b16 %v1379
    %v2833 = vunpack.c.h.b16 %v1379
    %v2834 = vunpack.c.l.b16 %v1380
    %v2835 = vunpack.c.h.b16 %v1380
    %v2836 = vunpack.c.l.b16 %v1381
    %v2837 = vunpack.c.h.b16 %v1381
    %v2838 = vunpack.c.l.b16 %v1382
    %v2839 = vunpack.c.h.b16 %v1382
    %v2840 = vunpack.c.l.b16 %v1383
    %v2841 = vunpack.c.h.b16 %v1383
    %v2842 = vunpack.c.l.b16 %v1384
    %v2843 = vunpack.c.h.b16 %v1384
    %v2844 = vunpack.c.l.b16 %v1385
    %v2845 = vunpack.c.h.b16 %v1385
    %v2846 = vunpack.c.l.b16 %v1386
    %v2847 = vunpack.c.h.b16 %v1386
    %v2848 = vunpack.c.l.b16 %v1387
    %v2849 = vunpack.c.h.b16 %v1387
    %v2850 = vunpack.c.l.b16 %v1388
    %v2851 = vunpack.c.h.b16 %v1388
    %v2852 = vunpack.c.l.b16 %v1389
    %v2853 = vunpack.c.h.b16 %v1389
    %v2854 = vunpack.c.l.b16 %v1390
    %v2855 = vunpack.c.h.b16 %v1390
    %v2856 = vunpack.c.l.b16 %v1391
    %v2857 = vunpack.c.h.b16 %v1391
    %v2858 = vunpack.c.l.b16 %v1392
    %v2859 = vunpack.c.h.b16 %v1392
    %v2860 = vunpack.c.l.b16 %v1393
    %v2861 = vunpack.c.h.b16 %v1393
    %v2862 = vunpack.c.l.b16 %v1394
    %v2863 = vunpack.c.h.b16 %v1394
    %v2864 = vunpack.c.l.b16 %v1395
    %v2865 = vunpack.c.h.b16 %v1395
    %v2866 = vunpack.c.l.b16 %v1396
    %v2867 = vunpack.c.h.b16 %v1396
    %v2868 = vunpack.c.l.b16 %v1397
    %v2869 = vunpack.c.h.b16 %v1397
    %v2870 = vunpack.c.l.b16 %v1398
    %v2871 = vunpack.c.h.b16 %v1398
    %v2872 = vunpack.c.l.b16 %v1399
    %v2873 = vunpack.c.h.b16 %v1399
    %v2874 = vunpack.c.l.b16 %v1400
    %v2875 = vunpack.c.h.b16 %v1400
    %v2876 = vunpack.c.l.b16 %v1401
    %v2877 = vunpack.c.h.b16 %v1401
    %v2878 = vunpack.c.l.b16 %v1402
    %v2879 = vunpack.c.h.b16 %v1402
    %v2880 = vunpack.c.l.b16 %v1403
    %v2881 = vunpack.c.h.b16 %v1403
    %v2882 = vunpack.c.l.b16 %v1404
    %v2883 = vunpack.c.h.b16 %v1404
    %v2884 = vunpack.c.l.b16 %v1405
    %v2885 = vunpack.c.h.b16 %v1405
    %v2886 = vunpack.c.l.b16 %v1406
    %v2887 = vunpack.c.h.b16 %v1406
    %v2888 = vunpack.c.l.b16 %v1407
    %v2889 = vunpack.c.h.b16 %v1407
    %v2890 = vunpack.c.l.b16 %v1408
    %v2891 = vunpack.c.h.b16 %v1408
    %v2892 = vunpack.c.l.b16 %v1409
    %v2893 = vunpack.c.h.b16 %v1409
    %v2894 = vunpack.c.l.b16 %v1410
    %v2895 = vunpack.c.h.b16 %v1410
    %v2896 = vunpack.c.l.b16 %v1411
    %v2897 = vunpack.c.h.b16 %v1411
    %v2898 = vunpack.c.l.b16 %v1412
    %v2899 = vunpack.c.h.b16 %v1412
    %v2900 = vunpack.c.l.b16 %v1413
    %v2901 = vunpack.c.h.b16 %v1413
    %v2902 = vunpack.c.l.b16 %v1414
    %v2903 = vunpack.c.h.b16 %v1414
    %v2904 = vunpack.c.l.b16 %v1415
    %v2905 = vunpack.c.h.b16 %v1415
    %v2906 = vunpack.c.l.b16 %v1416
    %v2907 = vunpack.c.h.b16 %v1416
    %v2908 = vunpack.c.l.b16 %v1417
    %v2909 = vunpack.c.h.b16 %v1417
    %v2910 = vunpack.c.l.b16 %v1418
    %v2911 = vunpack.c.h.b16 %v1418
    %v2912 = vunpack.c.l.b16 %v1419
    %v2913 = vunpack.c.h.b16 %v1419
    %v2914 = vunpack.c.l.b16 %v1420
    %v2915 = vunpack.c.h.b16 %v1420
    %v2916 = vunpack.c.l.b16 %v1421
    %v2917 = vunpack.c.h.b16 %v1421
    %v2918 = vunpack.c.l.b16 %v1422
    %v2919 = vunpack.c.h.b16 %v1422
    %v2920 = vunpack.c.l.b16 %v1423
    %v2921 = vunpack.c.h.b16 %v1423
    %v2922 = vunpack.c.l.b16 %v1424
    %v2923 = vunpack.c.h.b16 %v1424
    %v2924 = vunpack.c.l.b16 %v1425
    %v2925 = vunpack.c.h.b16 %v1425
    %v2926 = vunpack.c.l.b16 %v1426
    %v2927 = vunpack.c.h.b16 %v1426
    %v2928 = vunpack.c.l.b16 %v1427
    %v2929 = vunpack.c.h.b16 %v1427
    %v2930 = vunpack.c.l.b16 %v1428
    %v2931 = vunpack.c.h.b16 %v1428
    %v2932 = vunpack.c.l.b16 %v1429
    %v2933 = vunpack.c.h.b16 %v1429
    %v2934 = vunpack.c.l.b16 %v1430
    %v2935 = vunpack.c.h.b16 %v1430
    %v2936 = vunpack.c.l.b16 %v1431
    %v2937 = vunpack.c.h.b16 %v1431
    %v2938 = vunpack.c.l.b16 %v1432
    %v2939 = vunpack.c.h.b16 %v1432
    %v2940 = vunpack.c.l.b16 %v1433
    %v2941 = vunpack.c.h.b16 %v1433
    %v2942 = vunpack.c.l.b16 %v1434
    %v2943 = vunpack.c.h.b16 %v1434
    %v2944 = vunpack.c.l.b16 %v1435
    %v2945 = vunpack.c.h.b16 %v1435
    %v2946 = vunpack.c.l.b16 %v1436
    %v2947 = vunpack.c.h.b16 %v1436
    %v2948 = vunpack.c.l.b16 %v1437
    %v2949 = vunpack.c.h.b16 %v1437
    %v2950 = vunpack.c.l.b16 %v1438
    %v2951 = vunpack.c.h.b16 %v1438
    %v2952 = vunpack.c.l.b16 %v1439
    %v2953 = vunpack.c.h.b16 %v1439
    %v2954 = vunpack.c.l.b16 %v1440
    %v2955 = vunpack.c.h.b16 %v1440
    %v2956 = vunpack.c.l.b16 %v1441
    %v2957 = vunpack.c.h.b16 %v1441
    %v2958 = vunpack.c.l.b16 %v1442
    %v2959 = vunpack.c.h.b16 %v1442
    %v2960 = vunpack.c.l.b16 %v1443
    %v2961 = vunpack.c.h.b16 %v1443
    %v2962 = vunpack.c.l.b16 %v1444
    %v2963 = vunpack.c.h.b16 %v1444
    %v2964 = vunpack.c.l.b16 %v1445
    %v2965 = vunpack.c.h.b16 %v1445
    %v2966 = vunpack.c.l.b16 %v1446
    %v2967 = vunpack.c.h.b16 %v1446
    %v2968 = vunpack.c.l.b16 %v1447
    %v2969 = vunpack.c.h.b16 %v1447
    %v2970 = vunpack.c.l.b16 %v1448
    %v2971 = vunpack.c.h.b16 %v1448
    %v2972 = vunpack.c.l.b16 %v1449
    %v2973 = vunpack.c.h.b16 %v1449
    %v2974 = vunpack.c.l.b16 %v1450
    %v2975 = vunpack.c.h.b16 %v1450
    %v2976 = vunpack.c.l.b16 %v1451
    %v2977 = vunpack.c.h.b16 %v1451
    %v2978 = vunpack.c.l.b16 %v1452
    %v2979 = vunpack.c.h.b16 %v1452
    %v2980 = vunpack.c.l.b16 %v1453
    %v2981 = vunpack.c.h.b16 %v1453
    %v2982 = vunpack.c.l.b16 %v1454
    %v2983 = vunpack.c.h.b16 %v1454
    %v2984 = vunpack.c.l.b16 %v1455
    %v2985 = vunpack.c.h.b16 %v1455
    %v2986 = vunpack.c.l.b16 %v1456
    %v2987 = vunpack.c.h.b16 %v1456
    %v2988 = vunpack.c.l.b16 %v1457
    %v2989 = vunpack.c.h.b16 %v1457
    %v2990 = vunpack.c.l.b16 %v1458
    %v2991 = vunpack.c.h.b16 %v1458
    %v2992 = vunpack.c.l.b16 %v1459
    %v2993 = vunpack.c.h.b16 %v1459
    %v2994 = vunpack.c.l.b16 %v1460
    %v2995 = vunpack.c.h.b16 %v1460
    %v2996 = vunpack.c.l.b16 %v1461
    %v2997 = vunpack.c.h.b16 %v1461
    %v2998 = vpack.c.b16 %v1978, %v1974
    %v2999 = vpack.c.b16 %v1979, %v1975
    %v3000 = vpack.c.b16 %v1980, %v1976
    %v3001 = vpack.c.b16 %v1981, %v1977
    %v3002 = vpack.c.b16 %v1986, %v1982
    %v3003 = vpack.c.b16 %v1987, %v1983
    %v3004 = vpack.c.b16 %v1988, %v1984
    %v3005 = vpack.c.b16 %v1989, %v1985
    %v3006 = vpack.c.b16 %v1994, %v1990
    %v3007 = vpack.c.b16 %v1995, %v1991
    %v3008 = vpack.c.b16 %v1996, %v1992
    %v3009 = vpack.c.b16 %v1997, %v1993
    %v3010 = vpack.c.b16 %v2002, %v1998
    %v3011 = vpack.c.b16 %v2003, %v1999
    %v3012 = vpack.c.b16 %v2004, %v2000
    %v3013 = vpack.c.b16 %v2005, %v2001
    %v3014 = vpack.c.b16 %v2010, %v2006
    %v3015 = vpack.c.b16 %v2011, %v2007
    %v3016 = vpack.c.b16 %v2012, %v2008
    %v3017 = vpack.c.b16 %v2013, %v2009
    %v3018 = vpack.c.b16 %v2018, %v2014
    %v3019 = vpack.c.b16 %v2019, %v2015
    %v3020 = vpack.c.b16 %v2020, %v2016
    %v3021 = vpack.c.b16 %v2021, %v2017
    %v3022 = vpack.c.b16 %v2026, %v2022
    %v3023 = vpack.c.b16 %v2027, %v2023
    %v3024 = vpack.c.b16 %v2028, %v2024
    %v3025 = vpack.c.b16 %v2029, %v2025
    %v3026 = vpack.c.b16 %v2034, %v2030
    %v3027 = vpack.c.b16 %v2035, %v2031
    %v3028 = vpack.c.b16 %v2036, %v2032
    %v3029 = vpack.c.b16 %v2037, %v2033
    %v3030 = vpack.c.b16 %v2042, %v2038
    %v3031 = vpack.c.b16 %v2043, %v2039
    %v3032 = vpack.c.b16 %v2044, %v2040
    %v3033 = vpack.c.b16 %v2045, %v2041
    %v3034 = vpack.c.b16 %v2050, %v2046
    %v3035 = vpack.c.b16 %v2051, %v2047
    %v3036 = vpack.c.b16 %v2052, %v2048
    %v3037 = vpack.c.b16 %v2053, %v2049
    %v3038 = vpack.c.b16 %v2058, %v2054
    %v3039 = vpack.c.b16 %v2059, %v2055
    %v3040 = vpack.c.b16 %v2060, %v2056
    %v3041 = vpack.c.b16 %v2061, %v2057
    %v3042 = vpack.c.b16 %v2066, %v2062
    %v3043 = vpack.c.b16 %v2067, %v2063
    %v3044 = vpack.c.b16 %v2068, %v2064
    %v3045 = vpack.c.b16 %v2069, %v2065
    %v3046 = vpack.c.b16 %v2074, %v2070
    %v3047 = vpack.c.b16 %v2075, %v2071
    %v3048 = vpack.c.b16 %v2076, %v2072
    %v3049 = vpack.c.b16 %v2077, %v2073
    %v3050 = vpack.c.b16 %v2082, %v2078
    %v3051 = vpack.c.b16 %v2083, %v2079
    %v3052 = vpack.c.b16 %v2084, %v2080
    %v3053 = vpack.c.b16 %v2085, %v2081
    %v3054 = vpack.c.b16 %v2090, %v2086
    %v3055 = vpack.c.b16 %v2091, %v2087
    %v3056 = vpack.c.b16 %v2092, %v2088
    %v3057 = vpack.c.b16 %v2093, %v2089
    %v3058 = vpack.c.b16 %v2098, %v2094
    %v3059 = vpack.c.b16 %v2099, %v2095
    %v3060 = vpack.c.b16 %v2100, %v2096
    %v3061 = vpack.c.b16 %v2101, %v2097
    %v3062 = vpack.c.b16 %v2106, %v2102
    %v3063 = vpack.c.b16 %v2107, %v2103
    %v3064 = vpack.c.b16 %v2108, %v2104
    %v3065 = vpack.c.b16 %v2109, %v2105
    %v3066 = vpack.c.b16 %v2114, %v2110
    %v3067 = vpack.c.b16 %v2115, %v2111
    %v3068 = vpack.c.b16 %v2116, %v2112
    %v3069 = vpack.c.b16 %v2117, %v2113
    %v3070 = vpack.c.b16 %v2122, %v2118
    %v3071 = vpack.c.b16 %v2123, %v2119
    %v3072 = vpack.c.b16 %v2124, %v2120
    %v3073 = vpack.c.b16 %v2125, %v2121
    %v3074 = vpack.c.b16 %v2130, %v2126
    %v3075 = vpack.c.b16 %v2131, %v2127
    %v3076 = vpack.c.b16 %v2132, %v2128
    %v3077 = vpack.c.b16 %v2133, %v2129
    %v3078 = vpack.c.b16 %v2138, %v2134
    %v3079 = vpack.c.b16 %v2139, %v2135
    %v3080 = vpack.c.b16 %v2140, %v2136
    %v3081 = vpack.c.b16 %v2141, %v2137
    %v3082 = vpack.c.b16 %v2146, %v2142
    %v3083 = vpack.c.b16 %v2147, %v2143
    %v3084 = vpack.c.b16 %v2148, %v2144
    %v3085 = vpack.c.b16 %v2149, %v2145
    %v3086 = vpack.c.b16 %v2154, %v2150
    %v3087 = vpack.c.b16 %v2155, %v2151
    %v3088 = vpack.c.b16 %v2156, %v2152
    %v3089 = vpack.c.b16 %v2157, %v2153
    %v3090 = vpack.c.b16 %v2162, %v2158
    %v3091 = vpack.c.b16 %v2163, %v2159
    %v3092 = vpack.c.b16 %v2164, %v2160
    %v3093 = vpack.c.b16 %v2165, %v2161
    %v3094 = vpack.c.b16 %v2170, %v2166
    %v3095 = vpack.c.b16 %v2171, %v2167
    %v3096 = vpack.c.b16 %v2172, %v2168
    %v3097 = vpack.c.b16 %v2173, %v2169
    %v3098 = vpack.c.b16 %v2178, %v2174
    %v3099 = vpack.c.b16 %v2179, %v2175
    %v3100 = vpack.c.b16 %v2180, %v2176
    %v3101 = vpack.c.b16 %v2181, %v2177
    %v3102 = vpack.c.b16 %v2186, %v2182
    %v3103 = vpack.c.b16 %v2187, %v2183
    %v3104 = vpack.c.b16 %v2188, %v2184
    %v3105 = vpack.c.b16 %v2189, %v2185
    %v3106 = vpack.c.b16 %v2194, %v2190
    %v3107 = vpack.c.b16 %v2195, %v2191
    %v3108 = vpack.c.b16 %v2196, %v2192
    %v3109 = vpack.c.b16 %v2197, %v2193
    %v3110 = vpack.c.b16 %v2202, %v2198
    %v3111 = vpack.c.b16 %v2203, %v2199
    %v3112 = vpack.c.b16 %v2204, %v2200
    %v3113 = vpack.c.b16 %v2205, %v2201
    %v3114 = vpack.c.b16 %v2210, %v2206
    %v3115 = vpack.c.b16 %v2211, %v2207
    %v3116 = vpack.c.b16 %v2212, %v2208
    %v3117 = vpack.c.b16 %v2213, %v2209
    %v3118 = vpack.c.b16 %v2218, %v2214
    %v3119 = vpack.c.b16 %v2219, %v2215
    %v3120 = vpack.c.b16 %v2220, %v2216
    %v3121 = vpack.c.b16 %v2221, %v2217
    %v3122 = vpack.c.b16 %v2226, %v2222
    %v3123 = vpack.c.b16 %v2227, %v2223
    %v3124 = vpack.c.b16 %v2228, %v2224
    %v3125 = vpack.c.b16 %v2229, %v2225
    %v3126 = vpack.c.b16 %v2234, %v2230
    %v3127 = vpack.c.b16 %v2235, %v2231
    %v3128 = vpack.c.b16 %v2236, %v2232
    %v3129 = vpack.c.b16 %v2237, %v2233
    %v3130 = vpack.c.b16 %v2242, %v2238
    %v3131 = vpack.c.b16 %v2243, %v2239
    %v3132 = vpack.c.b16 %v2244, %v2240
    %v3133 = vpack.c.b16 %v2245, %v2241
    %v3134 = vpack.c.b16 %v2250, %v2246
    %v3135 = vpack.c.b16 %v2251, %v2247
    %v3136 = vpack.c.b16 %v2252, %v2248
    %v3137 = vpack.c.b16 %v2253, %v2249
    %v3138 = vpack.c.b16 %v2258, %v2254
    %v3139 = vpack.c.b16 %v2259, %v2255
    %v3140 = vpack.c.b16 %v2260, %v2256
    %v3141 = vpack.c.b16 %v2261, %v2257
    %v3142 = vpack.c.b16 %v2266, %v2262
    %v3143 = vpack.c.b16 %v2267, %v2263
    %v3144 = vpack.c.b16 %v2268, %v2264
    %v3145 = vpack.c.b16 %v2269, %v2265
    %v3146 = vpack.c.b16 %v2274, %v2270
    %v3147 = vpack.c.b16 %v2275, %v2271
    %v3148 = vpack.c.b16 %v2276, %v2272
    %v3149 = vpack.c.b16 %v2277, %v2273
    %v3150 = vpack.c.b16 %v2282, %v2278
    %v3151 = vpack.c.b16 %v2283, %v2279
    %v3152 = vpack.c.b16 %v2284, %v2280
    %v3153 = vpack.c.b16 %v2285, %v2281
    %v3154 = vpack.c.b16 %v2290, %v2286
    %v3155 = vpack.c.b16 %v2291, %v2287
    %v3156 = vpack.c.b16 %v2292, %v2288
    %v3157 = vpack.c.b16 %v2293, %v2289
    %v3158 = vpack.c.b16 %v2298, %v2294
    %v3159 = vpack.c.b16 %v2299, %v2295
    %v3160 = vpack.c.b16 %v2300, %v2296
    %v3161 = vpack.c.b16 %v2301, %v2297
    %v3162 = vpack.c.b16 %v2306, %v2302
    %v3163 = vpack.c.b16 %v2307, %v2303
    %v3164 = vpack.c.b16 %v2308, %v2304
    %v3165 = vpack.c.b16 %v2309, %v2305
    %v3166 = vpack.c.b16 %v2314, %v2310
    %v3167 = vpack.c.b16 %v2315, %v2311
    %v3168 = vpack.c.b16 %v2316, %v2312
    %v3169 = vpack.c.b16 %v2317, %v2313
    %v3170 = vpack.c.b16 %v2322, %v2318
    %v3171 = vpack.c.b16 %v2323, %v2319
    %v3172 = vpack.c.b16 %v2324, %v2320
    %v3173 = vpack.c.b16 %v2325, %v2321
    %v3174 = vpack.c.b16 %v2330, %v2326
    %v3175 = vpack.c.b16 %v2331, %v2327
    %v3176 = vpack.c.b16 %v2332, %v2328
    %v3177 = vpack.c.b16 %v2333, %v2329
    %v3178 = vpack.c.b16 %v2338, %v2334
    %v3179 = vpack.c.b16 %v2339, %v2335
    %v3180 = vpack.c.b16 %v2340, %v2336
    %v3181 = vpack.c.b16 %v2341, %v2337
    %v3182 = vpack.c.b16 %v2346, %v2342
    %v3183 = vpack.c.b16 %v2347, %v2343
    %v3184 = vpack.c.b16 %v2348, %v2344
    %v3185 = vpack.c.b16 %v2349, %v2345
    %v3186 = vpack.c.b16 %v2354, %v2350
    %v3187 = vpack.c.b16 %v2355, %v2351
    %v3188 = vpack.c.b16 %v2356, %v2352
    %v3189 = vpack.c.b16 %v2357, %v2353
    %v3190 = vpack.c.b16 %v2362, %v2358
    %v3191 = vpack.c.b16 %v2363, %v2359
    %v3192 = vpack.c.b16 %v2364, %v2360
    %v3193 = vpack.c.b16 %v2365, %v2361
    %v3194 = vpack.c.b16 %v2370, %v2366
    %v3195 = vpack.c.b16 %v2371, %v2367
    %v3196 = vpack.c.b16 %v2372, %v2368
    %v3197 = vpack.c.b16 %v2373, %v2369
    %v3198 = vpack.c.b16 %v2378, %v2374
    %v3199 = vpack.c.b16 %v2379, %v2375
    %v3200 = vpack.c.b16 %v2380, %v2376
    %v3201 = vpack.c.b16 %v2381, %v2377
    %v3202 = vpack.c.b16 %v2386, %v2382
    %v3203 = vpack.c.b16 %v2387, %v2383
    %v3204 = vpack.c.b16 %v2388, %v2384
    %v3205 = vpack.c.b16 %v2389, %v2385
    %v3206 = vpack.c.b16 %v2394, %v2390
    %v3207 = vpack.c.b16 %v2395, %v2391
    %v3208 = vpack.c.b16 %v2396, %v2392
    %v3209 = vpack.c.b16 %v2397, %v2393
    %v3210 = vpack.c.b16 %v2402, %v2398
    %v3211 = vpack.c.b16 %v2403, %v2399
    %v3212 = vpack.c.b16 %v2404, %v2400
    %v3213 = vpack.c.b16 %v2405, %v2401
    %v3214 = vpack.c.b16 %v2410, %v2406
    %v3215 = vpack.c.b16 %v2411, %v2407
    %v3216 = vpack.c.b16 %v2412, %v2408
    %v3217 = vpack.c.b16 %v2413, %v2409
    %v3218 = vpack.c.b16 %v2418, %v2414
    %v3219 = vpack.c.b16 %v2419, %v2415
    %v3220 = vpack.c.b16 %v2420, %v2416
    %v3221 = vpack.c.b16 %v2421, %v2417
    %v3222 = vpack.c.b16 %v2426, %v2422
    %v3223 = vpack.c.b16 %v2427, %v2423
    %v3224 = vpack.c.b16 %v2428, %v2424
    %v3225 = vpack.c.b16 %v2429, %v2425
    %v3226 = vpack.c.b16 %v2434, %v2430
    %v3227 = vpack.c.b16 %v2435, %v2431
    %v3228 = vpack.c.b16 %v2436, %v2432
    %v3229 = vpack.c.b16 %v2437, %v2433
    %v3230 = vpack.c.b16 %v2442, %v2438
    %v3231 = vpack.c.b16 %v2443, %v2439
    %v3232 = vpack.c.b16 %v2444, %v2440
    %v3233 = vpack.c.b16 %v2445, %v2441
    %v3234 = vpack.c.b16 %v2450, %v2446
    %v3235 = vpack.c.b16 %v2451, %v2447
    %v3236 = vpack.c.b16 %v2452, %v2448
    %v3237 = vpack.c.b16 %v2453, %v2449
    %v3238 = vpack.c.b16 %v2458, %v2454
    %v3239 = vpack.c.b16 %v2459, %v2455
    %v3240 = vpack.c.b16 %v2460, %v2456
    %v3241 = vpack.c.b16 %v2461, %v2457
    %v3242 = vpack.c.b16 %v2466, %v2462
    %v3243 = vpack.c.b16 %v2467, %v2463
    %v3244 = vpack.c.b16 %v2468, %v2464
    %v3245 = vpack.c.b16 %v2469, %v2465
    %v3246 = vpack.c.b16 %v2474, %v2470
    %v3247 = vpack.c.b16 %v2475, %v2471
    %v3248 = vpack.c.b16 %v2476, %v2472
    %v3249 = vpack.c.b16 %v2477, %v2473
    %v3250 = vpack.c.b16 %v2482, %v2478
    %v3251 = vpack.c.b16 %v2483, %v2479
    %v3252 = vpack.c.b16 %v2484, %v2480
    %v3253 = vpack.c.b16 %v2485, %v2481
    %v3254 = vpack.c.b16 %v2490, %v2486
    %v3255 = vpack.c.b16 %v2491, %v2487
    %v3256 = vpack.c.b16 %v2492, %v2488
    %v3257 = vpack.c.b16 %v2493, %v2489
    %v3258 = vpack.c.b16 %v2498, %v2494
    %v3259 = vpack.c.b16 %v2499, %v2495
    %v3260 = vpack.c.b16 %v2500, %v2496
    %v3261 = vpack.c.b16 %v2501, %v2497
    %v3262 = vpack.c.b16 %v2506, %v2502
    %v3263 = vpack.c.b16 %v2507, %v2503
    %v3264 = vpack.c.b16 %v2508, %v2504
    %v3265 = vpack.c.b16 %v2509, %v2505
    %v3266 = vpack.c.b16 %v2514, %v2510
    %v3267 = vpack.c.b16 %v2515, %v2511
    %v3268 = vpack.c.b16 %v2516, %v2512
    %v3269 = vpack.c.b16 %v2517, %v2513
    %v3270 = vpack.c.b16 %v2522, %v2518
    %v3271 = vpack.c.b16 %v2523, %v2519
    %v3272 = vpack.c.b16 %v2524, %v2520
    %v3273 = vpack.c.b16 %v2525, %v2521
    %v3274 = vpack.c.b16 %v2530, %v2526
    %v3275 = vpack.c.b16 %v2531, %v2527
    %v3276 = vpack.c.b16 %v2532, %v2528
    %v3277 = vpack.c.b16 %v2533, %v2529
    %v3278 = vpack.c.b16 %v2538, %v2534
    %v3279 = vpack.c.b16 %v2539, %v2535
    %v3280 = vpack.c.b16 %v2540, %v2536
    %v3281 = vpack.c.b16 %v2541, %v2537
    %v3282 = vpack.c.b16 %v2546, %v2542
    %v3283 = vpack.c.b16 %v2547, %v2543
    %v3284 = vpack.c.b16 %v2548, %v2544
    %v3285 = vpack.c.b16 %v2549, %v2545
    %v3286 = vpack.c.b16 %v2554, %v2550
    %v3287 = vpack.c.b16 %v2555, %v2551
    %v3288 = vpack.c.b16 %v2556, %v2552
    %v3289 = vpack.c.b16 %v2557, %v2553
    %v3290 = vpack.c.b16 %v2562, %v2558
    %v3291 = vpack.c.b16 %v2563, %v2559
    %v3292 = vpack.c.b16 %v2564, %v2560
    %v3293 = vpack.c.b16 %v2565, %v2561
    %v3294 = vpack.c.b16 %v2570, %v2566
    %v3295 = vpack.c.b16 %v2571, %v2567
    %v3296 = vpack.c.b16 %v2572, %v2568
    %v3297 = vpack.c.b16 %v2573, %v2569
    %v3298 = vpack.c.b16 %v2578, %v2574
    %v3299 = vpack.c.b16 %v2579, %v2575
    %v3300 = vpack.c.b16 %v2580, %v2576
    %v3301 = vpack.c.b16 %v2581, %v2577
    %v3302 = vpack.c.b16 %v2586, %v2582
    %v3303 = vpack.c.b16 %v2587, %v2583
    %v3304 = vpack.c.b16 %v2588, %v2584
    %v3305 = vpack.c.b16 %v2589, %v2585
    %v3306 = vpack.c.b16 %v2594, %v2590
    %v3307 = vpack.c.b16 %v2595, %v2591
    %v3308 = vpack.c.b16 %v2596, %v2592
    %v3309 = vpack.c.b16 %v2597, %v2593
    %v3310 = vpack.c.b16 %v2602, %v2598
    %v3311 = vpack.c.b16 %v2603, %v2599
    %v3312 = vpack.c.b16 %v2604, %v2600
    %v3313 = vpack.c.b16 %v2605, %v2601
    %v3314 = vpack.c.b16 %v2610, %v2606
    %v3315 = vpack.c.b16 %v2611, %v2607
    %v3316 = vpack.c.b16 %v2612, %v2608
    %v3317 = vpack.c.b16 %v2613, %v2609
    %v3318 = vpack.c.b16 %v2618, %v2614
    %v3319 = vpack.c.b16 %v2619, %v2615
    %v3320 = vpack.c.b16 %v2620, %v2616
    %v3321 = vpack.c.b16 %v2621, %v2617
    %v3322 = vpack.c.b16 %v2626, %v2622
    %v3323 = vpack.c.b16 %v2627, %v2623
    %v3324 = vpack.c.b16 %v2628, %v2624
    %v3325 = vpack.c.b16 %v2629, %v2625
    %v3326 = vpack.c.b16 %v2634, %v2630
    %v3327 = vpack.c.b16 %v2635, %v2631
    %v3328 = vpack.c.b16 %v2636, %v2632
    %v3329 = vpack.c.b16 %v2637, %v2633
    %v3330 = vpack.c.b16 %v2642, %v2638
    %v3331 = vpack.c.b16 %v2643, %v2639
    %v3332 = vpack.c.b16 %v2644, %v2640
    %v3333 = vpack.c.b16 %v2645, %v2641
    %v3334 = vpack.c.b16 %v2650, %v2646
    %v3335 = vpack.c.b16 %v2651, %v2647
    %v3336 = vpack.c.b16 %v2652, %v2648
    %v3337 = vpack.c.b16 %v2653, %v2649
    %v3338 = vpack.c.b16 %v2658, %v2654
    %v3339 = vpack.c.b16 %v2659, %v2655
    %v3340 = vpack.c.b16 %v2660, %v2656
    %v3341 = vpack.c.b16 %v2661, %v2657
    %v3342 = vpack.c.b16 %v2666, %v2662
    %v3343 = vpack.c.b16 %v2667, %v2663
    %v3344 = vpack.c.b16 %v2668, %v2664
    %v3345 = vpack.c.b16 %v2669, %v2665
    %v3346 = vpack.c.b16 %v2674, %v2670
    %v3347 = vpack.c.b16 %v2675, %v2671
    %v3348 = vpack.c.b16 %v2676, %v2672
    %v3349 = vpack.c.b16 %v2677, %v2673
    %v3350 = vpack.c.b16 %v2682, %v2678
    %v3351 = vpack.c.b16 %v2683, %v2679
    %v3352 = vpack.c.b16 %v2684, %v2680
    %v3353 = vpack.c.b16 %v2685, %v2681
    %v3354 = vpack.c.b16 %v2690, %v2686
    %v3355 = vpack.c.b16 %v2691, %v2687
    %v3356 = vpack.c.b16 %v2692, %v2688
    %v3357 = vpack.c.b16 %v2693, %v2689
    %v3358 = vpack.c.b16 %v2698, %v2694
    %v3359 = vpack.c.b16 %v2699, %v2695
    %v3360 = vpack.c.b16 %v2700, %v2696
    %v3361 = vpack.c.b16 %v2701, %v2697
    %v3362 = vpack.c.b16 %v2706, %v2702
    %v3363 = vpack.c.b16 %v2707, %v2703
    %v3364 = vpack.c.b16 %v2708, %v2704
    %v3365 = vpack.c.b16 %v2709, %v2705
    %v3366 = vpack.c.b16 %v2714, %v2710
    %v3367 = vpack.c.b16 %v2715, %v2711
    %v3368 = vpack.c.b16 %v2716, %v2712
    %v3369 = vpack.c.b16 %v2717, %v2713
    %v3370 = vpack.c.b16 %v2722, %v2718
    %v3371 = vpack.c.b16 %v2723, %v2719
    %v3372 = vpack.c.b16 %v2724, %v2720
    %v3373 = vpack.c.b16 %v2725, %v2721
    %v3374 = vpack.c.b16 %v2730, %v2726
    %v3375 = vpack.c.b16 %v2731, %v2727
    %v3376 = vpack.c.b16 %v2732, %v2728
    %v3377 = vpack.c.b16 %v2733, %v2729
    %v3378 = vpack.c.b16 %v2738, %v2734
    %v3379 = vpack.c.b16 %v2739, %v2735
    %v3380 = vpack.c.b16 %v2740, %v2736
    %v3381 = vpack.c.b16 %v2741, %v2737
    %v3382 = vpack.c.b16 %v2746, %v2742
    %v3383 = vpack.c.b16 %v2747, %v2743
    %v3384 = vpack.c.b16 %v2748, %v2744
    %v3385 = vpack.c.b16 %v2749, %v2745
    %v3386 = vpack.c.b16 %v2754, %v2750
    %v3387 = vpack.c.b16 %v2755, %v2751
    %v3388 = vpack.c.b16 %v2756, %v2752
    %v3389 = vpack.c.b16 %v2757, %v2753
    %v3390 = vpack.c.b16 %v2762, %v2758
    %v3391 = vpack.c.b16 %v2763, %v2759
    %v3392 = vpack.c.b16 %v2764, %v2760
    %v3393 = vpack.c.b16 %v2765, %v2761
    %v3394 = vpack.c.b16 %v2770, %v2766
    %v3395 = vpack.c.b16 %v2771, %v2767
    %v3396 = vpack.c.b16 %v2772, %v2768
    %v3397 = vpack.c.b16 %v2773, %v2769
    %v3398 = vpack.c.b16 %v2778, %v2774
    %v3399 = vpack.c.b16 %v2779, %v2775
    %v3400 = vpack.c.b16 %v2780, %v2776
    %v3401 = vpack.c.b16 %v2781, %v2777
    %v3402 = vpack.c.b16 %v2786, %v2782
    %v3403 = vpack.c.b16 %v2787, %v2783
    %v3404 = vpack.c.b16 %v2788, %v2784
    %v3405 = vpack.c.b16 %v2789, %v2785
    %v3406 = vpack.c.b16 %v2794, %v2790
    %v3407 = vpack.c.b16 %v2795, %v2791
    %v3408 = vpack.c.b16 %v2796, %v2792
    %v3409 = vpack.c.b16 %v2797, %v2793
    %v3410 = vpack.c.b16 %v2802, %v2798
    %v3411 = vpack.c.b16 %v2803, %v2799
    %v3412 = vpack.c.b16 %v2804, %v2800
    %v3413 = vpack.c.b16 %v2805, %v2801
    %v3414 = vpack.c.b16 %v2810, %v2806
    %v3415 = vpack.c.b16 %v2811, %v2807
    %v3416 = vpack.c.b16 %v2812, %v2808
    %v3417 = vpack.c.b16 %v2813, %v2809
    %v3418 = vpack.c.b16 %v2818, %v2814
    %v3419 = vpack.c.b16 %v2819, %v2815
    %v3420 = vpack.c.b16 %v2820, %v2816
    %v3421 = vpack.c.b16 %v2821, %v2817
    %v3422 = vpack.c.b16 %v2826, %v2822
    %v3423 = vpack.c.b16 %v2827, %v2823
    %v3424 = vpack.c.b16 %v2828, %v2824
    %v3425 = vpack.c.b16 %v2829, %v2825
    %v3426 = vpack.c.b16 %v2834, %v2830
    %v3427 = vpack.c.b16 %v2835, %v2831
    %v3428 = vpack.c.b16 %v2836, %v2832
    %v3429 = vpack.c.b16 %v2837, %v2833
    %v3430 = vpack.c.b16 %v2842, %v2838
    %v3431 = vpack.c.b16 %v2843, %v2839
    %v3432 = vpack.c.b16 %v2844, %v2840
    %v3433 = vpack.c.b16 %v2845, %v2841
    %v3434 = vpack.c.b16 %v2850, %v2846
    %v3435 = vpack.c.b16 %v2851, %v2847
    %v3436 = vpack.c.b16 %v2852, %v2848
    %v3437 = vpack.c.b16 %v2853, %v2849
    %v3438 = vpack.c.b16 %v2858, %v2854
    %v3439 = vpack.c.b16 %v2859, %v2855
    %v3440 = vpack.c.b16 %v2860, %v2856
    %v3441 = vpack.c.b16 %v2861, %v2857
    %v3442 = vpack.c.b16 %v2866, %v2862
    %v3443 = vpack.c.b16 %v2867, %v2863
    %v3444 = vpack.c.b16 %v2868, %v2864
    %v3445 = vpack.c.b16 %v2869, %v2865
    %v3446 = vpack.c.b16 %v2874, %v2870
    %v3447 = vpack.c.b16 %v2875, %v2871
    %v3448 = vpack.c.b16 %v2876, %v2872
    %v3449 = vpack.c.b16 %v2877, %v2873
    %v3450 = vpack.c.b16 %v2882, %v2878
    %v3451 = vpack.c.b16 %v2883, %v2879
    %v3452 = vpack.c.b16 %v2884, %v2880
    %v3453 = vpack.c.b16 %v2885, %v2881
    %v3454 = vpack.c.b16 %v2890, %v2886
    %v3455 = vpack.c.b16 %v2891, %v2887
    %v3456 = vpack.c.b16 %v2892, %v2888
    %v3457 = vpack.c.b16 %v2893, %v2889
    %v3458 = vpack.c.b16 %v2898, %v2894
    %v3459 = vpack.c.b16 %v2899, %v2895
    %v3460 = vpack.c.b16 %v2900, %v2896
    %v3461 = vpack.c.b16 %v2901, %v2897
    %v3462 = vpack.c.b16 %v2906, %v2902
    %v3463 = vpack.c.b16 %v2907, %v2903
    %v3464 = vpack.c.b16 %v2908, %v2904
    %v3465 = vpack.c.b16 %v2909, %v2905
    %v3466 = vpack.c.b16 %v2914, %v2910
    %v3467 = vpack.c.b16 %v2915, %v2911
    %v3468 = vpack.c.b16 %v2916, %v2912
    %v3469 = vpack.c.b16 %v2917, %v2913
    %v3470 = vpack.c.b16 %v2922, %v2918
    %v3471 = vpack.c.b16 %v2923, %v2919
    %v3472 = vpack.c.b16 %v2924, %v2920
    %v3473 = vpack.c.b16 %v2925, %v2921
    %v3474 = vpack.c.b16 %v2930, %v2926
    %v3475 = vpack.c.b16 %v2931, %v2927
    %v3476 = vpack.c.b16 %v2932, %v2928
    %v3477 = vpack.c.b16 %v2933, %v2929
    %v3478 = vpack.c.b16 %v2938, %v2934
    %v3479 = vpack.c.b16 %v2939, %v2935
    %v3480 = vpack.c.b16 %v2940, %v2936
    %v3481 = vpack.c.b16 %v2941, %v2937
    %v3482 = vpack.c.b16 %v2946, %v2942
    %v3483 = vpack.c.b16 %v2947, %v2943
    %v3484 = vpack.c.b16 %v2948, %v2944
    %v3485 = vpack.c.b16 %v2949, %v2945
    %v3486 = vpack.c.b16 %v2954, %v2950
    %v3487 = vpack.c.b16 %v2955, %v2951
    %v3488 = vpack.c.b16 %v2956, %v2952
    %v3489 = vpack.c.b16 %v2957, %v2953
    %v3490 = vpack.c.b16 %v2962, %v2958
    %v3491 = vpack.c.b16 %v2963, %v2959
    %v3492 = vpack.c.b16 %v2964, %v2960
    %v3493 = vpack.c.b16 %v2965, %v2961
    %v3494 = vpack.c.b16 %v2970, %v2966
    %v3495 = vpack.c.b16 %v2971, %v2967
    %v3496 = vpack.c.b16 %v2972, %v2968
    %v3497 = vpack.c.b16 %v2973, %v2969
    %v3498 = vpack.c.b16 %v2978, %v2974
    %v3499 = vpack.c.b16 %v2979, %v2975
    %v3500 = vpack.c.b16 %v2980, %v2976
    %v3501 = vpack.c.b16 %v2981, %v2977
    %v3502 = vpack.c.b16 %v2986, %v2982
    %v3503 = vpack.c.b16 %v2987, %v2983
    %v3504 = vpack.c.b16 %v2988, %v2984
    %v3505 = vpack.c.b16 %v2989, %v2985
    %v3506 = vpack.c.b16 %v2994, %v2990
    %v3507 = vpack.c.b16 %v2995, %v2991
    %v3508 = vpack.c.b16 %v2996, %v2992
    %v3509 = vpack.c.b16 %v2997, %v2993
    %4022 = vmatprep.subr.bf16.mxu0 %v2999
    %4023 = vmatpush1.bf16.msra.mxu0 %v2998
    %4024 = vmatprep.subr.bf16.mxu0 %v3003
    %4025 = vmatpush1.bf16.msra.mxu0 %v3002
    %4026 = vmatprep.subr.bf16.mxu0 %v3007
    %4027 = vmatpush1.bf16.msra.mxu0 %v3006
    %4028 = vmatprep.subr.bf16.mxu0 %v3011
    %4029 = vmatpush1.bf16.msra.mxu0 %v3010
    %4030 = vmatprep.subr.bf16.mxu0 %v3015
    %4031 = vmatpush1.bf16.msra.mxu0 %v3014
    %4032 = vmatprep.subr.bf16.mxu0 %v3019
    %4033 = vmatpush1.bf16.msra.mxu0 %v3018
    %4034 = vmatprep.subr.bf16.mxu0 %v3023
    %4035 = vmatpush1.bf16.msra.mxu0 %v3022
    %4036 = vmatprep.subr.bf16.mxu0 %v3027
    %4037 = vmatpush1.bf16.msra.mxu0 %v3026
    %4038 = vmatprep.subr.bf16.mxu0 %v3031
    %4039 = vmatpush1.bf16.msra.mxu0 %v3030
    %4040 = vmatprep.subr.bf16.mxu0 %v3035
    %4041 = vmatpush1.bf16.msra.mxu0 %v3034
    %4042 = vmatprep.subr.bf16.mxu0 %v3039
    %4043 = vmatpush1.bf16.msra.mxu0 %v3038
    %4044 = vmatprep.subr.bf16.mxu0 %v3043
    %4045 = vmatpush1.bf16.msra.mxu0 %v3042
    %4046 = vmatprep.subr.bf16.mxu0 %v3047
    %4047 = vmatpush1.bf16.msra.mxu0 %v3046
    %4048 = vmatprep.subr.bf16.mxu0 %v3051
    %4049 = vmatpush1.bf16.msra.mxu0 %v3050
    %4050 = vmatprep.subr.bf16.mxu0 %v3055
    %4051 = vmatpush1.bf16.msra.mxu0 %v3054
    %4052 = vmatprep.subr.bf16.mxu0 %v3059
    %4053 = vmatpush1.bf16.msra.mxu0 %v3058
    %4054 = vmatprep.mubr.bf16.mxu0 %v935
    %4055 = vmatmul.mubr.bf16.gmra.mrb[0].mxu0 %v934
    %v4056 = vpop.f32.mrb[0].mxu0
    %v4057 = vadd.f32 0.0, %v4056
    %v4058 = vpop.f32.mrb[0].mxu0
    %v4059 = vadd.f32 0.0, %v4058
    %v4060 = vpop.f32.mrb[0].mxu0
    %v4061 = vpop.f32.mrb[0].mxu0
    %4062 = vdwg.mxu0
    %4063 = vmatprep.subr.bf16.mxu0 %v3063
    %4064 = vmatpush1.bf16.msra.mxu0 %v3062
    %4065 = vmatprep.subr.bf16.mxu0 %v3067
    %4066 = vmatpush1.bf16.msra.mxu0 %v3066
    %4067 = vmatprep.subr.bf16.mxu0 %v3071
    %4068 = vmatpush1.bf16.msra.mxu0 %v3070
    %4069 = vmatprep.subr.bf16.mxu0 %v3075
    %4070 = vmatpush1.bf16.msra.mxu0 %v3074
    %4071 = vmatprep.subr.bf16.mxu0 %v3079
    %4072 = vmatpush1.bf16.msra.mxu0 %v3078
    %4073 = vmatprep.subr.bf16.mxu0 %v3083
    %4074 = vmatpush1.bf16.msra.mxu0 %v3082
    %4075 = vmatprep.subr.bf16.mxu0 %v3087
    %4076 = vmatpush1.bf16.msra.mxu0 %v3086
    %4077 = vmatprep.subr.bf16.mxu0 %v3091
    %4078 = vmatpush1.bf16.msra.mxu0 %v3090
    %4079 = vmatprep.subr.bf16.mxu0 %v3095
    %4080 = vmatpush1.bf16.msra.mxu0 %v3094
    %4081 = vmatprep.subr.bf16.mxu0 %v3099
    %4082 = vmatpush1.bf16.msra.mxu0 %v3098
    %4083 = vmatprep.subr.bf16.mxu0 %v3103
    %4084 = vmatpush1.bf16.msra.mxu0 %v3102
    %4085 = vmatprep.subr.bf16.mxu0 %v3107
    %4086 = vmatpush1.bf16.msra.mxu0 %v3106
    %4087 = vmatprep.subr.bf16.mxu0 %v3111
    %4088 = vmatpush1.bf16.msra.mxu0 %v3110
    %4089 = vmatprep.subr.bf16.mxu0 %v3115
    %4090 = vmatpush1.bf16.msra.mxu0 %v3114
    %4091 = vmatprep.subr.bf16.mxu0 %v3119
    %4092 = vmatpush1.bf16.msra.mxu0 %v3118
    %4093 = vmatprep.subr.bf16.mxu0 %v3123
    %4094 = vmatpush1.bf16.msra.mxu0 %v3122
    %4095 = vmatprep.mubr.bf16.mxu0 %v937
    %4096 = vmatmul.mubr.bf16.gmra.mrb[0].mxu0 %v936
    %v4097 = vpop.f32.mrb[0].mxu0
    %v4098 = vadd.f32 %v4057, %v4097
    %v4099 = vpop.f32.mrb[0].mxu0
    %v4100 = vadd.f32 %v4059, %v4099
    %v4101 = vpop.f32.mrb[0].mxu0
    %v4102 = vpop.f32.mrb[0].mxu0
    %4103 = vdwg.mxu0
    %4104 = vmatprep.subr.bf16.mxu0 %v3127
    %4105 = vmatpush1.bf16.msra.mxu0 %v3126
    %4106 = vmatprep.subr.bf16.mxu0 %v3131
    %4107 = vmatpush1.bf16.msra.mxu0 %v3130
    %4108 = vmatprep.subr.bf16.mxu0 %v3135
    %4109 = vmatpush1.bf16.msra.mxu0 %v3134
    %4110 = vmatprep.subr.bf16.mxu0 %v3139
    %4111 = vmatpush1.bf16.msra.mxu0 %v3138
    %4112 = vmatprep.subr.bf16.mxu0 %v3143
    %4113 = vmatpush1.bf16.msra.mxu0 %v3142
    %4114 = vmatprep.subr.bf16.mxu0 %v3147
    %4115 = vmatpush1.bf16.msra.mxu0 %v3146
    %4116 = vmatprep.subr.bf16.mxu0 %v3151
    %4117 = vmatpush1.bf16.msra.mxu0 %v3150
    %4118 = vmatprep.subr.bf16.mxu0 %v3155
    %4119 = vmatpush1.bf16.msra.mxu0 %v3154
    %4120 = vmatprep.subr.bf16.mxu0 %v3159
    %4121 = vmatpush1.bf16.msra.mxu0 %v3158
    %4122 = vmatprep.subr.bf16.mxu0 %v3163
    %4123 = vmatpush1.bf16.msra.mxu0 %v3162
    %4124 = vmatprep.subr.bf16.mxu0 %v3167
    %4125 = vmatpush1.bf16.msra.mxu0 %v3166
    %4126 = vmatprep.subr.bf16.mxu0 %v3171
    %4127 = vmatpush1.bf16.msra.mxu0 %v3170
    %4128 = vmatprep.subr.bf16.mxu0 %v3175
    %4129 = vmatpush1.bf16.msra.mxu0 %v3174
    %4130 = vmatprep.subr.bf16.mxu0 %v3179
    %4131 = vmatpush1.bf16.msra.mxu0 %v3178
    %4132 = vmatprep.subr.bf16.mxu0 %v3183
    %4133 = vmatpush1.bf16.msra.mxu0 %v3182
    %4134 = vmatprep.subr.bf16.mxu0 %v3187
    %4135 = vmatpush1.bf16.msra.mxu0 %v3186
    %4136 = vmatprep.mubr.bf16.mxu0 %v939
    %4137 = vmatmul.mubr.bf16.gmra.mrb[0].mxu0 %v938
    %v4138 = vpop.f32.mrb[0].mxu0
    %v4139 = vadd.f32 %v4098, %v4138
    %v4140 = vpop.f32.mrb[0].mxu0
    %v4141 = vadd.f32 %v4100, %v4140
    %v4142 = vpop.f32.mrb[0].mxu0
    %v4143 = vpop.f32.mrb[0].mxu0
    %4144 = vdwg.mxu0
    %4145 = vmatprep.subr.bf16.mxu0 %v3191
    %4146 = vmatpush1.bf16.msra.mxu0 %v3190
    %4147 = vmatprep.subr.bf16.mxu0 %v3195
    %4148 = vmatpush1.bf16.msra.mxu0 %v3194
    %4149 = vmatprep.subr.bf16.mxu0 %v3199
    %4150 = vmatpush1.bf16.msra.mxu0 %v3198
    %4151 = vmatprep.subr.bf16.mxu0 %v3203
    %4152 = vmatpush1.bf16.msra.mxu0 %v3202
    %4153 = vmatprep.subr.bf16.mxu0 %v3207
    %4154 = vmatpush1.bf16.msra.mxu0 %v3206
    %4155 = vmatprep.subr.bf16.mxu0 %v3211
    %4156 = vmatpush1.bf16.msra.mxu0 %v3210
    %4157 = vmatprep.subr.bf16.mxu0 %v3215
    %4158 = vmatpush1.bf16.msra.mxu0 %v3214
    %4159 = vmatprep.subr.bf16.mxu0 %v3219
    %4160 = vmatpush1.bf16.msra.mxu0 %v3218
    %4161 = vmatprep.subr.bf16.mxu0 %v3223
    %4162 = vmatpush1.bf16.msra.mxu0 %v3222
    %4163 = vmatprep.subr.bf16.mxu0 %v3227
    %4164 = vmatpush1.bf16.msra.mxu0 %v3226
    %4165 = vmatprep.subr.bf16.mxu0 %v3231
    %4166 = vmatpush1.bf16.msra.mxu0 %v3230
    %4167 = vmatprep.subr.bf16.mxu0 %v3235
    %4168 = vmatpush1.bf16.msra.mxu0 %v3234
    %4169 = vmatprep.subr.bf16.mxu0 %v3239
    %4170 = vmatpush1.bf16.msra.mxu0 %v3238
    %4171 = vmatprep.subr.bf16.mxu0 %v3243
    %4172 = vmatpush1.bf16.msra.mxu0 %v3242
    %4173 = vmatprep.subr.bf16.mxu0 %v3247
    %4174 = vmatpush1.bf16.msra.mxu0 %v3246
    %4175 = vmatprep.subr.bf16.mxu0 %v3251
    %4176 = vmatpush1.bf16.msra.mxu0 %v3250
    %4177 = vmatprep.mubr.bf16.mxu0 %v941
    %4178 = vmatmul.mubr.bf16.gmra.mrb[0].mxu0 %v940
    %v4179 = vpop.f32.mrb[0].mxu0
    %v4180 = vadd.f32 %v4139, %v4179
    %v4181 = vpop.f32.mrb[0].mxu0
    %v4182 = vadd.f32 %v4141, %v4181
    %v4183 = vpop.f32.mrb[0].mxu0
    %v4184 = vpop.f32.mrb[0].mxu0
    %4185 = vdwg.mxu0
    %4186 = vmatprep.subr.bf16.mxu0 %v3255
    %4187 = vmatpush1.bf16.msra.mxu0 %v3254
    %4188 = vmatprep.subr.bf16.mxu0 %v3259
    %4189 = vmatpush1.bf16.msra.mxu0 %v3258
    %4190 = vmatprep.subr.bf16.mxu0 %v3263
    %4191 = vmatpush1.bf16.msra.mxu0 %v3262
    %4192 = vmatprep.subr.bf16.mxu0 %v3267
    %4193 = vmatpush1.bf16.msra.mxu0 %v3266
    %4194 = vmatprep.subr.bf16.mxu0 %v3271
    %4195 = vmatpush1.bf16.msra.mxu0 %v3270
    %4196 = vmatprep.subr.bf16.mxu0 %v3275
    %4197 = vmatpush1.bf16.msra.mxu0 %v3274
    %4198 = vmatprep.subr.bf16.mxu0 %v3279
    %4199 = vmatpush1.bf16.msra.mxu0 %v3278
    %4200 = vmatprep.subr.bf16.mxu0 %v3283
    %4201 = vmatpush1.bf16.msra.mxu0 %v3282
    %4202 = vmatprep.subr.bf16.mxu0 %v3287
    %4203 = vmatpush1.bf16.msra.mxu0 %v3286
    %4204 = vmatprep.subr.bf16.mxu0 %v3291
    %4205 = vmatpush1.bf16.msra.mxu0 %v3290
    %4206 = vmatprep.subr.bf16.mxu0 %v3295
    %4207 = vmatpush1.bf16.msra.mxu0 %v3294
    %4208 = vmatprep.subr.bf16.mxu0 %v3299
    %4209 = vmatpush1.bf16.msra.mxu0 %v3298
    %4210 = vmatprep.subr.bf16.mxu0 %v3303
    %4211 = vmatpush1.bf16.msra.mxu0 %v3302
    %4212 = vmatprep.subr.bf16.mxu0 %v3307
    %4213 = vmatpush1.bf16.msra.mxu0 %v3306
    %4214 = vmatprep.subr.bf16.mxu0 %v3311
    %4215 = vmatpush1.bf16.msra.mxu0 %v3310
    %4216 = vmatprep.subr.bf16.mxu0 %v3315
    %4217 = vmatpush1.bf16.msra.mxu0 %v3314
    %4218 = vmatprep.mubr.bf16.mxu0 %v943
    %4219 = vmatmul.mubr.bf16.gmra.mrb[0].mxu0 %v942
    %v4220 = vpop.f32.mrb[0].mxu0
    %v4221 = vadd.f32 %v4180, %v4220
    %v4222 = vpop.f32.mrb[0].mxu0
    %v4223 = vadd.f32 %v4182, %v4222
    %v4224 = vpop.f32.mrb[0].mxu0
    %v4225 = vpop.f32.mrb[0].mxu0
    %4226 = vdwg.mxu0
    %4227 = vmatprep.subr.bf16.mxu0 %v3319
    %4228 = vmatpush1.bf16.msra.mxu0 %v3318
    %4229 = vmatprep.subr.bf16.mxu0 %v3323
    %4230 = vmatpush1.bf16.msra.mxu0 %v3322
    %4231 = vmatprep.subr.bf16.mxu0 %v3327
    %4232 = vmatpush1.bf16.msra.mxu0 %v3326
    %4233 = vmatprep.subr.bf16.mxu0 %v3331
    %4234 = vmatpush1.bf16.msra.mxu0 %v3330
    %4235 = vmatprep.subr.bf16.mxu0 %v3335
    %4236 = vmatpush1.bf16.msra.mxu0 %v3334
    %4237 = vmatprep.subr.bf16.mxu0 %v3339
    %4238 = vmatpush1.bf16.msra.mxu0 %v3338
    %4239 = vmatprep.subr.bf16.mxu0 %v3343
    %4240 = vmatpush1.bf16.msra.mxu0 %v3342
    %4241 = vmatprep.subr.bf16.mxu0 %v3347
    %4242 = vmatpush1.bf16.msra.mxu0 %v3346
    %4243 = vmatprep.subr.bf16.mxu0 %v3351
    %4244 = vmatpush1.bf16.msra.mxu0 %v3350
    %4245 = vmatprep.subr.bf16.mxu0 %v3355
    %4246 = vmatpush1.bf16.msra.mxu0 %v3354
    %4247 = vmatprep.subr.bf16.mxu0 %v3359
    %4248 = vmatpush1.bf16.msra.mxu0 %v3358
    %4249 = vmatprep.subr.bf16.mxu0 %v3363
    %4250 = vmatpush1.bf16.msra.mxu0 %v3362
    %4251 = vmatprep.subr.bf16.mxu0 %v3367
    %4252 = vmatpush1.bf16.msra.mxu0 %v3366
    %4253 = vmatprep.subr.bf16.mxu0 %v3371
    %4254 = vmatpush1.bf16.msra.mxu0 %v3370
    %4255 = vmatprep.subr.bf16.mxu0 %v3375
    %4256 = vmatpush1.bf16.msra.mxu0 %v3374
    %4257 = vmatprep.subr.bf16.mxu0 %v3379
    %4258 = vmatpush1.bf16.msra.mxu0 %v3378
    %4259 = vmatprep.mubr.bf16.mxu0 %v945
    %4260 = vmatmul.mubr.bf16.gmra.mrb[0].mxu0 %v944
    %v4261 = vpop.f32.mrb[0].mxu0
    %v4262 = vadd.f32 %v4221, %v4261
    %v4263 = vpop.f32.mrb[0].mxu0
    %v4264 = vadd.f32 %v4223, %v4263
    %v4265 = vpop.f32.mrb[0].mxu0
    %v4266 = vpop.f32.mrb[0].mxu0
    %4267 = vdwg.mxu0
    %4268 = vmatprep.subr.bf16.mxu0 %v3383
    %4269 = vmatpush1.bf16.msra.mxu0 %v3382
    %4270 = vmatprep.subr.bf16.mxu0 %v3387
    %4271 = vmatpush1.bf16.msra.mxu0 %v3386
    %4272 = vmatprep.subr.bf16.mxu0 %v3391
    %4273 = vmatpush1.bf16.msra.mxu0 %v3390
    %4274 = vmatprep.subr.bf16.mxu0 %v3395
    %4275 = vmatpush1.bf16.msra.mxu0 %v3394
    %4276 = vmatprep.subr.bf16.mxu0 %v3399
    %4277 = vmatpush1.bf16.msra.mxu0 %v3398
    %4278 = vmatprep.subr.bf16.mxu0 %v3403
    %4279 = vmatpush1.bf16.msra.mxu0 %v3402
    %4280 = vmatprep.subr.bf16.mxu0 %v3407
    %4281 = vmatpush1.bf16.msra.mxu0 %v3406
    %4282 = vmatprep.subr.bf16.mxu0 %v3411
    %4283 = vmatpush1.bf16.msra.mxu0 %v3410
    %4284 = vmatprep.subr.bf16.mxu0 %v3415
    %4285 = vmatpush1.bf16.msra.mxu0 %v3414
    %4286 = vmatprep.subr.bf16.mxu0 %v3419
    %4287 = vmatpush1.bf16.msra.mxu0 %v3418
    %4288 = vmatprep.subr.bf16.mxu0 %v3423
    %4289 = vmatpush1.bf16.msra.mxu0 %v3422
    %4290 = vmatprep.subr.bf16.mxu0 %v3427
    %4291 = vmatpush1.bf16.msra.mxu0 %v3426
    %4292 = vmatprep.subr.bf16.mxu0 %v3431
    %4293 = vmatpush1.bf16.msra.mxu0 %v3430
    %4294 = vmatprep.subr.bf16.mxu0 %v3435
    %4295 = vmatpush1.bf16.msra.mxu0 %v3434
    %4296 = vmatprep.subr.bf16.mxu0 %v3439
    %4297 = vmatpush1.bf16.msra.mxu0 %v3438
    %4298 = vmatprep.subr.bf16.mxu0 %v3443
    %4299 = vmatpush1.bf16.msra.mxu0 %v3442
    %4300 = vmatprep.mubr.bf16.mxu0 %v947
    %4301 = vmatmul.mubr.bf16.gmra.mrb[0].mxu0 %v946
    %v4302 = vpop.f32.mrb[0].mxu0
    %v4303 = vadd.f32 %v4262, %v4302
    %v4304 = vpop.f32.mrb[0].mxu0
    %v4305 = vadd.f32 %v4264, %v4304
    %v4306 = vpop.f32.mrb[0].mxu0
    %v4307 = vpop.f32.mrb[0].mxu0
    %4308 = vdwg.mxu0
    %4309 = vmatprep.subr.bf16.mxu0 %v3447
    %4310 = vmatpush1.bf16.msra.mxu0 %v3446
    %4311 = vmatprep.subr.bf16.mxu0 %v3451
    %4312 = vmatpush1.bf16.msra.mxu0 %v3450
    %4313 = vmatprep.subr.bf16.mxu0 %v3455
    %4314 = vmatpush1.bf16.msra.mxu0 %v3454
    %4315 = vmatprep.subr.bf16.mxu0 %v3459
    %4316 = vmatpush1.bf16.msra.mxu0 %v3458
    %4317 = vmatprep.subr.bf16.mxu0 %v3463
    %4318 = vmatpush1.bf16.msra.mxu0 %v3462
    %4319 = vmatprep.subr.bf16.mxu0 %v3467
    %4320 = vmatpush1.bf16.msra.mxu0 %v3466
    %4321 = vmatprep.subr.bf16.mxu0 %v3471
    %4322 = vmatpush1.bf16.msra.mxu0 %v3470
    %4323 = vmatprep.subr.bf16.mxu0 %v3475
    %4324 = vmatpush1.bf16.msra.mxu0 %v3474
    %4325 = vmatprep.subr.bf16.mxu0 %v3479
    %4326 = vmatpush1.bf16.msra.mxu0 %v3478
    %4327 = vmatprep.subr.bf16.mxu0 %v3483
    %4328 = vmatpush1.bf16.msra.mxu0 %v3482
    %4329 = vmatprep.subr.bf16.mxu0 %v3487
    %4330 = vmatpush1.bf16.msra.mxu0 %v3486
    %4331 = vmatprep.subr.bf16.mxu0 %v3491
    %4332 = vmatpush1.bf16.msra.mxu0 %v3490
    %4333 = vmatprep.subr.bf16.mxu0 %v3495
    %4334 = vmatpush1.bf16.msra.mxu0 %v3494
    %4335 = vmatprep.subr.bf16.mxu0 %v3499
    %4336 = vmatpush1.bf16.msra.mxu0 %v3498
    %4337 = vmatprep.subr.bf16.mxu0 %v3503
    %4338 = vmatpush1.bf16.msra.mxu0 %v3502
    %4339 = vmatprep.subr.bf16.mxu0 %v3507
    %4340 = vmatpush1.bf16.msra.mxu0 %v3506
    %4341 = vmatprep.mubr.bf16.mxu0 %v949
    %4342 = vmatmul.mubr.bf16.gmra.mrb[0].mxu0 %v948
    %v4343 = vpop.f32.mrb[0].mxu0
    %v4344 = vadd.f32 %v4303, %v4343
    %v4345 = vpop.f32.mrb[0].mxu0
    %v4346 = vadd.f32 %v4305, %v4345
    %v4347 = vpop.f32.mrb[0].mxu0
    %v4348 = vpop.f32.mrb[0].mxu0
    %4349 = vdwg.mxu0
    %4350 = vmatprep.subr.bf16.mxu0 %v3001
    %4351 = vmatpush1.bf16.msra.mxu0 %v3000
    %4352 = vmatprep.subr.bf16.mxu0 %v3005
    %4353 = vmatpush1.bf16.msra.mxu0 %v3004
    %4354 = vmatprep.subr.bf16.mxu0 %v3009
    %4355 = vmatpush1.bf16.msra.mxu0 %v3008
    %4356 = vmatprep.subr.bf16.mxu0 %v3013
    %4357 = vmatpush1.bf16.msra.mxu0 %v3012
    %4358 = vmatprep.subr.bf16.mxu0 %v3017
    %4359 = vmatpush1.bf16.msra.mxu0 %v3016
    %4360 = vmatprep.subr.bf16.mxu0 %v3021
    %4361 = vmatpush1.bf16.msra.mxu0 %v3020
    %4362 = vmatprep.subr.bf16.mxu0 %v3025
    %4363 = vmatpush1.bf16.msra.mxu0 %v3024
    %4364 = vmatprep.subr.bf16.mxu0 %v3029
    %4365 = vmatpush1.bf16.msra.mxu0 %v3028
    %4366 = vmatprep.subr.bf16.mxu0 %v3033
    %4367 = vmatpush1.bf16.msra.mxu0 %v3032
    %4368 = vmatprep.subr.bf16.mxu0 %v3037
    %4369 = vmatpush1.bf16.msra.mxu0 %v3036
    %4370 = vmatprep.subr.bf16.mxu0 %v3041
    %4371 = vmatpush1.bf16.msra.mxu0 %v3040
    %4372 = vmatprep.subr.bf16.mxu0 %v3045
    %4373 = vmatpush1.bf16.msra.mxu0 %v3044
    %4374 = vmatprep.subr.bf16.mxu0 %v3049
    %4375 = vmatpush1.bf16.msra.mxu0 %v3048
    %4376 = vmatprep.subr.bf16.mxu0 %v3053
    %4377 = vmatpush1.bf16.msra.mxu0 %v3052
    %4378 = vmatprep.subr.bf16.mxu0 %v3057
    %4379 = vmatpush1.bf16.msra.mxu0 %v3056
    %4380 = vmatprep.subr.bf16.mxu0 %v3061
    %4381 = vmatpush1.bf16.msra.mxu0 %v3060
    %4382 = vmatprep.mubr.bf16.mxu0 %v935
    %4383 = vmatmul.mubr.bf16.gmra.mrb[0].mxu0 %v934
    %v4384 = vpop.f32.mrb[0].mxu0
    %v4385 = vadd.f32 0.0, %v4384
    %v4386 = vpop.f32.mrb[0].mxu0
    %v4387 = vadd.f32 0.0, %v4386
    %v4388 = vpop.f32.mrb[0].mxu0
    %v4389 = vpop.f32.mrb[0].mxu0
    %4390 = vdwg.mxu0
    %4391 = vmatprep.subr.bf16.mxu0 %v3065
    %4392 = vmatpush1.bf16.msra.mxu0 %v3064
    %4393 = vmatprep.subr.bf16.mxu0 %v3069
    %4394 = vmatpush1.bf16.msra.mxu0 %v3068
    %4395 = vmatprep.subr.bf16.mxu0 %v3073
    %4396 = vmatpush1.bf16.msra.mxu0 %v3072
    %4397 = vmatprep.subr.bf16.mxu0 %v3077
    %4398 = vmatpush1.bf16.msra.mxu0 %v3076
    %4399 = vmatprep.subr.bf16.mxu0 %v3081
    %4400 = vmatpush1.bf16.msra.mxu0 %v3080
    %4401 = vmatprep.subr.bf16.mxu0 %v3085
    %4402 = vmatpush1.bf16.msra.mxu0 %v3084
    %4403 = vmatprep.subr.bf16.mxu0 %v3089
    %4404 = vmatpush1.bf16.msra.mxu0 %v3088
    %4405 = vmatprep.subr.bf16.mxu0 %v3093
    %4406 = vmatpush1.bf16.msra.mxu0 %v3092
    %4407 = vmatprep.subr.bf16.mxu0 %v3097
    %4408 = vmatpush1.bf16.msra.mxu0 %v3096
    %4409 = vmatprep.subr.bf16.mxu0 %v3101
    %4410 = vmatpush1.bf16.msra.mxu0 %v3100
    %4411 = vmatprep.subr.bf16.mxu0 %v3105
    %4412 = vmatpush1.bf16.msra.mxu0 %v3104
    %4413 = vmatprep.subr.bf16.mxu0 %v3109
    %4414 = vmatpush1.bf16.msra.mxu0 %v3108
    %4415 = vmatprep.subr.bf16.mxu0 %v3113
    %4416 = vmatpush1.bf16.msra.mxu0 %v3112
    %4417 = vmatprep.subr.bf16.mxu0 %v3117
    %4418 = vmatpush1.bf16.msra.mxu0 %v3116
    %4419 = vmatprep.subr.bf16.mxu0 %v3121
    %4420 = vmatpush1.bf16.msra.mxu0 %v3120
    %4421 = vmatprep.subr.bf16.mxu0 %v3125
    %4422 = vmatpush1.bf16.msra.mxu0 %v3124
    %4423 = vmatprep.mubr.bf16.mxu0 %v937
    %4424 = vmatmul.mubr.bf16.gmra.mrb[0].mxu0 %v936
    %v4425 = vpop.f32.mrb[0].mxu0
    %v4426 = vadd.f32 %v4385, %v4425
    %v4427 = vpop.f32.mrb[0].mxu0
    %v4428 = vadd.f32 %v4387, %v4427
    %v4429 = vpop.f32.mrb[0].mxu0
    %v4430 = vpop.f32.mrb[0].mxu0
    %4431 = vdwg.mxu0
    %4432 = vmatprep.subr.bf16.mxu0 %v3129
    %4433 = vmatpush1.bf16.msra.mxu0 %v3128
    %4434 = vmatprep.subr.bf16.mxu0 %v3133
    %4435 = vmatpush1.bf16.msra.mxu0 %v3132
    %4436 = vmatprep.subr.bf16.mxu0 %v3137
    %4437 = vmatpush1.bf16.msra.mxu0 %v3136
    %4438 = vmatprep.subr.bf16.mxu0 %v3141
    %4439 = vmatpush1.bf16.msra.mxu0 %v3140
    %4440 = vmatprep.subr.bf16.mxu0 %v3145
    %4441 = vmatpush1.bf16.msra.mxu0 %v3144
    %4442 = vmatprep.subr.bf16.mxu0 %v3149
    %4443 = vmatpush1.bf16.msra.mxu0 %v3148
    %4444 = vmatprep.subr.bf16.mxu0 %v3153
    %4445 = vmatpush1.bf16.msra.mxu0 %v3152
    %4446 = vmatprep.subr.bf16.mxu0 %v3157
    %4447 = vmatpush1.bf16.msra.mxu0 %v3156
    %4448 = vmatprep.subr.bf16.mxu0 %v3161
    %4449 = vmatpush1.bf16.msra.mxu0 %v3160
    %4450 = vmatprep.subr.bf16.mxu0 %v3165
    %4451 = vmatpush1.bf16.msra.mxu0 %v3164
    %4452 = vmatprep.subr.bf16.mxu0 %v3169
    %4453 = vmatpush1.bf16.msra.mxu0 %v3168
    %4454 = vmatprep.subr.bf16.mxu0 %v3173
    %4455 = vmatpush1.bf16.msra.mxu0 %v3172
    %4456 = vmatprep.subr.bf16.mxu0 %v3177
    %4457 = vmatpush1.bf16.msra.mxu0 %v3176
    %4458 = vmatprep.subr.bf16.mxu0 %v3181
    %4459 = vmatpush1.bf16.msra.mxu0 %v3180
    %4460 = vmatprep.subr.bf16.mxu0 %v3185
    %4461 = vmatpush1.bf16.msra.mxu0 %v3184
    %4462 = vmatprep.subr.bf16.mxu0 %v3189
    %4463 = vmatpush1.bf16.msra.mxu0 %v3188
    %4464 = vmatprep.mubr.bf16.mxu0 %v939
    %4465 = vmatmul.mubr.bf16.gmra.mrb[0].mxu0 %v938
    %v4466 = vpop.f32.mrb[0].mxu0
    %v4467 = vadd.f32 %v4426, %v4466
    %v4468 = vpop.f32.mrb[0].mxu0
    %v4469 = vadd.f32 %v4428, %v4468
    %v4470 = vpop.f32.mrb[0].mxu0
    %v4471 = vpop.f32.mrb[0].mxu0
    %4472 = vdwg.mxu0
    %4473 = vmatprep.subr.bf16.mxu0 %v3193
    %4474 = vmatpush1.bf16.msra.mxu0 %v3192
    %4475 = vmatprep.subr.bf16.mxu0 %v3197
    %4476 = vmatpush1.bf16.msra.mxu0 %v3196
    %4477 = vmatprep.subr.bf16.mxu0 %v3201
    %4478 = vmatpush1.bf16.msra.mxu0 %v3200
    %4479 = vmatprep.subr.bf16.mxu0 %v3205
    %4480 = vmatpush1.bf16.msra.mxu0 %v3204
    %4481 = vmatprep.subr.bf16.mxu0 %v3209
    %4482 = vmatpush1.bf16.msra.mxu0 %v3208
    %4483 = vmatprep.subr.bf16.mxu0 %v3213
    %4484 = vmatpush1.bf16.msra.mxu0 %v3212
    %4485 = vmatprep.subr.bf16.mxu0 %v3217
    %4486 = vmatpush1.bf16.msra.mxu0 %v3216
    %4487 = vmatprep.subr.bf16.mxu0 %v3221
    %4488 = vmatpush1.bf16.msra.mxu0 %v3220
    %4489 = vmatprep.subr.bf16.mxu0 %v3225
    %4490 = vmatpush1.bf16.msra.mxu0 %v3224
    %4491 = vmatprep.subr.bf16.mxu0 %v3229
    %4492 = vmatpush1.bf16.msra.mxu0 %v3228
    %4493 = vmatprep.subr.bf16.mxu0 %v3233
    %4494 = vmatpush1.bf16.msra.mxu0 %v3232
    %4495 = vmatprep.subr.bf16.mxu0 %v3237
    %4496 = vmatpush1.bf16.msra.mxu0 %v3236
    %4497 = vmatprep.subr.bf16.mxu0 %v3241
    %4498 = vmatpush1.bf16.msra.mxu0 %v3240
    %4499 = vmatprep.subr.bf16.mxu0 %v3245
    %4500 = vmatpush1.bf16.msra.mxu0 %v3244
    %4501 = vmatprep.subr.bf16.mxu0 %v3249
    %4502 = vmatpush1.bf16.msra.mxu0 %v3248
    %4503 = vmatprep.subr.bf16.mxu0 %v3253
    %4504 = vmatpush1.bf16.msra.mxu0 %v3252
    %4505 = vmatprep.mubr.bf16.mxu0 %v941
    %4506 = vmatmul.mubr.bf16.gmra.mrb[0].mxu0 %v940
    %v4507 = vpop.f32.mrb[0].mxu0
    %v4508 = vadd.f32 %v4467, %v4507
    %v4509 = vpop.f32.mrb[0].mxu0
    %v4510 = vadd.f32 %v4469, %v4509
    %v4511 = vpop.f32.mrb[0].mxu0
    %v4512 = vpop.f32.mrb[0].mxu0
    %4513 = vdwg.mxu0
    %4514 = vmatprep.subr.bf16.mxu0 %v3257
    %4515 = vmatpush1.bf16.msra.mxu0 %v3256
    %4516 = vmatprep.subr.bf16.mxu0 %v3261
    %4517 = vmatpush1.bf16.msra.mxu0 %v3260
    %4518 = vmatprep.subr.bf16.mxu0 %v3265
    %4519 = vmatpush1.bf16.msra.mxu0 %v3264
    %4520 = vmatprep.subr.bf16.mxu0 %v3269
    %4521 = vmatpush1.bf16.msra.mxu0 %v3268
    %4522 = vmatprep.subr.bf16.mxu0 %v3273
    %4523 = vmatpush1.bf16.msra.mxu0 %v3272
    %4524 = vmatprep.subr.bf16.mxu0 %v3277
    %4525 = vmatpush1.bf16.msra.mxu0 %v3276
    %4526 = vmatprep.subr.bf16.mxu0 %v3281
    %4527 = vmatpush1.bf16.msra.mxu0 %v3280
    %4528 = vmatprep.subr.bf16.mxu0 %v3285
    %4529 = vmatpush1.bf16.msra.mxu0 %v3284
    %4530 = vmatprep.subr.bf16.mxu0 %v3289
    %4531 = vmatpush1.bf16.msra.mxu0 %v3288
    %4532 = vmatprep.subr.bf16.mxu0 %v3293
    %4533 = vmatpush1.bf16.msra.mxu0 %v3292
    %4534 = vmatprep.subr.bf16.mxu0 %v3297
    %4535 = vmatpush1.bf16.msra.mxu0 %v3296
    %4536 = vmatprep.subr.bf16.mxu0 %v3301
    %4537 = vmatpush1.bf16.msra.mxu0 %v3300
    %4538 = vmatprep.subr.bf16.mxu0 %v3305
    %4539 = vmatpush1.bf16.msra.mxu0 %v3304
    %4540 = vmatprep.subr.bf16.mxu0 %v3309
    %4541 = vmatpush1.bf16.msra.mxu0 %v3308
    %4542 = vmatprep.subr.bf16.mxu0 %v3313
    %4543 = vmatpush1.bf16.msra.mxu0 %v3312
    %4544 = vmatprep.subr.bf16.mxu0 %v3317
    %4545 = vmatpush1.bf16.msra.mxu0 %v3316
    %4546 = vmatprep.mubr.bf16.mxu0 %v943
    %4547 = vmatmul.mubr.bf16.gmra.mrb[0].mxu0 %v942
    %v4548 = vpop.f32.mrb[0].mxu0
    %v4549 = vadd.f32 %v4508, %v4548
    %v4550 = vpop.f32.mrb[0].mxu0
    %v4551 = vadd.f32 %v4510, %v4550
    %v4552 = vpop.f32.mrb[0].mxu0
    %v4553 = vpop.f32.mrb[0].mxu0
    %4554 = vdwg.mxu0
    %4555 = vmatprep.subr.bf16.mxu0 %v3321
    %4556 = vmatpush1.bf16.msra.mxu0 %v3320
    %4557 = vmatprep.subr.bf16.mxu0 %v3325
    %4558 = vmatpush1.bf16.msra.mxu0 %v3324
    %4559 = vmatprep.subr.bf16.mxu0 %v3329
    %4560 = vmatpush1.bf16.msra.mxu0 %v3328
    %4561 = vmatprep.subr.bf16.mxu0 %v3333
    %4562 = vmatpush1.bf16.msra.mxu0 %v3332
    %4563 = vmatprep.subr.bf16.mxu0 %v3337
    %4564 = vmatpush1.bf16.msra.mxu0 %v3336
    %4565 = vmatprep.subr.bf16.mxu0 %v3341
    %4566 = vmatpush1.bf16.msra.mxu0 %v3340
    %4567 = vmatprep.subr.bf16.mxu0 %v3345
    %4568 = vmatpush1.bf16.msra.mxu0 %v3344
    %4569 = vmatprep.subr.bf16.mxu0 %v3349
    %4570 = vmatpush1.bf16.msra.mxu0 %v3348
    %4571 = vmatprep.subr.bf16.mxu0 %v3353
    %4572 = vmatpush1.bf16.msra.mxu0 %v3352
    %4573 = vmatprep.subr.bf16.mxu0 %v3357
    %4574 = vmatpush1.bf16.msra.mxu0 %v3356
    %4575 = vmatprep.subr.bf16.mxu0 %v3361
    %4576 = vmatpush1.bf16.msra.mxu0 %v3360
    %4577 = vmatprep.subr.bf16.mxu0 %v3365
    %4578 = vmatpush1.bf16.msra.mxu0 %v3364
    %4579 = vmatprep.subr.bf16.mxu0 %v3369
    %4580 = vmatpush1.bf16.msra.mxu0 %v3368
    %4581 = vmatprep.subr.bf16.mxu0 %v3373
    %4582 = vmatpush1.bf16.msra.mxu0 %v3372
    %4583 = vmatprep.subr.bf16.mxu0 %v3377
    %4584 = vmatpush1.bf16.msra.mxu0 %v3376
    %4585 = vmatprep.subr.bf16.mxu0 %v3381
    %4586 = vmatpush1.bf16.msra.mxu0 %v3380
    %4587 = vmatprep.mubr.bf16.mxu0 %v945
    %4588 = vmatmul.mubr.bf16.gmra.mrb[0].mxu0 %v944
    %v4589 = vpop.f32.mrb[0].mxu0
    %v4590 = vadd.f32 %v4549, %v4589
    %v4591 = vpop.f32.mrb[0].mxu0
    %v4592 = vadd.f32 %v4551, %v4591
    %v4593 = vpop.f32.mrb[0].mxu0
    %v4594 = vpop.f32.mrb[0].mxu0
    %4595 = vdwg.mxu0
    %4596 = vmatprep.subr.bf16.mxu0 %v3385
    %4597 = vmatpush1.bf16.msra.mxu0 %v3384
    %4598 = vmatprep.subr.bf16.mxu0 %v3389
    %4599 = vmatpush1.bf16.msra.mxu0 %v3388
    %4600 = vmatprep.subr.bf16.mxu0 %v3393
    %4601 = vmatpush1.bf16.msra.mxu0 %v3392
    %4602 = vmatprep.subr.bf16.mxu0 %v3397
    %4603 = vmatpush1.bf16.msra.mxu0 %v3396
    %4604 = vmatprep.subr.bf16.mxu0 %v3401
    %4605 = vmatpush1.bf16.msra.mxu0 %v3400
    %4606 = vmatprep.subr.bf16.mxu0 %v3405
    %4607 = vmatpush1.bf16.msra.mxu0 %v3404
    %4608 = vmatprep.subr.bf16.mxu0 %v3409
    %4609 = vmatpush1.bf16.msra.mxu0 %v3408
    %4610 = vmatprep.subr.bf16.mxu0 %v3413
    %4611 = vmatpush1.bf16.msra.mxu0 %v3412
    %4612 = vmatprep.subr.bf16.mxu0 %v3417
    %4613 = vmatpush1.bf16.msra.mxu0 %v3416
    %4614 = vmatprep.subr.bf16.mxu0 %v3421
    %4615 = vmatpush1.bf16.msra.mxu0 %v3420
    %4616 = vmatprep.subr.bf16.mxu0 %v3425
    %4617 = vmatpush1.bf16.msra.mxu0 %v3424
    %4618 = vmatprep.subr.bf16.mxu0 %v3429
    %4619 = vmatpush1.bf16.msra.mxu0 %v3428
    %4620 = vmatprep.subr.bf16.mxu0 %v3433
    %4621 = vmatpush1.bf16.msra.mxu0 %v3432
    %4622 = vmatprep.subr.bf16.mxu0 %v3437
    %4623 = vmatpush1.bf16.msra.mxu0 %v3436
    %4624 = vmatprep.subr.bf16.mxu0 %v3441
    %4625 = vmatpush1.bf16.msra.mxu0 %v3440
    %4626 = vmatprep.subr.bf16.mxu0 %v3445
    %4627 = vmatpush1.bf16.msra.mxu0 %v3444
    %4628 = vmatprep.mubr.bf16.mxu0 %v947
    %4629 = vmatmul.mubr.bf16.gmra.mrb[0].mxu0 %v946
    %v4630 = vpop.f32.mrb[0].mxu0
    %v4631 = vadd.f32 %v4590, %v4630
    %v4632 = vpop.f32.mrb[0].mxu0
    %v4633 = vadd.f32 %v4592, %v4632
    %v4634 = vpop.f32.mrb[0].mxu0
    %v4635 = vpop.f32.mrb[0].mxu0
    %4636 = vdwg.mxu0
    %4637 = vmatprep.subr.bf16.mxu0 %v3449
    %4638 = vmatpush1.bf16.msra.mxu0 %v3448
    %4639 = vmatprep.subr.bf16.mxu0 %v3453
    %4640 = vmatpush1.bf16.msra.mxu0 %v3452
    %4641 = vmatprep.subr.bf16.mxu0 %v3457
    %4642 = vmatpush1.bf16.msra.mxu0 %v3456
    %4643 = vmatprep.subr.bf16.mxu0 %v3461
    %4644 = vmatpush1.bf16.msra.mxu0 %v3460
    %4645 = vmatprep.subr.bf16.mxu0 %v3465
    %4646 = vmatpush1.bf16.msra.mxu0 %v3464
    %4647 = vmatprep.subr.bf16.mxu0 %v3469
    %4648 = vmatpush1.bf16.msra.mxu0 %v3468
    %4649 = vmatprep.subr.bf16.mxu0 %v3473
    %4650 = vmatpush1.bf16.msra.mxu0 %v3472
    %4651 = vmatprep.subr.bf16.mxu0 %v3477
    %4652 = vmatpush1.bf16.msra.mxu0 %v3476
    %4653 = vmatprep.subr.bf16.mxu0 %v3481
    %4654 = vmatpush1.bf16.msra.mxu0 %v3480
    %4655 = vmatprep.subr.bf16.mxu0 %v3485
    %4656 = vmatpush1.bf16.msra.mxu0 %v3484
    %4657 = vmatprep.subr.bf16.mxu0 %v3489
    %4658 = vmatpush1.bf16.msra.mxu0 %v3488
    %4659 = vmatprep.subr.bf16.mxu0 %v3493
    %4660 = vmatpush1.bf16.msra.mxu0 %v3492
    %4661 = vmatprep.subr.bf16.mxu0 %v3497
    %4662 = vmatpush1.bf16.msra.mxu0 %v3496
    %4663 = vmatprep.subr.bf16.mxu0 %v3501
    %4664 = vmatpush1.bf16.msra.mxu0 %v3500
    %4665 = vmatprep.subr.bf16.mxu0 %v3505
    %4666 = vmatpush1.bf16.msra.mxu0 %v3504
    %4667 = vmatprep.subr.bf16.mxu0 %v3509
    %4668 = vmatpush1.bf16.msra.mxu0 %v3508
    %4669 = vmatprep.mubr.bf16.mxu0 %v949
    %4670 = vmatmul.mubr.bf16.gmra.mrb[0].mxu0 %v948
    %v4671 = vpop.f32.mrb[0].mxu0
    %v4672 = vadd.f32 %v4631, %v4671
    %v4673 = vpop.f32.mrb[0].mxu0
    %v4674 = vadd.f32 %v4633, %v4673
    %v4675 = vpop.f32.mrb[0].mxu0
    %v4676 = vpop.f32.mrb[0].mxu0
    %4677 = vdwg.mxu0
    %v4678 = vld [vmem:[#allocation9] sm:$0xf]
    %v4680 = vlaneseq
    %v4681 = vshrl.u32 %v4680, 7
    %v4682 = vsub.s32 0, %v4681
    %v4683 = vrot.slane %v4678, %v4682
    %v4684 = vlaneseq
    %v4685 = vshrl.u32 %v4684, 7
    %v4686 = vsub.s32 1, %v4685
    %v4687 = vrot.slane %v4678, %v4686
    %v4688 = vlaneseq
    %v4689 = vshrl.u32 %v4688, 7
    %v4690 = vsub.s32 2, %v4689
    %v4691 = vrot.slane %v4678, %v4690
    %v4692 = vlaneseq
    %v4693 = vshrl.u32 %v4692, 7
    %v4694 = vsub.s32 3, %v4693
    %v4695 = vrot.slane %v4678, %v4694
    %v4700 = vmul.f32 %v4344, %v4683
    %v4701 = vmul.f32 %v4346, %v4687
    %v4702 = vmul.f32 %v4672, %v4691
    %v4703 = vmul.f32 %v4674, %v4695
    %v4704 = vld [vmem:[#allocation10] sm:$0xf]
    %v4706 = vlaneseq
    %v4707 = vshrl.u32 %v4706, 7
    %v4708 = vsub.s32 0, %v4707
    %v4709 = vrot.slane %v4704, %v4708
    %v4710 = vlaneseq
    %v4711 = vshrl.u32 %v4710, 7
    %v4712 = vsub.s32 1, %v4711
    %v4713 = vrot.slane %v4704, %v4712
    %v4714 = vlaneseq
    %v4715 = vshrl.u32 %v4714, 7
    %v4716 = vsub.s32 2, %v4715
    %v4717 = vrot.slane %v4704, %v4716
    %v4718 = vlaneseq
    %v4719 = vshrl.u32 %v4718, 7
    %v4720 = vsub.s32 3, %v4719
    %v4721 = vrot.slane %v4704, %v4720
    %v4726 = vadd.f32 %v4700, %v4709
    %v4727 = vadd.f32 %v4701, %v4713
    %v4728 = vadd.f32 %v4702, %v4717
    %v4729 = vadd.f32 %v4703, %v4721
    %v4730 = vmax.f32 %v4726, 0.0
    %v4731 = vmax.f32 %v4727, 0.0
    %v4732 = vmax.f32 %v4728, 0.0
    %v4733 = vmax.f32 %v4729, 0.0
    %v4734 = vpack.c.bf16 %v4730, %v4730
    %v4735 = vpack.c.bf16 %v4731, %v4731
    %v4736 = vpack.c.bf16 %v4732, %v4732
    %v4737 = vpack.c.bf16 %v4733, %v4733
    %v4738 = vld [vmem:[#allocation12] sm:$0xff]
    %v4739 = vld [vmem:[#allocation12 + $0x8] sm:$0xff]
    %v4740 = vld [vmem:[#allocation12 + $0x10] sm:$0xff]
    %v4741 = vld [vmem:[#allocation12 + $0x18] sm:$0xff]
    %v4742 = vld [vmem:[#allocation12 + $0x20] sm:$0xff]
    %v4743 = vld [vmem:[#allocation12 + $0x28] sm:$0xff]
    %v4744 = vld [vmem:[#allocation12 + $0x30] sm:$0xff]
    %v4745 = vld [vmem:[#allocation12 + $0x38] sm:$0xff]
    %v4746 = vld [vmem:[#allocation12 + $0x40] sm:$0xff]
    %v4747 = vld [vmem:[#allocation12 + $0x48] sm:$0xff]
    %v4748 = vld [vmem:[#allocation12 + $0x50] sm:$0xff]
    %v4749 = vld [vmem:[#allocation12 + $0x58] sm:$0xff]
    %v4750 = vld [vmem:[#allocation12 + $0x60] sm:$0xff]
    %v4751 = vld [vmem:[#allocation12 + $0x68] sm:$0xff]
    %v4752 = vld [vmem:[#allocation12 + $0x70] sm:$0xff]
    %v4753 = vld [vmem:[#allocation12 + $0x78] sm:$0xff]
    %v4754 = vld [vmem:[#allocation12 + $0x80] sm:$0xff]
    %v4755 = vld [vmem:[#allocation12 + $0x88] sm:$0xff]
    %v4756 = vld [vmem:[#allocation12 + $0x90] sm:$0xff]
    %v4757 = vld [vmem:[#allocation12 + $0x98] sm:$0xff]
    %v4758 = vld [vmem:[#allocation12 + $0xa0] sm:$0xff]
    %v4759 = vld [vmem:[#allocation12 + $0xa8] sm:$0xff]
    %v4760 = vld [vmem:[#allocation12 + $0xb0] sm:$0xff]
    %v4761 = vld [vmem:[#allocation12 + $0xb8] sm:$0xff]
    %v4762 = vld [vmem:[#allocation12 + $0xc0] sm:$0xff]
    %v4763 = vld [vmem:[#allocation12 + $0xc8] sm:$0xff]
    %v4764 = vld [vmem:[#allocation12 + $0xd0] sm:$0xff]
    %v4765 = vld [vmem:[#allocation12 + $0xd8] sm:$0xff]
    %v4766 = vld [vmem:[#allocation12 + $0xe0] sm:$0xff]
    %v4767 = vld [vmem:[#allocation12 + $0xe8] sm:$0xff]
    %v4768 = vld [vmem:[#allocation12 + $0xf0] sm:$0xff]
    %v4769 = vld [vmem:[#allocation12 + $0xf8] sm:$0xff]
    %v4770 = vld [vmem:[#allocation12 + $0x100] sm:$0xff]
    %v4771 = vld [vmem:[#allocation12 + $0x108] sm:$0xff]
    %v4772 = vld [vmem:[#allocation12 + $0x110] sm:$0xff]
    %v4773 = vld [vmem:[#allocation12 + $0x118] sm:$0xff]
    %v4774 = vld [vmem:[#allocation12 + $0x120] sm:$0xff]
    %v4775 = vld [vmem:[#allocation12 + $0x128] sm:$0xff]
    %v4776 = vld [vmem:[#allocation12 + $0x130] sm:$0xff]
    %v4777 = vld [vmem:[#allocation12 + $0x138] sm:$0xff]
    %v4778 = vld [vmem:[#allocation12 + $0x140] sm:$0xff]
    %v4779 = vld [vmem:[#allocation12 + $0x148] sm:$0xff]
    %v4780 = vld [vmem:[#allocation12 + $0x150] sm:$0xff]
    %v4781 = vld [vmem:[#allocation12 + $0x158] sm:$0xff]
    %v4782 = vld [vmem:[#allocation12 + $0x160] sm:$0xff]
    %v4783 = vld [vmem:[#allocation12 + $0x168] sm:$0xff]
    %v4784 = vld [vmem:[#allocation12 + $0x170] sm:$0xff]
    %v4785 = vld [vmem:[#allocation12 + $0x178] sm:$0xff]
    %v4786 = vld [vmem:[#allocation12 + $0x180] sm:$0xff]
    %v4787 = vld [vmem:[#allocation12 + $0x188] sm:$0xff]
    %v4788 = vld [vmem:[#allocation12 + $0x190] sm:$0xff]
    %v4789 = vld [vmem:[#allocation12 + $0x198] sm:$0xff]
    %v4790 = vld [vmem:[#allocation12 + $0x1a0] sm:$0xff]
    %v4791 = vld [vmem:[#allocation12 + $0x1a8] sm:$0xff]
    %v4792 = vld [vmem:[#allocation12 + $0x1b0] sm:$0xff]
    %v4793 = vld [vmem:[#allocation12 + $0x1b8] sm:$0xff]
    %v4794 = vld [vmem:[#allocation12 + $0x1c0] sm:$0xff]
    %v4795 = vld [vmem:[#allocation12 + $0x1c8] sm:$0xff]
    %v4796 = vld [vmem:[#allocation12 + $0x1d0] sm:$0xff]
    %v4797 = vld [vmem:[#allocation12 + $0x1d8] sm:$0xff]
    %v4798 = vld [vmem:[#allocation12 + $0x1e0] sm:$0xff]
    %v4799 = vld [vmem:[#allocation12 + $0x1e8] sm:$0xff]
    %v4800 = vld [vmem:[#allocation12 + $0x1f0] sm:$0xff]
    %v4801 = vld [vmem:[#allocation12 + $0x1f8] sm:$0xff]
    %v4802 = vld [vmem:[#allocation12 + $0x200] sm:$0xff]
    %v4803 = vld [vmem:[#allocation12 + $0x208] sm:$0xff]
    %v4804 = vld [vmem:[#allocation12 + $0x210] sm:$0xff]
    %v4805 = vld [vmem:[#allocation12 + $0x218] sm:$0xff]
    %v4806 = vld [vmem:[#allocation12 + $0x220] sm:$0xff]
    %v4807 = vld [vmem:[#allocation12 + $0x228] sm:$0xff]
    %v4808 = vld [vmem:[#allocation12 + $0x230] sm:$0xff]
    %v4809 = vld [vmem:[#allocation12 + $0x238] sm:$0xff]
    %v4810 = vld [vmem:[#allocation12 + $0x240] sm:$0xff]
    %v4811 = vld [vmem:[#allocation12 + $0x248] sm:$0xff]
    %v4812 = vld [vmem:[#allocation12 + $0x250] sm:$0xff]
    %v4813 = vld [vmem:[#allocation12 + $0x258] sm:$0xff]
    %v4814 = vld [vmem:[#allocation12 + $0x260] sm:$0xff]
    %v4815 = vld [vmem:[#allocation12 + $0x268] sm:$0xff]
    %v4816 = vld [vmem:[#allocation12 + $0x270] sm:$0xff]
    %v4817 = vld [vmem:[#allocation12 + $0x278] sm:$0xff]
    %v4818 = vld [vmem:[#allocation12 + $0x280] sm:$0xff]
    %v4819 = vld [vmem:[#allocation12 + $0x288] sm:$0xff]
    %v4820 = vld [vmem:[#allocation12 + $0x290] sm:$0xff]
    %v4821 = vld [vmem:[#allocation12 + $0x298] sm:$0xff]
    %v4822 = vld [vmem:[#allocation12 + $0x2a0] sm:$0xff]
    %v4823 = vld [vmem:[#allocation12 + $0x2a8] sm:$0xff]
    %v4824 = vld [vmem:[#allocation12 + $0x2b0] sm:$0xff]
    %v4825 = vld [vmem:[#allocation12 + $0x2b8] sm:$0xff]
    %v4826 = vld [vmem:[#allocation12 + $0x2c0] sm:$0xff]
    %v4827 = vld [vmem:[#allocation12 + $0x2c8] sm:$0xff]
    %v4828 = vld [vmem:[#allocation12 + $0x2d0] sm:$0xff]
    %v4829 = vld [vmem:[#allocation12 + $0x2d8] sm:$0xff]
    %v4830 = vld [vmem:[#allocation12 + $0x2e0] sm:$0xff]
    %v4831 = vld [vmem:[#allocation12 + $0x2e8] sm:$0xff]
    %v4832 = vld [vmem:[#allocation12 + $0x2f0] sm:$0xff]
    %v4833 = vld [vmem:[#allocation12 + $0x2f8] sm:$0xff]
    %v4834 = vld [vmem:[#allocation12 + $0x300] sm:$0xff]
    %v4835 = vld [vmem:[#allocation12 + $0x308] sm:$0xff]
    %v4836 = vld [vmem:[#allocation12 + $0x310] sm:$0xff]
    %v4837 = vld [vmem:[#allocation12 + $0x318] sm:$0xff]
    %v4838 = vld [vmem:[#allocation12 + $0x320] sm:$0xff]
    %v4839 = vld [vmem:[#allocation12 + $0x328] sm:$0xff]
    %v4840 = vld [vmem:[#allocation12 + $0x330] sm:$0xff]
    %v4841 = vld [vmem:[#allocation12 + $0x338] sm:$0xff]
    %v4842 = vld [vmem:[#allocation12 + $0x340] sm:$0xff]
    %v4843 = vld [vmem:[#allocation12 + $0x348] sm:$0xff]
    %v4844 = vld [vmem:[#allocation12 + $0x350] sm:$0xff]
    %v4845 = vld [vmem:[#allocation12 + $0x358] sm:$0xff]
    %v4846 = vld [vmem:[#allocation12 + $0x360] sm:$0xff]
    %v4847 = vld [vmem:[#allocation12 + $0x368] sm:$0xff]
    %v4848 = vld [vmem:[#allocation12 + $0x370] sm:$0xff]
    %v4849 = vld [vmem:[#allocation12 + $0x378] sm:$0xff]
    %v4850 = vld [vmem:[#allocation12 + $0x380] sm:$0xff]
    %v4851 = vld [vmem:[#allocation12 + $0x388] sm:$0xff]
    %v4852 = vld [vmem:[#allocation12 + $0x390] sm:$0xff]
    %v4853 = vld [vmem:[#allocation12 + $0x398] sm:$0xff]
    %v4854 = vld [vmem:[#allocation12 + $0x3a0] sm:$0xff]
    %v4855 = vld [vmem:[#allocation12 + $0x3a8] sm:$0xff]
    %v4856 = vld [vmem:[#allocation12 + $0x3b0] sm:$0xff]
    %v4857 = vld [vmem:[#allocation12 + $0x3b8] sm:$0xff]
    %v4858 = vld [vmem:[#allocation12 + $0x3c0] sm:$0xff]
    %v4859 = vld [vmem:[#allocation12 + $0x3c8] sm:$0xff]
    %v4860 = vld [vmem:[#allocation12 + $0x3d0] sm:$0xff]
    %v4861 = vld [vmem:[#allocation12 + $0x3d8] sm:$0xff]
    %v4862 = vld [vmem:[#allocation12 + $0x3e0] sm:$0xff]
    %v4863 = vld [vmem:[#allocation12 + $0x3e8] sm:$0xff]
    %v4864 = vld [vmem:[#allocation12 + $0x3f0] sm:$0xff]
    %v4865 = vld [vmem:[#allocation12 + $0x3f8] sm:$0xff]
    %v4994 = vunpack.c.l.b16 %v4738
    %v4995 = vunpack.c.h.b16 %v4738
    %v4996 = vunpack.c.l.b16 %v4739
    %v4997 = vunpack.c.h.b16 %v4739
    %v4998 = vunpack.c.l.b16 %v4740
    %v4999 = vunpack.c.h.b16 %v4740
    %v5000 = vunpack.c.l.b16 %v4741
    %v5001 = vunpack.c.h.b16 %v4741
    %v5002 = vunpack.c.l.b16 %v4742
    %v5003 = vunpack.c.h.b16 %v4742
    %v5004 = vunpack.c.l.b16 %v4743
    %v5005 = vunpack.c.h.b16 %v4743
    %v5006 = vunpack.c.l.b16 %v4744
    %v5007 = vunpack.c.h.b16 %v4744
    %v5008 = vunpack.c.l.b16 %v4745
    %v5009 = vunpack.c.h.b16 %v4745
    %v5010 = vunpack.c.l.b16 %v4746
    %v5011 = vunpack.c.h.b16 %v4746
    %v5012 = vunpack.c.l.b16 %v4747
    %v5013 = vunpack.c.h.b16 %v4747
    %v5014 = vunpack.c.l.b16 %v4748
    %v5015 = vunpack.c.h.b16 %v4748
    %v5016 = vunpack.c.l.b16 %v4749
    %v5017 = vunpack.c.h.b16 %v4749
    %v5018 = vunpack.c.l.b16 %v4750
    %v5019 = vunpack.c.h.b16 %v4750
    %v5020 = vunpack.c.l.b16 %v4751
    %v5021 = vunpack.c.h.b16 %v4751
    %v5022 = vunpack.c.l.b16 %v4752
    %v5023 = vunpack.c.h.b16 %v4752
    %v5024 = vunpack.c.l.b16 %v4753
    %v5025 = vunpack.c.h.b16 %v4753
    %v5026 = vunpack.c.l.b16 %v4754
    %v5027 = vunpack.c.h.b16 %v4754
    %v5028 = vunpack.c.l.b16 %v4755
    %v5029 = vunpack.c.h.b16 %v4755
    %v5030 = vunpack.c.l.b16 %v4756
    %v5031 = vunpack.c.h.b16 %v4756
    %v5032 = vunpack.c.l.b16 %v4757
    %v5033 = vunpack.c.h.b16 %v4757
    %v5034 = vunpack.c.l.b16 %v4758
    %v5035 = vunpack.c.h.b16 %v4758
    %v5036 = vunpack.c.l.b16 %v4759
    %v5037 = vunpack.c.h.b16 %v4759
    %v5038 = vunpack.c.l.b16 %v4760
    %v5039 = vunpack.c.h.b16 %v4760
    %v5040 = vunpack.c.l.b16 %v4761
    %v5041 = vunpack.c.h.b16 %v4761
    %v5042 = vunpack.c.l.b16 %v4762
    %v5043 = vunpack.c.h.b16 %v4762
    %v5044 = vunpack.c.l.b16 %v4763
    %v5045 = vunpack.c.h.b16 %v4763
    %v5046 = vunpack.c.l.b16 %v4764
    %v5047 = vunpack.c.h.b16 %v4764
    %v5048 = vunpack.c.l.b16 %v4765
    %v5049 = vunpack.c.h.b16 %v4765
    %v5050 = vunpack.c.l.b16 %v4766
    %v5051 = vunpack.c.h.b16 %v4766
    %v5052 = vunpack.c.l.b16 %v4767
    %v5053 = vunpack.c.h.b16 %v4767
    %v5054 = vunpack.c.l.b16 %v4768
    %v5055 = vunpack.c.h.b16 %v4768
    %v5056 = vunpack.c.l.b16 %v4769
    %v5057 = vunpack.c.h.b16 %v4769
    %v5058 = vunpack.c.l.b16 %v4770
    %v5059 = vunpack.c.h.b16 %v4770
    %v5060 = vunpack.c.l.b16 %v4771
    %v5061 = vunpack.c.h.b16 %v4771
    %v5062 = vunpack.c.l.b16 %v4772
    %v5063 = vunpack.c.h.b16 %v4772
    %v5064 = vunpack.c.l.b16 %v4773
    %v5065 = vunpack.c.h.b16 %v4773
    %v5066 = vunpack.c.l.b16 %v4774
    %v5067 = vunpack.c.h.b16 %v4774
    %v5068 = vunpack.c.l.b16 %v4775
    %v5069 = vunpack.c.h.b16 %v4775
    %v5070 = vunpack.c.l.b16 %v4776
    %v5071 = vunpack.c.h.b16 %v4776
    %v5072 = vunpack.c.l.b16 %v4777
    %v5073 = vunpack.c.h.b16 %v4777
    %v5074 = vunpack.c.l.b16 %v4778
    %v5075 = vunpack.c.h.b16 %v4778
    %v5076 = vunpack.c.l.b16 %v4779
    %v5077 = vunpack.c.h.b16 %v4779
    %v5078 = vunpack.c.l.b16 %v4780
    %v5079 = vunpack.c.h.b16 %v4780
    %v5080 = vunpack.c.l.b16 %v4781
    %v5081 = vunpack.c.h.b16 %v4781
    %v5082 = vunpack.c.l.b16 %v4782
    %v5083 = vunpack.c.h.b16 %v4782
    %v5084 = vunpack.c.l.b16 %v4783
    %v5085 = vunpack.c.h.b16 %v4783
    %v5086 = vunpack.c.l.b16 %v4784
    %v5087 = vunpack.c.h.b16 %v4784
    %v5088 = vunpack.c.l.b16 %v4785
    %v5089 = vunpack.c.h.b16 %v4785
    %v5090 = vunpack.c.l.b16 %v4786
    %v5091 = vunpack.c.h.b16 %v4786
    %v5092 = vunpack.c.l.b16 %v4787
    %v5093 = vunpack.c.h.b16 %v4787
    %v5094 = vunpack.c.l.b16 %v4788
    %v5095 = vunpack.c.h.b16 %v4788
    %v5096 = vunpack.c.l.b16 %v4789
    %v5097 = vunpack.c.h.b16 %v4789
    %v5098 = vunpack.c.l.b16 %v4790
    %v5099 = vunpack.c.h.b16 %v4790
    %v5100 = vunpack.c.l.b16 %v4791
    %v5101 = vunpack.c.h.b16 %v4791
    %v5102 = vunpack.c.l.b16 %v4792
    %v5103 = vunpack.c.h.b16 %v4792
    %v5104 = vunpack.c.l.b16 %v4793
    %v5105 = vunpack.c.h.b16 %v4793
    %v5106 = vunpack.c.l.b16 %v4794
    %v5107 = vunpack.c.h.b16 %v4794
    %v5108 = vunpack.c.l.b16 %v4795
    %v5109 = vunpack.c.h.b16 %v4795
    %v5110 = vunpack.c.l.b16 %v4796
    %v5111 = vunpack.c.h.b16 %v4796
    %v5112 = vunpack.c.l.b16 %v4797
    %v5113 = vunpack.c.h.b16 %v4797
    %v5114 = vunpack.c.l.b16 %v4798
    %v5115 = vunpack.c.h.b16 %v4798
    %v5116 = vunpack.c.l.b16 %v4799
    %v5117 = vunpack.c.h.b16 %v4799
    %v5118 = vunpack.c.l.b16 %v4800
    %v5119 = vunpack.c.h.b16 %v4800
    %v5120 = vunpack.c.l.b16 %v4801
    %v5121 = vunpack.c.h.b16 %v4801
    %v5122 = vunpack.c.l.b16 %v4802
    %v5123 = vunpack.c.h.b16 %v4802
    %v5124 = vunpack.c.l.b16 %v4803
    %v5125 = vunpack.c.h.b16 %v4803
    %v5126 = vunpack.c.l.b16 %v4804
    %v5127 = vunpack.c.h.b16 %v4804
    %v5128 = vunpack.c.l.b16 %v4805
    %v5129 = vunpack.c.h.b16 %v4805
    %v5130 = vunpack.c.l.b16 %v4806
    %v5131 = vunpack.c.h.b16 %v4806
    %v5132 = vunpack.c.l.b16 %v4807
    %v5133 = vunpack.c.h.b16 %v4807
    %v5134 = vunpack.c.l.b16 %v4808
    %v5135 = vunpack.c.h.b16 %v4808
    %v5136 = vunpack.c.l.b16 %v4809
    %v5137 = vunpack.c.h.b16 %v4809
    %v5138 = vunpack.c.l.b16 %v4810
    %v5139 = vunpack.c.h.b16 %v4810
    %v5140 = vunpack.c.l.b16 %v4811
    %v5141 = vunpack.c.h.b16 %v4811
    %v5142 = vunpack.c.l.b16 %v4812
    %v5143 = vunpack.c.h.b16 %v4812
    %v5144 = vunpack.c.l.b16 %v4813
    %v5145 = vunpack.c.h.b16 %v4813
    %v5146 = vunpack.c.l.b16 %v4814
    %v5147 = vunpack.c.h.b16 %v4814
    %v5148 = vunpack.c.l.b16 %v4815
    %v5149 = vunpack.c.h.b16 %v4815
    %v5150 = vunpack.c.l.b16 %v4816
    %v5151 = vunpack.c.h.b16 %v4816
    %v5152 = vunpack.c.l.b16 %v4817
    %v5153 = vunpack.c.h.b16 %v4817
    %v5154 = vunpack.c.l.b16 %v4818
    %v5155 = vunpack.c.h.b16 %v4818
    %v5156 = vunpack.c.l.b16 %v4819
    %v5157 = vunpack.c.h.b16 %v4819
    %v5158 = vunpack.c.l.b16 %v4820
    %v5159 = vunpack.c.h.b16 %v4820
    %v5160 = vunpack.c.l.b16 %v4821
    %v5161 = vunpack.c.h.b16 %v4821
    %v5162 = vunpack.c.l.b16 %v4822
    %v5163 = vunpack.c.h.b16 %v4822
    %v5164 = vunpack.c.l.b16 %v4823
    %v5165 = vunpack.c.h.b16 %v4823
    %v5166 = vunpack.c.l.b16 %v4824
    %v5167 = vunpack.c.h.b16 %v4824
    %v5168 = vunpack.c.l.b16 %v4825
    %v5169 = vunpack.c.h.b16 %v4825
    %v5170 = vunpack.c.l.b16 %v4826
    %v5171 = vunpack.c.h.b16 %v4826
    %v5172 = vunpack.c.l.b16 %v4827
    %v5173 = vunpack.c.h.b16 %v4827
    %v5174 = vunpack.c.l.b16 %v4828
    %v5175 = vunpack.c.h.b16 %v4828
    %v5176 = vunpack.c.l.b16 %v4829
    %v5177 = vunpack.c.h.b16 %v4829
    %v5178 = vunpack.c.l.b16 %v4830
    %v5179 = vunpack.c.h.b16 %v4830
    %v5180 = vunpack.c.l.b16 %v4831
    %v5181 = vunpack.c.h.b16 %v4831
    %v5182 = vunpack.c.l.b16 %v4832
    %v5183 = vunpack.c.h.b16 %v4832
    %v5184 = vunpack.c.l.b16 %v4833
    %v5185 = vunpack.c.h.b16 %v4833
    %v5186 = vunpack.c.l.b16 %v4834
    %v5187 = vunpack.c.h.b16 %v4834
    %v5188 = vunpack.c.l.b16 %v4835
    %v5189 = vunpack.c.h.b16 %v4835
    %v5190 = vunpack.c.l.b16 %v4836
    %v5191 = vunpack.c.h.b16 %v4836
    %v5192 = vunpack.c.l.b16 %v4837
    %v5193 = vunpack.c.h.b16 %v4837
    %v5194 = vunpack.c.l.b16 %v4838
    %v5195 = vunpack.c.h.b16 %v4838
    %v5196 = vunpack.c.l.b16 %v4839
    %v5197 = vunpack.c.h.b16 %v4839
    %v5198 = vunpack.c.l.b16 %v4840
    %v5199 = vunpack.c.h.b16 %v4840
    %v5200 = vunpack.c.l.b16 %v4841
    %v5201 = vunpack.c.h.b16 %v4841
    %v5202 = vunpack.c.l.b16 %v4842
    %v5203 = vunpack.c.h.b16 %v4842
    %v5204 = vunpack.c.l.b16 %v4843
    %v5205 = vunpack.c.h.b16 %v4843
    %v5206 = vunpack.c.l.b16 %v4844
    %v5207 = vunpack.c.h.b16 %v4844
    %v5208 = vunpack.c.l.b16 %v4845
    %v5209 = vunpack.c.h.b16 %v4845
    %v5210 = vunpack.c.l.b16 %v4846
    %v5211 = vunpack.c.h.b16 %v4846
    %v5212 = vunpack.c.l.b16 %v4847
    %v5213 = vunpack.c.h.b16 %v4847
    %v5214 = vunpack.c.l.b16 %v4848
    %v5215 = vunpack.c.h.b16 %v4848
    %v5216 = vunpack.c.l.b16 %v4849
    %v5217 = vunpack.c.h.b16 %v4849
    %v5218 = vunpack.c.l.b16 %v4850
    %v5219 = vunpack.c.h.b16 %v4850
    %v5220 = vunpack.c.l.b16 %v4851
    %v5221 = vunpack.c.h.b16 %v4851
    %v5222 = vunpack.c.l.b16 %v4852
    %v5223 = vunpack.c.h.b16 %v4852
    %v5224 = vunpack.c.l.b16 %v4853
    %v5225 = vunpack.c.h.b16 %v4853
    %v5226 = vunpack.c.l.b16 %v4854
    %v5227 = vunpack.c.h.b16 %v4854
    %v5228 = vunpack.c.l.b16 %v4855
    %v5229 = vunpack.c.h.b16 %v4855
    %v5230 = vunpack.c.l.b16 %v4856
    %v5231 = vunpack.c.h.b16 %v4856
    %v5232 = vunpack.c.l.b16 %v4857
    %v5233 = vunpack.c.h.b16 %v4857
    %v5234 = vunpack.c.l.b16 %v4858
    %v5235 = vunpack.c.h.b16 %v4858
    %v5236 = vunpack.c.l.b16 %v4859
    %v5237 = vunpack.c.h.b16 %v4859
    %v5238 = vunpack.c.l.b16 %v4860
    %v5239 = vunpack.c.h.b16 %v4860
    %v5240 = vunpack.c.l.b16 %v4861
    %v5241 = vunpack.c.h.b16 %v4861
    %v5242 = vunpack.c.l.b16 %v4862
    %v5243 = vunpack.c.h.b16 %v4862
    %v5244 = vunpack.c.l.b16 %v4863
    %v5245 = vunpack.c.h.b16 %v4863
    %v5246 = vunpack.c.l.b16 %v4864
    %v5247 = vunpack.c.h.b16 %v4864
    %v5248 = vunpack.c.l.b16 %v4865
    %v5249 = vunpack.c.h.b16 %v4865
    %v5250 = vpack.c.b16 %v4998, %v4994
    %v5251 = vpack.c.b16 %v4999, %v4995
    %v5252 = vpack.c.b16 %v5000, %v4996
    %v5253 = vpack.c.b16 %v5001, %v4997
    %v5254 = vpack.c.b16 %v5006, %v5002
    %v5255 = vpack.c.b16 %v5007, %v5003
    %v5256 = vpack.c.b16 %v5008, %v5004
    %v5257 = vpack.c.b16 %v5009, %v5005
    %v5258 = vpack.c.b16 %v5014, %v5010
    %v5259 = vpack.c.b16 %v5015, %v5011
    %v5260 = vpack.c.b16 %v5016, %v5012
    %v5261 = vpack.c.b16 %v5017, %v5013
    %v5262 = vpack.c.b16 %v5022, %v5018
    %v5263 = vpack.c.b16 %v5023, %v5019
    %v5264 = vpack.c.b16 %v5024, %v5020
    %v5265 = vpack.c.b16 %v5025, %v5021
    %v5266 = vpack.c.b16 %v5030, %v5026
    %v5267 = vpack.c.b16 %v5031, %v5027
    %v5268 = vpack.c.b16 %v5032, %v5028
    %v5269 = vpack.c.b16 %v5033, %v5029
    %v5270 = vpack.c.b16 %v5038, %v5034
    %v5271 = vpack.c.b16 %v5039, %v5035
    %v5272 = vpack.c.b16 %v5040, %v5036
    %v5273 = vpack.c.b16 %v5041, %v5037
    %v5274 = vpack.c.b16 %v5046, %v5042
    %v5275 = vpack.c.b16 %v5047, %v5043
    %v5276 = vpack.c.b16 %v5048, %v5044
    %v5277 = vpack.c.b16 %v5049, %v5045
    %v5278 = vpack.c.b16 %v5054, %v5050
    %v5279 = vpack.c.b16 %v5055, %v5051
    %v5280 = vpack.c.b16 %v5056, %v5052
    %v5281 = vpack.c.b16 %v5057, %v5053
    %v5282 = vpack.c.b16 %v5062, %v5058
    %v5283 = vpack.c.b16 %v5063, %v5059
    %v5284 = vpack.c.b16 %v5064, %v5060
    %v5285 = vpack.c.b16 %v5065, %v5061
    %v5286 = vpack.c.b16 %v5070, %v5066
    %v5287 = vpack.c.b16 %v5071, %v5067
    %v5288 = vpack.c.b16 %v5072, %v5068
    %v5289 = vpack.c.b16 %v5073, %v5069
    %v5290 = vpack.c.b16 %v5078, %v5074
    %v5291 = vpack.c.b16 %v5079, %v5075
    %v5292 = vpack.c.b16 %v5080, %v5076
    %v5293 = vpack.c.b16 %v5081, %v5077
    %v5294 = vpack.c.b16 %v5086, %v5082
    %v5295 = vpack.c.b16 %v5087, %v5083
    %v5296 = vpack.c.b16 %v5088, %v5084
    %v5297 = vpack.c.b16 %v5089, %v5085
    %v5298 = vpack.c.b16 %v5094, %v5090
    %v5299 = vpack.c.b16 %v5095, %v5091
    %v5300 = vpack.c.b16 %v5096, %v5092
    %v5301 = vpack.c.b16 %v5097, %v5093
    %v5302 = vpack.c.b16 %v5102, %v5098
    %v5303 = vpack.c.b16 %v5103, %v5099
    %v5304 = vpack.c.b16 %v5104, %v5100
    %v5305 = vpack.c.b16 %v5105, %v5101
    %v5306 = vpack.c.b16 %v5110, %v5106
    %v5307 = vpack.c.b16 %v5111, %v5107
    %v5308 = vpack.c.b16 %v5112, %v5108
    %v5309 = vpack.c.b16 %v5113, %v5109
    %v5310 = vpack.c.b16 %v5118, %v5114
    %v5311 = vpack.c.b16 %v5119, %v5115
    %v5312 = vpack.c.b16 %v5120, %v5116
    %v5313 = vpack.c.b16 %v5121, %v5117
    %v5314 = vpack.c.b16 %v5126, %v5122
    %v5315 = vpack.c.b16 %v5127, %v5123
    %v5316 = vpack.c.b16 %v5128, %v5124
    %v5317 = vpack.c.b16 %v5129, %v5125
    %v5318 = vpack.c.b16 %v5134, %v5130
    %v5319 = vpack.c.b16 %v5135, %v5131
    %v5320 = vpack.c.b16 %v5136, %v5132
    %v5321 = vpack.c.b16 %v5137, %v5133
    %v5322 = vpack.c.b16 %v5142, %v5138
    %v5323 = vpack.c.b16 %v5143, %v5139
    %v5324 = vpack.c.b16 %v5144, %v5140
    %v5325 = vpack.c.b16 %v5145, %v5141
    %v5326 = vpack.c.b16 %v5150, %v5146
    %v5327 = vpack.c.b16 %v5151, %v5147
    %v5328 = vpack.c.b16 %v5152, %v5148
    %v5329 = vpack.c.b16 %v5153, %v5149
    %v5330 = vpack.c.b16 %v5158, %v5154
    %v5331 = vpack.c.b16 %v5159, %v5155
    %v5332 = vpack.c.b16 %v5160, %v5156
    %v5333 = vpack.c.b16 %v5161, %v5157
    %v5334 = vpack.c.b16 %v5166, %v5162
    %v5335 = vpack.c.b16 %v5167, %v5163
    %v5336 = vpack.c.b16 %v5168, %v5164
    %v5337 = vpack.c.b16 %v5169, %v5165
    %v5338 = vpack.c.b16 %v5174, %v5170
    %v5339 = vpack.c.b16 %v5175, %v5171
    %v5340 = vpack.c.b16 %v5176, %v5172
    %v5341 = vpack.c.b16 %v5177, %v5173
    %v5342 = vpack.c.b16 %v5182, %v5178
    %v5343 = vpack.c.b16 %v5183, %v5179
    %v5344 = vpack.c.b16 %v5184, %v5180
    %v5345 = vpack.c.b16 %v5185, %v5181
    %v5346 = vpack.c.b16 %v5190, %v5186
    %v5347 = vpack.c.b16 %v5191, %v5187
    %v5348 = vpack.c.b16 %v5192, %v5188
    %v5349 = vpack.c.b16 %v5193, %v5189
    %v5350 = vpack.c.b16 %v5198, %v5194
    %v5351 = vpack.c.b16 %v5199, %v5195
    %v5352 = vpack.c.b16 %v5200, %v5196
    %v5353 = vpack.c.b16 %v5201, %v5197
    %v5354 = vpack.c.b16 %v5206, %v5202
    %v5355 = vpack.c.b16 %v5207, %v5203
    %v5356 = vpack.c.b16 %v5208, %v5204
    %v5357 = vpack.c.b16 %v5209, %v5205
    %v5358 = vpack.c.b16 %v5214, %v5210
    %v5359 = vpack.c.b16 %v5215, %v5211
    %v5360 = vpack.c.b16 %v5216, %v5212
    %v5361 = vpack.c.b16 %v5217, %v5213
    %v5362 = vpack.c.b16 %v5222, %v5218
    %v5363 = vpack.c.b16 %v5223, %v5219
    %v5364 = vpack.c.b16 %v5224, %v5220
    %v5365 = vpack.c.b16 %v5225, %v5221
    %v5366 = vpack.c.b16 %v5230, %v5226
    %v5367 = vpack.c.b16 %v5231, %v5227
    %v5368 = vpack.c.b16 %v5232, %v5228
    %v5369 = vpack.c.b16 %v5233, %v5229
    %v5370 = vpack.c.b16 %v5238, %v5234
    %v5371 = vpack.c.b16 %v5239, %v5235
    %v5372 = vpack.c.b16 %v5240, %v5236
    %v5373 = vpack.c.b16 %v5241, %v5237
    %v5374 = vpack.c.b16 %v5246, %v5242
    %v5375 = vpack.c.b16 %v5247, %v5243
    %v5376 = vpack.c.b16 %v5248, %v5244
    %v5377 = vpack.c.b16 %v5249, %v5245
    %5506 = vmatprep.subr.bf16.mxu0 %v5251
    %5507 = vmatpush1.bf16.msra.mxu0 %v5250
    %5508 = vmatprep.subr.bf16.mxu0 %v5255
    %5509 = vmatpush1.bf16.msra.mxu0 %v5254
    %5510 = vmatprep.subr.bf16.mxu0 %v5259
    %5511 = vmatpush1.bf16.msra.mxu0 %v5258
    %5512 = vmatprep.subr.bf16.mxu0 %v5263
    %5513 = vmatpush1.bf16.msra.mxu0 %v5262
    %5514 = vmatprep.subr.bf16.mxu0 %v5267
    %5515 = vmatpush1.bf16.msra.mxu0 %v5266
    %5516 = vmatprep.subr.bf16.mxu0 %v5271
    %5517 = vmatpush1.bf16.msra.mxu0 %v5270
    %5518 = vmatprep.subr.bf16.mxu0 %v5275
    %5519 = vmatpush1.bf16.msra.mxu0 %v5274
    %5520 = vmatprep.subr.bf16.mxu0 %v5279
    %5521 = vmatpush1.bf16.msra.mxu0 %v5278
    %5522 = vmatprep.subr.bf16.mxu0 %v5283
    %5523 = vmatpush1.bf16.msra.mxu0 %v5282
    %5524 = vmatprep.subr.bf16.mxu0 %v5287
    %5525 = vmatpush1.bf16.msra.mxu0 %v5286
    %5526 = vmatprep.subr.bf16.mxu0 %v5291
    %5527 = vmatpush1.bf16.msra.mxu0 %v5290
    %5528 = vmatprep.subr.bf16.mxu0 %v5295
    %5529 = vmatpush1.bf16.msra.mxu0 %v5294
    %5530 = vmatprep.subr.bf16.mxu0 %v5299
    %5531 = vmatpush1.bf16.msra.mxu0 %v5298
    %5532 = vmatprep.subr.bf16.mxu0 %v5303
    %5533 = vmatpush1.bf16.msra.mxu0 %v5302
    %5534 = vmatprep.subr.bf16.mxu0 %v5307
    %5535 = vmatpush1.bf16.msra.mxu0 %v5306
    %5536 = vmatprep.subr.bf16.mxu0 %v5311
    %5537 = vmatpush1.bf16.msra.mxu0 %v5310
    %5538 = vmatprep.mubr.bf16.mxu0 %v4735
    %5539 = vmatmul.mubr.bf16.gmra.mrb[0].mxu0 %v4734
    %v5540 = vpop.f32.mrb[0].mxu0
    %v5541 = vadd.f32 0.0, %v5540
    %v5542 = vpop.f32.mrb[0].mxu0
    %v5543 = vadd.f32 0.0, %v5542
    %v5544 = vpop.f32.mrb[0].mxu0
    %v5545 = vpop.f32.mrb[0].mxu0
    %5546 = vdwg.mxu0
    %5547 = vmatprep.subr.bf16.mxu0 %v5315
    %5548 = vmatpush1.bf16.msra.mxu0 %v5314
    %5549 = vmatprep.subr.bf16.mxu0 %v5319
    %5550 = vmatpush1.bf16.msra.mxu0 %v5318
    %5551 = vmatprep.subr.bf16.mxu0 %v5323
    %5552 = vmatpush1.bf16.msra.mxu0 %v5322
    %5553 = vmatprep.subr.bf16.mxu0 %v5327
    %5554 = vmatpush1.bf16.msra.mxu0 %v5326
    %5555 = vmatprep.subr.bf16.mxu0 %v5331
    %5556 = vmatpush1.bf16.msra.mxu0 %v5330
    %5557 = vmatprep.subr.bf16.mxu0 %v5335
    %5558 = vmatpush1.bf16.msra.mxu0 %v5334
    %5559 = vmatprep.subr.bf16.mxu0 %v5339
    %5560 = vmatpush1.bf16.msra.mxu0 %v5338
    %5561 = vmatprep.subr.bf16.mxu0 %v5343
    %5562 = vmatpush1.bf16.msra.mxu0 %v5342
    %5563 = vmatprep.subr.bf16.mxu0 %v5347
    %5564 = vmatpush1.bf16.msra.mxu0 %v5346
    %5565 = vmatprep.subr.bf16.mxu0 %v5351
    %5566 = vmatpush1.bf16.msra.mxu0 %v5350
    %5567 = vmatprep.subr.bf16.mxu0 %v5355
    %5568 = vmatpush1.bf16.msra.mxu0 %v5354
    %5569 = vmatprep.subr.bf16.mxu0 %v5359
    %5570 = vmatpush1.bf16.msra.mxu0 %v5358
    %5571 = vmatprep.subr.bf16.mxu0 %v5363
    %5572 = vmatpush1.bf16.msra.mxu0 %v5362
    %5573 = vmatprep.subr.bf16.mxu0 %v5367
    %5574 = vmatpush1.bf16.msra.mxu0 %v5366
    %5575 = vmatprep.subr.bf16.mxu0 %v5371
    %5576 = vmatpush1.bf16.msra.mxu0 %v5370
    %5577 = vmatprep.subr.bf16.mxu0 %v5375
    %5578 = vmatpush1.bf16.msra.mxu0 %v5374
    %5579 = vmatprep.mubr.bf16.mxu0 %v4737
    %5580 = vmatmul.mubr.bf16.gmra.mrb[0].mxu0 %v4736
    %v5581 = vpop.f32.mrb[0].mxu0
    %v5582 = vadd.f32 %v5541, %v5581
    %v5583 = vpop.f32.mrb[0].mxu0
    %v5584 = vadd.f32 %v5543, %v5583
    %v5585 = vpop.f32.mrb[0].mxu0
    %v5586 = vpop.f32.mrb[0].mxu0
    %5587 = vdwg.mxu0
    %5588 = vmatprep.subr.bf16.mxu0 %v5253
    %5589 = vmatpush1.bf16.msra.mxu0 %v5252
    %5590 = vmatprep.subr.bf16.mxu0 %v5257
    %5591 = vmatpush1.bf16.msra.mxu0 %v5256
    %5592 = vmatprep.subr.bf16.mxu0 %v5261
    %5593 = vmatpush1.bf16.msra.mxu0 %v5260
    %5594 = vmatprep.subr.bf16.mxu0 %v5265
    %5595 = vmatpush1.bf16.msra.mxu0 %v5264
    %5596 = vmatprep.subr.bf16.mxu0 %v5269
    %5597 = vmatpush1.bf16.msra.mxu0 %v5268
    %5598 = vmatprep.subr.bf16.mxu0 %v5273
    %5599 = vmatpush1.bf16.msra.mxu0 %v5272
    %5600 = vmatprep.subr.bf16.mxu0 %v5277
    %5601 = vmatpush1.bf16.msra.mxu0 %v5276
    %5602 = vmatprep.subr.bf16.mxu0 %v5281
    %5603 = vmatpush1.bf16.msra.mxu0 %v5280
    %5604 = vmatprep.subr.bf16.mxu0 %v5285
    %5605 = vmatpush1.bf16.msra.mxu0 %v5284
    %5606 = vmatprep.subr.bf16.mxu0 %v5289
    %5607 = vmatpush1.bf16.msra.mxu0 %v5288
    %5608 = vmatprep.subr.bf16.mxu0 %v5293
    %5609 = vmatpush1.bf16.msra.mxu0 %v5292
    %5610 = vmatprep.subr.bf16.mxu0 %v5297
    %5611 = vmatpush1.bf16.msra.mxu0 %v5296
    %5612 = vmatprep.subr.bf16.mxu0 %v5301
    %5613 = vmatpush1.bf16.msra.mxu0 %v5300
    %5614 = vmatprep.subr.bf16.mxu0 %v5305
    %5615 = vmatpush1.bf16.msra.mxu0 %v5304
    %5616 = vmatprep.subr.bf16.mxu0 %v5309
    %5617 = vmatpush1.bf16.msra.mxu0 %v5308
    %5618 = vmatprep.subr.bf16.mxu0 %v5313
    %5619 = vmatpush1.bf16.msra.mxu0 %v5312
    %5620 = vmatprep.mubr.bf16.mxu0 %v4735
    %5621 = vmatmul.mubr.bf16.gmra.mrb[0].mxu0 %v4734
    %v5622 = vpop.f32.mrb[0].mxu0
    %v5623 = vadd.f32 0.0, %v5622
    %v5624 = vpop.f32.mrb[0].mxu0
    %v5625 = vadd.f32 0.0, %v5624
    %v5626 = vpop.f32.mrb[0].mxu0
    %v5627 = vpop.f32.mrb[0].mxu0
    %5628 = vdwg.mxu0
    %5629 = vmatprep.subr.bf16.mxu0 %v5317
    %5630 = vmatpush1.bf16.msra.mxu0 %v5316
    %5631 = vmatprep.subr.bf16.mxu0 %v5321
    %5632 = vmatpush1.bf16.msra.mxu0 %v5320
    %5633 = vmatprep.subr.bf16.mxu0 %v5325
    %5634 = vmatpush1.bf16.msra.mxu0 %v5324
    %5635 = vmatprep.subr.bf16.mxu0 %v5329
    %5636 = vmatpush1.bf16.msra.mxu0 %v5328
    %5637 = vmatprep.subr.bf16.mxu0 %v5333
    %5638 = vmatpush1.bf16.msra.mxu0 %v5332
    %5639 = vmatprep.subr.bf16.mxu0 %v5337
    %5640 = vmatpush1.bf16.msra.mxu0 %v5336
    %5641 = vmatprep.subr.bf16.mxu0 %v5341
    %5642 = vmatpush1.bf16.msra.mxu0 %v5340
    %5643 = vmatprep.subr.bf16.mxu0 %v5345
    %5644 = vmatpush1.bf16.msra.mxu0 %v5344
    %5645 = vmatprep.subr.bf16.mxu0 %v5349
    %5646 = vmatpush1.bf16.msra.mxu0 %v5348
    %5647 = vmatprep.subr.bf16.mxu0 %v5353
    %5648 = vmatpush1.bf16.msra.mxu0 %v5352
    %5649 = vmatprep.subr.bf16.mxu0 %v5357
    %5650 = vmatpush1.bf16.msra.mxu0 %v5356
    %5651 = vmatprep.subr.bf16.mxu0 %v5361
    %5652 = vmatpush1.bf16.msra.mxu0 %v5360
    %5653 = vmatprep.subr.bf16.mxu0 %v5365
    %5654 = vmatpush1.bf16.msra.mxu0 %v5364
    %5655 = vmatprep.subr.bf16.mxu0 %v5369
    %5656 = vmatpush1.bf16.msra.mxu0 %v5368
    %5657 = vmatprep.subr.bf16.mxu0 %v5373
    %5658 = vmatpush1.bf16.msra.mxu0 %v5372
    %5659 = vmatprep.subr.bf16.mxu0 %v5377
    %5660 = vmatpush1.bf16.msra.mxu0 %v5376
    %5661 = vmatprep.mubr.bf16.mxu0 %v4737
    %5662 = vmatmul.mubr.bf16.gmra.mrb[0].mxu0 %v4736
    %v5663 = vpop.f32.mrb[0].mxu0
    %v5664 = vadd.f32 %v5623, %v5663
    %v5665 = vpop.f32.mrb[0].mxu0
    %v5666 = vadd.f32 %v5625, %v5665
    %v5667 = vpop.f32.mrb[0].mxu0
    %v5668 = vpop.f32.mrb[0].mxu0
    %5669 = vdwg.mxu0
    %v5670 = vld [vmem:[#allocation13] sm:$0xf]
    %v5672 = vlaneseq
    %v5673 = vshrl.u32 %v5672, 7
    %v5674 = vsub.s32 0, %v5673
    %v5675 = vrot.slane %v5670, %v5674
    %v5676 = vlaneseq
    %v5677 = vshrl.u32 %v5676, 7
    %v5678 = vsub.s32 1, %v5677
    %v5679 = vrot.slane %v5670, %v5678
    %v5680 = vlaneseq
    %v5681 = vshrl.u32 %v5680, 7
    %v5682 = vsub.s32 2, %v5681
    %v5683 = vrot.slane %v5670, %v5682
    %v5684 = vlaneseq
    %v5685 = vshrl.u32 %v5684, 7
    %v5686 = vsub.s32 3, %v5685
    %v5687 = vrot.slane %v5670, %v5686
    %v5692 = vmul.f32 %v5582, %v5675
    %v5693 = vmul.f32 %v5584, %v5679
    %v5694 = vmul.f32 %v5664, %v5683
    %v5695 = vmul.f32 %v5666, %v5687
    %v5696 = vld [vmem:[#allocation15] sm:$0xf]
    %v5698 = vlaneseq
    %v5699 = vshrl.u32 %v5698, 7
    %v5700 = vsub.s32 0, %v5699
    %v5701 = vrot.slane %v5696, %v5700
    %v5702 = vlaneseq
    %v5703 = vshrl.u32 %v5702, 7
    %v5704 = vsub.s32 1, %v5703
    %v5705 = vrot.slane %v5696, %v5704
    %v5706 = vlaneseq
    %v5707 = vshrl.u32 %v5706, 7
    %v5708 = vsub.s32 2, %v5707
    %v5709 = vrot.slane %v5696, %v5708
    %v5710 = vlaneseq
    %v5711 = vshrl.u32 %v5710, 7
    %v5712 = vsub.s32 3, %v5711
    %v5713 = vrot.slane %v5696, %v5712
    %v5718 = vadd.f32 %v5692, %v5701
    %v5719 = vadd.f32 %v5693, %v5705
    %v5720 = vadd.f32 %v5694, %v5709
    %v5721 = vadd.f32 %v5695, %v5713
    %v5722 = vmax.f32 %v5718, 0.0
    %v5723 = vmax.f32 %v5719, 0.0
    %v5724 = vmax.f32 %v5720, 0.0
    %v5725 = vmax.f32 %v5721, 0.0
    %v5726 = vpack.c.bf16 %v5722, %v5722
    %v5727 = vpack.c.bf16 %v5723, %v5723
    %v5728 = vpack.c.bf16 %v5724, %v5724
    %v5729 = vpack.c.bf16 %v5725, %v5725
    %v5730 = vld [vmem:[#allocation16] sm:$0xf]
    %v5731 = vld [vmem:[#allocation16 + $0x4] sm:$0xf]
    %v5732 = vld [vmem:[#allocation16 + $0x8] sm:$0xf]
    %v5733 = vld [vmem:[#allocation16 + $0xc] sm:$0xf]
    %v5734 = vld [vmem:[#allocation16 + $0x10] sm:$0xf]
    %v5735 = vld [vmem:[#allocation16 + $0x14] sm:$0xf]
    %v5736 = vld [vmem:[#allocation16 + $0x18] sm:$0xf]
    %v5737 = vld [vmem:[#allocation16 + $0x1c] sm:$0xf]
    %v5738 = vld [vmem:[#allocation16 + $0x20] sm:$0xf]
    %v5739 = vld [vmem:[#allocation16 + $0x24] sm:$0xf]
    %v5740 = vld [vmem:[#allocation16 + $0x28] sm:$0xf]
    %v5741 = vld [vmem:[#allocation16 + $0x2c] sm:$0xf]
    %v5742 = vld [vmem:[#allocation16 + $0x30] sm:$0xf]
    %v5743 = vld [vmem:[#allocation16 + $0x34] sm:$0xf]
    %v5744 = vld [vmem:[#allocation16 + $0x38] sm:$0xf]
    %v5745 = vld [vmem:[#allocation16 + $0x3c] sm:$0xf]
    %v5746 = vld [vmem:[#allocation16 + $0x40] sm:$0xf]
    %v5747 = vld [vmem:[#allocation16 + $0x44] sm:$0xf]
    %v5748 = vld [vmem:[#allocation16 + $0x48] sm:$0xf]
    %v5749 = vld [vmem:[#allocation16 + $0x4c] sm:$0xf]
    %v5750 = vld [vmem:[#allocation16 + $0x50] sm:$0xf]
    %v5751 = vld [vmem:[#allocation16 + $0x54] sm:$0xf]
    %v5752 = vld [vmem:[#allocation16 + $0x58] sm:$0xf]
    %v5753 = vld [vmem:[#allocation16 + $0x5c] sm:$0xf]
    %v5754 = vld [vmem:[#allocation16 + $0x60] sm:$0xf]
    %v5755 = vld [vmem:[#allocation16 + $0x64] sm:$0xf]
    %v5756 = vld [vmem:[#allocation16 + $0x68] sm:$0xf]
    %v5757 = vld [vmem:[#allocation16 + $0x6c] sm:$0xf]
    %v5758 = vld [vmem:[#allocation16 + $0x70] sm:$0xf]
    %v5759 = vld [vmem:[#allocation16 + $0x74] sm:$0xf]
    %v5760 = vld [vmem:[#allocation16 + $0x78] sm:$0xf]
    %v5761 = vld [vmem:[#allocation16 + $0x7c] sm:$0xf]
    %v5762 = vld [vmem:[#allocation16 + $0x80] sm:$0xf]
    %v5763 = vld [vmem:[#allocation16 + $0x84] sm:$0xf]
    %v5764 = vld [vmem:[#allocation16 + $0x88] sm:$0xf]
    %v5765 = vld [vmem:[#allocation16 + $0x8c] sm:$0xf]
    %v5766 = vld [vmem:[#allocation16 + $0x90] sm:$0xf]
    %v5767 = vld [vmem:[#allocation16 + $0x94] sm:$0xf]
    %v5768 = vld [vmem:[#allocation16 + $0x98] sm:$0xf]
    %v5769 = vld [vmem:[#allocation16 + $0x9c] sm:$0xf]
    %v5770 = vld [vmem:[#allocation16 + $0xa0] sm:$0xf]
    %v5771 = vld [vmem:[#allocation16 + $0xa4] sm:$0xf]
    %v5772 = vld [vmem:[#allocation16 + $0xa8] sm:$0xf]
    %v5773 = vld [vmem:[#allocation16 + $0xac] sm:$0xf]
    %v5774 = vld [vmem:[#allocation16 + $0xb0] sm:$0xf]
    %v5775 = vld [vmem:[#allocation16 + $0xb4] sm:$0xf]
    %v5776 = vld [vmem:[#allocation16 + $0xb8] sm:$0xf]
    %v5777 = vld [vmem:[#allocation16 + $0xbc] sm:$0xf]
    %v5778 = vld [vmem:[#allocation16 + $0xc0] sm:$0xf]
    %v5779 = vld [vmem:[#allocation16 + $0xc4] sm:$0xf]
    %v5780 = vld [vmem:[#allocation16 + $0xc8] sm:$0xf]
    %v5781 = vld [vmem:[#allocation16 + $0xcc] sm:$0xf]
    %v5782 = vld [vmem:[#allocation16 + $0xd0] sm:$0xf]
    %v5783 = vld [vmem:[#allocation16 + $0xd4] sm:$0xf]
    %v5784 = vld [vmem:[#allocation16 + $0xd8] sm:$0xf]
    %v5785 = vld [vmem:[#allocation16 + $0xdc] sm:$0xf]
    %v5786 = vld [vmem:[#allocation16 + $0xe0] sm:$0xf]
    %v5787 = vld [vmem:[#allocation16 + $0xe4] sm:$0xf]
    %v5788 = vld [vmem:[#allocation16 + $0xe8] sm:$0xf]
    %v5789 = vld [vmem:[#allocation16 + $0xec] sm:$0xf]
    %v5790 = vld [vmem:[#allocation16 + $0xf0] sm:$0xf]
    %v5791 = vld [vmem:[#allocation16 + $0xf4] sm:$0xf]
    %v5792 = vld [vmem:[#allocation16 + $0xf8] sm:$0xf]
    %v5793 = vld [vmem:[#allocation16 + $0xfc] sm:$0xf]
    %v5858 = vunpack.c.l.b16 %v5730
    %v5859 = vunpack.c.l.b16 %v5731
    %v5860 = vunpack.c.l.b16 %v5732
    %v5861 = vunpack.c.l.b16 %v5733
    %v5862 = vunpack.c.l.b16 %v5734
    %v5863 = vunpack.c.l.b16 %v5735
    %v5864 = vunpack.c.l.b16 %v5736
    %v5865 = vunpack.c.l.b16 %v5737
    %v5866 = vunpack.c.l.b16 %v5738
    %v5867 = vunpack.c.l.b16 %v5739
    %v5868 = vunpack.c.l.b16 %v5740
    %v5869 = vunpack.c.l.b16 %v5741
    %v5870 = vunpack.c.l.b16 %v5742
    %v5871 = vunpack.c.l.b16 %v5743
    %v5872 = vunpack.c.l.b16 %v5744
    %v5873 = vunpack.c.l.b16 %v5745
    %v5874 = vunpack.c.l.b16 %v5746
    %v5875 = vunpack.c.l.b16 %v5747
    %v5876 = vunpack.c.l.b16 %v5748
    %v5877 = vunpack.c.l.b16 %v5749
    %v5878 = vunpack.c.l.b16 %v5750
    %v5879 = vunpack.c.l.b16 %v5751
    %v5880 = vunpack.c.l.b16 %v5752
    %v5881 = vunpack.c.l.b16 %v5753
    %v5882 = vunpack.c.l.b16 %v5754
    %v5883 = vunpack.c.l.b16 %v5755
    %v5884 = vunpack.c.l.b16 %v5756
    %v5885 = vunpack.c.l.b16 %v5757
    %v5886 = vunpack.c.l.b16 %v5758
    %v5887 = vunpack.c.l.b16 %v5759
    %v5888 = vunpack.c.l.b16 %v5760
    %v5889 = vunpack.c.l.b16 %v5761
    %v5890 = vunpack.c.l.b16 %v5762
    %v5891 = vunpack.c.l.b16 %v5763
    %v5892 = vunpack.c.l.b16 %v5764
    %v5893 = vunpack.c.l.b16 %v5765
    %v5894 = vunpack.c.l.b16 %v5766
    %v5895 = vunpack.c.l.b16 %v5767
    %v5896 = vunpack.c.l.b16 %v5768
    %v5897 = vunpack.c.l.b16 %v5769
    %v5898 = vunpack.c.l.b16 %v5770
    %v5899 = vunpack.c.l.b16 %v5771
    %v5900 = vunpack.c.l.b16 %v5772
    %v5901 = vunpack.c.l.b16 %v5773
    %v5902 = vunpack.c.l.b16 %v5774
    %v5903 = vunpack.c.l.b16 %v5775
    %v5904 = vunpack.c.l.b16 %v5776
    %v5905 = vunpack.c.l.b16 %v5777
    %v5906 = vunpack.c.l.b16 %v5778
    %v5907 = vunpack.c.l.b16 %v5779
    %v5908 = vunpack.c.l.b16 %v5780
    %v5909 = vunpack.c.l.b16 %v5781
    %v5910 = vunpack.c.l.b16 %v5782
    %v5911 = vunpack.c.l.b16 %v5783
    %v5912 = vunpack.c.l.b16 %v5784
    %v5913 = vunpack.c.l.b16 %v5785
    %v5914 = vunpack.c.l.b16 %v5786
    %v5915 = vunpack.c.l.b16 %v5787
    %v5916 = vunpack.c.l.b16 %v5788
    %v5917 = vunpack.c.l.b16 %v5789
    %v5918 = vunpack.c.l.b16 %v5790
    %v5919 = vunpack.c.l.b16 %v5791
    %v5920 = vunpack.c.l.b16 %v5792
    %v5921 = vunpack.c.l.b16 %v5793
    %v5922 = vpack.c.b16 %v5859, %v5858
    %v5923 = vpack.c.b16 %v5861, %v5860
    %v5924 = vpack.c.b16 %v5863, %v5862
    %v5925 = vpack.c.b16 %v5865, %v5864
    %v5926 = vpack.c.b16 %v5867, %v5866
    %v5927 = vpack.c.b16 %v5869, %v5868
    %v5928 = vpack.c.b16 %v5871, %v5870
    %v5929 = vpack.c.b16 %v5873, %v5872
    %v5930 = vpack.c.b16 %v5875, %v5874
    %v5931 = vpack.c.b16 %v5877, %v5876
    %v5932 = vpack.c.b16 %v5879, %v5878
    %v5933 = vpack.c.b16 %v5881, %v5880
    %v5934 = vpack.c.b16 %v5883, %v5882
    %v5935 = vpack.c.b16 %v5885, %v5884
    %v5936 = vpack.c.b16 %v5887, %v5886
    %v5937 = vpack.c.b16 %v5889, %v5888
    %v5938 = vpack.c.b16 %v5891, %v5890
    %v5939 = vpack.c.b16 %v5893, %v5892
    %v5940 = vpack.c.b16 %v5895, %v5894
    %v5941 = vpack.c.b16 %v5897, %v5896
    %v5942 = vpack.c.b16 %v5899, %v5898
    %v5943 = vpack.c.b16 %v5901, %v5900
    %v5944 = vpack.c.b16 %v5903, %v5902
    %v5945 = vpack.c.b16 %v5905, %v5904
    %v5946 = vpack.c.b16 %v5907, %v5906
    %v5947 = vpack.c.b16 %v5909, %v5908
    %v5948 = vpack.c.b16 %v5911, %v5910
    %v5949 = vpack.c.b16 %v5913, %v5912
    %v5950 = vpack.c.b16 %v5915, %v5914
    %v5951 = vpack.c.b16 %v5917, %v5916
    %v5952 = vpack.c.b16 %v5919, %v5918
    %v5953 = vpack.c.b16 %v5921, %v5920
    %5986 = vmatprep.subr.bf16.mxu0 0
    %5987 = vmatpush1.bf16.msra.mxu0 %v5922
    %5988 = vmatprep.subr.bf16.mxu0 0
    %5989 = vmatpush1.bf16.msra.mxu0 %v5923
    %5990 = vmatprep.subr.bf16.mxu0 0
    %5991 = vmatpush1.bf16.msra.mxu0 %v5924
    %5992 = vmatprep.subr.bf16.mxu0 0
    %5993 = vmatpush1.bf16.msra.mxu0 %v5925
    %5994 = vmatprep.subr.bf16.mxu0 0
    %5995 = vmatpush1.bf16.msra.mxu0 %v5926
    %5996 = vmatprep.subr.bf16.mxu0 0
    %5997 = vmatpush1.bf16.msra.mxu0 %v5927
    %5998 = vmatprep.subr.bf16.mxu0 0
    %5999 = vmatpush1.bf16.msra.mxu0 %v5928
    %6000 = vmatprep.subr.bf16.mxu0 0
    %6001 = vmatpush1.bf16.msra.mxu0 %v5929
    %6002 = vmatprep.subr.bf16.mxu0 0
    %6003 = vmatpush1.bf16.msra.mxu0 %v5930
    %6004 = vmatprep.subr.bf16.mxu0 0
    %6005 = vmatpush1.bf16.msra.mxu0 %v5931
    %6006 = vmatprep.subr.bf16.mxu0 0
    %6007 = vmatpush1.bf16.msra.mxu0 %v5932
    %6008 = vmatprep.subr.bf16.mxu0 0
    %6009 = vmatpush1.bf16.msra.mxu0 %v5933
    %6010 = vmatprep.subr.bf16.mxu0 0
    %6011 = vmatpush1.bf16.msra.mxu0 %v5934
    %6012 = vmatprep.subr.bf16.mxu0 0
    %6013 = vmatpush1.bf16.msra.mxu0 %v5935
    %6014 = vmatprep.subr.bf16.mxu0 0
    %6015 = vmatpush1.bf16.msra.mxu0 %v5936
    %6016 = vmatprep.subr.bf16.mxu0 0
    %6017 = vmatpush1.bf16.msra.mxu0 %v5937
    %6018 = vmatprep.mubr.bf16.mxu0 %v5727
    %6019 = vmatmul.mubr.bf16.gmra.mrb[0].mxu0 %v5726
    %v6020 = vpop.f32.mrb[0].mxu0
    %v6021 = vadd.f32 0.0, %v6020
    %v6022 = vpop.f32.mrb[0].mxu0
    %v6023 = vpop.f32.mrb[0].mxu0
    %v6024 = vpop.f32.mrb[0].mxu0
    %6025 = vdwg.mxu0
    %6026 = vmatprep.subr.bf16.mxu0 0
    %6027 = vmatpush1.bf16.msra.mxu0 %v5938
    %6028 = vmatprep.subr.bf16.mxu0 0
    %6029 = vmatpush1.bf16.msra.mxu0 %v5939
    %6030 = vmatprep.subr.bf16.mxu0 0
    %6031 = vmatpush1.bf16.msra.mxu0 %v5940
    %6032 = vmatprep.subr.bf16.mxu0 0
    %6033 = vmatpush1.bf16.msra.mxu0 %v5941
    %6034 = vmatprep.subr.bf16.mxu0 0
    %6035 = vmatpush1.bf16.msra.mxu0 %v5942
    %6036 = vmatprep.subr.bf16.mxu0 0
    %6037 = vmatpush1.bf16.msra.mxu0 %v5943
    %6038 = vmatprep.subr.bf16.mxu0 0
    %6039 = vmatpush1.bf16.msra.mxu0 %v5944
    %6040 = vmatprep.subr.bf16.mxu0 0
    %6041 = vmatpush1.bf16.msra.mxu0 %v5945
    %6042 = vmatprep.subr.bf16.mxu0 0
    %6043 = vmatpush1.bf16.msra.mxu0 %v5946
    %6044 = vmatprep.subr.bf16.mxu0 0
    %6045 = vmatpush1.bf16.msra.mxu0 %v5947
    %6046 = vmatprep.subr.bf16.mxu0 0
    %6047 = vmatpush1.bf16.msra.mxu0 %v5948
    %6048 = vmatprep.subr.bf16.mxu0 0
    %6049 = vmatpush1.bf16.msra.mxu0 %v5949
    %6050 = vmatprep.subr.bf16.mxu0 0
    %6051 = vmatpush1.bf16.msra.mxu0 %v5950
    %6052 = vmatprep.subr.bf16.mxu0 0
    %6053 = vmatpush1.bf16.msra.mxu0 %v5951
    %6054 = vmatprep.subr.bf16.mxu0 0
    %6055 = vmatpush1.bf16.msra.mxu0 %v5952
    %6056 = vmatprep.subr.bf16.mxu0 0
    %6057 = vmatpush1.bf16.msra.mxu0 %v5953
    %6058 = vmatprep.mubr.bf16.mxu0 %v5729
    %6059 = vmatmul.mubr.bf16.gmra.mrb[0].mxu0 %v5728
    %v6060 = vpop.f32.mrb[0].mxu0
    %v6061 = vadd.f32 %v6021, %v6060
    %v6062 = vpop.f32.mrb[0].mxu0
    %v6063 = vpop.f32.mrb[0].mxu0
    %v6064 = vpop.f32.mrb[0].mxu0
    %6065 = vdwg.mxu0
    %v6066 = vld [vmem:[#allocation18] sm:$0x1]
    %v6068 = vlaneseq
    %v6069 = vshrl.u32 %v6068, 7
    %v6070 = vsub.s32 0, %v6069
    %v6071 = vrot.slane %v6066, %v6070
    %v6073 = vmul.f32 %v6061, %v6071
    %v6074 = vld [vmem:[#allocation19] sm:$0x1]
    %v6076 = vlaneseq
    %v6077 = vshrl.u32 %v6076, 7
    %v6078 = vsub.s32 0, %v6077
    %v6079 = vrot.slane %v6074, %v6078
    %v6081 = vadd.f32 %v6073, %v6079
    %6082 = vst [vmem:[%s13] sm:$0xff] %v6081
    // Predicated region
    $region102: #{decoder_forward.1} parent=1 // pred_check
      _
    $region103: #{decoder_forward.1} parent=1 // pred_check_branch
      %6084 = sbr.rel (0) target = $region105
    $region104: #{decoder_forward.1} parent=1 // pred_region
      _
    $region105: #{decoder_forward.1} parent=1 // pred_fallthru
      _
    // Predicated region
    $region106: #{decoder_forward.1} parent=1 // pred_check
      _
    $region107: #{decoder_forward.1} parent=1 // pred_check_branch
      %6086 = sbr.rel (0) target = $region109
    $region108: #{decoder_forward.1} parent=1 // pred_region
      _
    $region109: #{decoder_forward.1} parent=1 // pred_fallthru
      _
    %6087 = vsyncpa [#allocation3], 1
    %6088 = vsyncpa [#allocation5], 1
    %6089 = vsyncpa [#allocation8], 1
    %6090 = vsyncpa [#allocation11], 1
    %6091 = vsyncpa [#allocation14], 1
    %6092 = vsyncpa [#allocation17], 1
    %6093 = vsyncpa [#allocation20], 1

</llo_original>
